<compile_context>
chip_gen: v7x
topology: tpu7x:2x2x1
jax: 0.10.0
libtpu: 0.0.40
codegen_flags: <defaults>
</compile_context>

<pallas_src>
import functools

import numpy as np

import jax
import jax.numpy as jnp
from jax.experimental import pallas as pl


# ----------------------------------------------------------------------------
# Parameter construction (deterministic, synthetic) — same as previous version
# ----------------------------------------------------------------------------
def make_conv_params(key, kh, kw, cin, cout):
    kw_key, kb_key = jax.random.split(key)
    fan_in = kh * kw * cin
    w = jax.random.normal(kw_key, (kh, kw, cin, cout), jnp.float32) / jnp.sqrt(fan_in)
    b = 0.01 * jax.random.normal(kb_key, (cout,), jnp.float32)
    return w, b


def init_yolo_block1_params(cin=4, c1=8, c2=16, cdet=8, seed=0):
    keys = jax.random.split(jax.random.PRNGKey(seed), 12)
    p = {}
    p["stem"]         = make_conv_params(keys[0], 3, 3, cin, c1)        # stride 2
    p["stem_exit0"]   = make_conv_params(keys[1], 3, 3, c1, c1)
    p["stem_exit1"]   = make_conv_params(keys[2], 3, 3, c1, c1)
    p["stem_exit2"]   = make_conv_params(keys[3], 3, 3, c1, c2)         # stride 2
    p["block1"]       = make_conv_params(keys[4], 3, 3, c1, c2)         # stride 2
    p["block1_exit0"] = make_conv_params(keys[5], 3, 3, c2, c2)
    p["block1_exit1"] = make_conv_params(keys[6], 3, 3, c2, c2)
    p["block1_exit2"] = make_conv_params(keys[7], 3, 3, c2, c2)
    p["neck"]         = make_conv_params(keys[8], 1, 1, 2 * c2, c2)     # concat fuse
    p["head_det0"]    = make_conv_params(keys[9], 1, 1, c2, cdet)
    p["head_det1"]    = make_conv_params(keys[10], 1, 1, c2, cdet)
    return p


# ----------------------------------------------------------------------------
# One-time parameter packing: conv -> (row selectors A_i, block-Toeplitz B_i)
#
# Activation layout: X2d[(n*H + h), (w*C + c)] = x[n, h, w, c]
#   conv out O2d = sum_i (A_i @ X2d) @ B_i + bias_row   (exactly Conv2d, with
#   zero padding and stride folded into the structure of A_i / B_i).
# ----------------------------------------------------------------------------
def _row_selectors(n, h_in, h_out, stride, pad, kh=3):
    a = np.zeros((kh, n * h_out, n * h_in), np.float32)
    for i in range(kh):
        for b in range(n):
            for ho in range(h_out):
                h = stride * ho + i - pad
                if 0 <= h < h_in:
                    a[i, b * h_out + ho, b * h_in + h] = 1.0
    return jnp.asarray(a)


def _col_weights(w_hwio, w_in, w_out, stride, pad):
    w = np.asarray(w_hwio)
    kh, kw, cin, cout = w.shape
    b = np.zeros((kh, w_in * cin, w_out * cout), np.float32)
    for i in range(kh):
        for wo in range(w_out):
            for j in range(kw):
                wi = stride * wo + j - pad
                if 0 <= wi < w_in:
                    b[i, wi * cin:(wi + 1) * cin, wo * cout:(wo + 1) * cout] = w[i, j]
    return jnp.asarray(b)


def _bias_row(bias, w_out):
    return jnp.asarray(np.tile(np.asarray(bias), w_out)[None, :].astype(np.float32))


def pack_yolo_params(params, *, n, h, cin, c1, c2, cdet):
    del cin  # channel counts are read from the weight shapes
    h1, h2 = h // 2, h // 4

    # Row shift/stride selectors: one stack per conv geometry.
    a_ops = [
        _row_selectors(n, h,  h1, 2, 1),   # stem: 16 -> 8, stride 2
        _row_selectors(n, h1, h1, 1, 1),   # 8x8, stride 1
        _row_selectors(n, h1, h2, 2, 1),   # 8 -> 4, stride 2
        _row_selectors(n, h2, h2, 1, 1),   # 4x4, stride 1
    ]

    conv_geom = [
        ("stem",         h,  h1, 2),
        ("stem_exit0",   h1, h1, 1),
        ("stem_exit1",   h1, h1, 1),
        ("stem_exit2",   h1, h2, 2),
        ("block1",       h1, h2, 2),
        ("block1_exit0", h2, h2, 1),
        ("block1_exit1", h2, h2, 1),
        ("block1_exit2", h2, h2, 1),
    ]
    b_ops, bias_ops = [], []
    for name, w_in, w_out, s in conv_geom:
        wgt, bia = params[name]
        b_ops.append(_col_weights(wgt, w_in, w_out, s, 1))
        bias_ops.append(_bias_row(bia, w_out))

    # Neck: 1x1 conv on channel-concat(se2, b1e2) == sum of two block-diagonal
    # GEMMs (no in-kernel concatenate needed).
    wn, bn = params["neck"]
    b_neck_a = _col_weights(wn[:, :, :c2, :], h2, h2, 1, 0)[0]
    b_neck_b = _col_weights(wn[:, :, c2:, :], h2, h2, 1, 0)[0]
    bias_neck = _bias_row(bn, h2)

    # Heads: det0 and det1 fused into one GEMM; det0 columns first, then det1.
    w0, b0 = params["head_det0"]
    w1, b1 = params["head_det1"]
    b_head = jnp.concatenate([_col_weights(w0, h2, h2, 1, 0)[0],
                              _col_weights(w1, h2, h2, 1, 0)[0]], axis=-1)
    bias_head = jnp.concatenate([_bias_row(b0, h2), _bias_row(b1, h2)], axis=-1)

    operands = tuple(a_ops + b_ops + [b_neck_a, b_neck_b, b_head]
                     + bias_ops + [bias_neck, bias_head])
    return operands


# ----------------------------------------------------------------------------
# The single fused Pallas kernel (everything VMEM-resident, one launch)
# ----------------------------------------------------------------------------
def _yolo_fused_kernel(
        x_ref,
        a_stem, a_h1s1, a_h1s2, a_h2s1,
        b_stem, b_se0, b_se1, b_se2, b_b1, b_b1e0, b_b1e1, b_b1e2,
        b_neck_a, b_neck_b, b_head,
        bb_stem, bb_se0, bb_se1, bb_se2, bb_b1, bb_b1e0, bb_b1e1, bb_b1e2,
        bb_neck, bb_head,
        dets_o, b1_o, se1_o, b1e0_o, b1e1_o):

    def silu(v):
        return v * jax.nn.sigmoid(v)

    def conv3x3(x, a_ref, b_ref, bias_ref):
        a = a_ref[...]   # [3, R_out, R_in]  0/1 row selectors (stride + pad)
        b = b_ref[...]   # [3, Win*Cin, Wout*Cout] block-Toeplitz conv weights
        acc = jnp.dot(jnp.dot(a[0], x, preferred_element_type=jnp.float32),
                      b[0], preferred_element_type=jnp.float32)
        for i in (1, 2):
            acc = acc + jnp.dot(
                jnp.dot(a[i], x, preferred_element_type=jnp.float32),
                b[i], preferred_element_type=jnp.float32)
        return silu(acc + bias_ref[...])

    x = x_ref[...]                                        # [N*16, 16*Cin]

    s    = conv3x3(x,    a_stem, b_stem, bb_stem)         # [N*8, 8*c1]
    se0  = conv3x3(s,    a_h1s1, b_se0,  bb_se0)
    se1  = conv3x3(se0,  a_h1s1, b_se1,  bb_se1)
    se2  = conv3x3(se1,  a_h1s2, b_se2,  bb_se2)          # [N*4, 4*c2]
    b1   = conv3x3(s,    a_h1s2, b_b1,   bb_b1)           # [N*4, 4*c2]
    b1e0 = conv3x3(b1,   a_h2s1, b_b1e0, bb_b1e0)
    b1e1 = conv3x3(b1e0, a_h2s1, b_b1e1, bb_b1e1)
    b1e2 = conv3x3(b1e1, a_h2s1, b_b1e2, bb_b1e2)

    # neck((se2, b1e2)): 1x1 fuse conv on the channel concat, as two GEMMs.
    y = silu(jnp.dot(se2,  b_neck_a[...], preferred_element_type=jnp.float32)
             + jnp.dot(b1e2, b_neck_b[...], preferred_element_type=jnp.float32)
             + bb_neck[...])

    # Both detection heads in one lane-dense GEMM (no activation).
    dets_o[...] = (jnp.dot(y, b_head[...], preferred_element_type=jnp.float32)
                   + bb_head[...])
    b1_o[...]   = b1
    se1_o[...]  = se1
    b1e0_o[...] = b1e0
    b1e1_o[...] = b1e1


# ----------------------------------------------------------------------------
# Wrapper: NCHW <-> lane-dense 2-D layout, single pallas_call
# ----------------------------------------------------------------------------
def yolo_block1_forward(operands, cfg, x_nchw):
    n, cin, h, w = x_nchw.shape
    c1, c2, cdet = cfg["c1"], cfg["c2"], cfg["cdet"]
    h1, h2 = h // 2, h // 4

    # NCHW -> [N*H, W*C] (rows = (n, h), cols = (w, c)).
    x2d = jnp.transpose(x_nchw, (0, 2, 3, 1)).reshape(n * h, w * cin)

    out_shape = (
        jax.ShapeDtypeStruct((n * h2, 2 * h2 * cdet), jnp.float32),  # det0|det1
        jax.ShapeDtypeStruct((n * h2, h2 * c2), jnp.float32),        # b1
        jax.ShapeDtypeStruct((n * h1, h1 * c1), jnp.float32),        # se1
        jax.ShapeDtypeStruct((n * h2, h2 * c2), jnp.float32),        # b1e0
        jax.ShapeDtypeStruct((n * h2, h2 * c2), jnp.float32),        # b1e1
    )
    dets, b1, se1, b1e0, b1e1 = pl.pallas_call(
        _yolo_fused_kernel, out_shape=out_shape)(x2d, *operands)

    def to_nchw(t2d, hh, c):
        return jnp.transpose(t2d.reshape(n, hh, hh, c), (0, 3, 1, 2))

    det0 = to_nchw(dets[:, : h2 * cdet], h2, cdet)
    det1 = to_nchw(dets[:, h2 * cdet:], h2, cdet)
    return (det0, det1, to_nchw(b1, h2, c2), to_nchw(se1, h1, c1),
            to_nchw(b1e0, h2, c2), to_nchw(b1e1, h2, c2))


# ----------------------------------------------------------------------------
# Pure-JAX reference (XLA conv) for a numerical cross-check
# ----------------------------------------------------------------------------
def _ref_forward(params, x_nchw):
    x = jnp.transpose(x_nchw, (0, 2, 3, 1))

    def conv(xx, wb, stride, pad, act):
        wgt, bia = wb
        out = jax.lax.conv_general_dilated(
            xx, wgt, window_strides=(stride, stride),
            padding=[(pad, pad), (pad, pad)],
            dimension_numbers=("NHWC", "HWIO", "NHWC"),
            precision=jax.lax.Precision.HIGHEST)
        out = out + bia
        return out * jax.nn.sigmoid(out) if act else out

    s    = conv(x,    params["stem"],         2, 1, True)
    se0  = conv(s,    params["stem_exit0"],   1, 1, True)
    se1  = conv(se0,  params["stem_exit1"],   1, 1, True)
    se2  = conv(se1,  params["stem_exit2"],   2, 1, True)
    b1   = conv(s,    params["block1"],       2, 1, True)
    b1e0 = conv(b1,   params["block1_exit0"], 1, 1, True)
    b1e1 = conv(b1e0, params["block1_exit1"], 1, 1, True)
    b1e2 = conv(b1e1, params["block1_exit2"], 1, 1, True)
    y    = conv(jnp.concatenate([se2, b1e2], axis=-1), params["neck"], 1, 0, True)
    det0 = conv(y, params["head_det0"], 1, 0, False)
    det1 = conv(y, params["head_det1"], 1, 0, False)
    to_nchw = lambda t: jnp.transpose(t, (0, 3, 1, 2))
    return tuple(map(to_nchw, (det0, det1, b1, se1, b1e0, b1e1)))


# ----------------------------------------------------------------------------
if __name__ == "__main__":
    cfg = dict(cin=4, c1=8, c2=16, cdet=8)
    n, h = 2, 16

    key = jax.random.PRNGKey(0)
    x = jax.random.normal(key, (n, cfg["cin"], h, h), jnp.float32)  # NCHW

    params = init_yolo_block1_params(**cfg, seed=0)
    operands = pack_yolo_params(params, n=n, h=h, **cfg)

    fwd = jax.jit(functools.partial(yolo_block1_forward, operands, cfg))
    outs = jax.block_until_ready(fwd(x))

    expected_shapes = [
        (2, 8, 4, 4),    # det0
        (2, 8, 4, 4),    # det1
        (2, 16, 4, 4),   # b1
        (2, 8, 8, 8),    # se1
        (2, 16, 4, 4),   # b1e0
        (2, 16, 4, 4),   # b1e1
    ]
    assert [tuple(o.shape) for o in outs] == expected_shapes
    assert all(bool(jnp.all(jnp.isfinite(o))) for o in outs)

    # Cross-check the fused Toeplitz-GEMM formulation against XLA's conv.
    refs = jax.block_until_ready(jax.jit(functools.partial(_ref_forward, params))(x))
    for got, ref in zip(outs, refs):
        assert float(jnp.max(jnp.abs(got - ref))) < 1e-1, "mismatch vs reference conv"

    print("KERNEL_OK")
</pallas_src>

<mosaic_0001>
module attributes {stable_mosaic.version = 11 : i64} {
  func.func @_yolo_fused_kernel(%arg0: memref<32x64xf32, #tpu.memory_space<vmem>>, %arg1: memref<3x16x32xf32, #tpu.memory_space<vmem>>, %arg2: memref<3x16x16xf32, #tpu.memory_space<vmem>>, %arg3: memref<3x8x16xf32, #tpu.memory_space<vmem>>, %arg4: memref<3x8x8xf32, #tpu.memory_space<vmem>>, %arg5: memref<3x64x64xf32, #tpu.memory_space<vmem>>, %arg6: memref<3x64x64xf32, #tpu.memory_space<vmem>>, %arg7: memref<3x64x64xf32, #tpu.memory_space<vmem>>, %arg8: memref<3x64x64xf32, #tpu.memory_space<vmem>>, %arg9: memref<3x64x64xf32, #tpu.memory_space<vmem>>, %arg10: memref<3x64x64xf32, #tpu.memory_space<vmem>>, %arg11: memref<3x64x64xf32, #tpu.memory_space<vmem>>, %arg12: memref<3x64x64xf32, #tpu.memory_space<vmem>>, %arg13: memref<64x64xf32, #tpu.memory_space<vmem>>, %arg14: memref<64x64xf32, #tpu.memory_space<vmem>>, %arg15: memref<64x64xf32, #tpu.memory_space<vmem>>, %arg16: memref<1x64xf32, #tpu.memory_space<vmem>>, %arg17: memref<1x64xf32, #tpu.memory_space<vmem>>, %arg18: memref<1x64xf32, #tpu.memory_space<vmem>>, %arg19: memref<1x64xf32, #tpu.memory_space<vmem>>, %arg20: memref<1x64xf32, #tpu.memory_space<vmem>>, %arg21: memref<1x64xf32, #tpu.memory_space<vmem>>, %arg22: memref<1x64xf32, #tpu.memory_space<vmem>>, %arg23: memref<1x64xf32, #tpu.memory_space<vmem>>, %arg24: memref<1x64xf32, #tpu.memory_space<vmem>>, %arg25: memref<1x64xf32, #tpu.memory_space<vmem>>, %arg26: memref<8x64xf32, #tpu.memory_space<vmem>>, %arg27: memref<8x64xf32, #tpu.memory_space<vmem>>, %arg28: memref<16x64xf32, #tpu.memory_space<vmem>>, %arg29: memref<8x64xf32, #tpu.memory_space<vmem>>, %arg30: memref<8x64xf32, #tpu.memory_space<vmem>>) attributes {dimension_semantics = [], scalar_prefetch = 0 : i64, scratch_operands = 0 : i64, tpu.core_type = #tpu.core_type<tc>} {
    %c0 = arith.constant 0 : index
    %c0_0 = arith.constant 0 : index
    %0 = vector.load %arg0[%c0, %c0_0] : memref<32x64xf32, #tpu.memory_space<vmem>>, vector<32x64xf32>
    %c0_1 = arith.constant 0 : index
    %c0_2 = arith.constant 0 : index
    %c0_3 = arith.constant 0 : index
    %1 = vector.load %arg1[%c0_1, %c0_2, %c0_3] : memref<3x16x32xf32, #tpu.memory_space<vmem>>, vector<3x16x32xf32>
    %c0_4 = arith.constant 0 : index
    %c0_5 = arith.constant 0 : index
    %c0_6 = arith.constant 0 : index
    %2 = vector.load %arg5[%c0_4, %c0_5, %c0_6] : memref<3x64x64xf32, #tpu.memory_space<vmem>>, vector<3x64x64xf32>
    %3 = vector.extract_strided_slice %1 {offsets = [0, 0, 0], sizes = [1, 16, 32], strides = [1, 1, 1]} : vector<3x16x32xf32> to vector<1x16x32xf32>
    %4 = vector.shape_cast %3 : vector<1x16x32xf32> to vector<16x32xf32>
    %cst = arith.constant dense<0.000000e+00> : vector<16x64xf32>
    %5 = tpu.matmul %4, %0, %cst {dimension_numbers = #tpu.dot_dimension_numbers<[1], [0], [0], [1], [0, 0, 1, 1], [], []>} : vector<16x32xf32>, vector<32x64xf32>, vector<16x64xf32> -> vector<16x64xf32>
    %6 = vector.extract_strided_slice %2 {offsets = [0, 0, 0], sizes = [1, 64, 64], strides = [1, 1, 1]} : vector<3x64x64xf32> to vector<1x64x64xf32>
    %7 = vector.shape_cast %6 : vector<1x64x64xf32> to vector<64x64xf32>
    %cst_7 = arith.constant dense<0.000000e+00> : vector<16x64xf32>
    %8 = tpu.matmul %5, %7, %cst_7 {dimension_numbers = #tpu.dot_dimension_numbers<[1], [0], [0], [1], [0, 0, 1, 1], [], []>} : vector<16x64xf32>, vector<64x64xf32>, vector<16x64xf32> -> vector<16x64xf32>
    %9 = vector.extract_strided_slice %1 {offsets = [1, 0, 0], sizes = [1, 16, 32], strides = [1, 1, 1]} : vector<3x16x32xf32> to vector<1x16x32xf32>
    %10 = vector.shape_cast %9 : vector<1x16x32xf32> to vector<16x32xf32>
    %cst_8 = arith.constant dense<0.000000e+00> : vector<16x64xf32>
    %11 = tpu.matmul %10, %0, %cst_8 {dimension_numbers = #tpu.dot_dimension_numbers<[1], [0], [0], [1], [0, 0, 1, 1], [], []>} : vector<16x32xf32>, vector<32x64xf32>, vector<16x64xf32> -> vector<16x64xf32>
    %12 = vector.extract_strided_slice %2 {offsets = [1, 0, 0], sizes = [1, 64, 64], strides = [1, 1, 1]} : vector<3x64x64xf32> to vector<1x64x64xf32>
    %13 = vector.shape_cast %12 : vector<1x64x64xf32> to vector<64x64xf32>
    %cst_9 = arith.constant dense<0.000000e+00> : vector<16x64xf32>
    %14 = tpu.matmul %11, %13, %cst_9 {dimension_numbers = #tpu.dot_dimension_numbers<[1], [0], [0], [1], [0, 0, 1, 1], [], []>} : vector<16x64xf32>, vector<64x64xf32>, vector<16x64xf32> -> vector<16x64xf32>
    %15 = arith.addf %8, %14 : vector<16x64xf32>
    %16 = vector.extract_strided_slice %1 {offsets = [2, 0, 0], sizes = [1, 16, 32], strides = [1, 1, 1]} : vector<3x16x32xf32> to vector<1x16x32xf32>
    %17 = vector.shape_cast %16 : vector<1x16x32xf32> to vector<16x32xf32>
    %cst_10 = arith.constant dense<0.000000e+00> : vector<16x64xf32>
    %18 = tpu.matmul %17, %0, %cst_10 {dimension_numbers = #tpu.dot_dimension_numbers<[1], [0], [0], [1], [0, 0, 1, 1], [], []>} : vector<16x32xf32>, vector<32x64xf32>, vector<16x64xf32> -> vector<16x64xf32>
    %19 = vector.extract_strided_slice %2 {offsets = [2, 0, 0], sizes = [1, 64, 64], strides = [1, 1, 1]} : vector<3x64x64xf32> to vector<1x64x64xf32>
    %20 = vector.shape_cast %19 : vector<1x64x64xf32> to vector<64x64xf32>
    %cst_11 = arith.constant dense<0.000000e+00> : vector<16x64xf32>
    %21 = tpu.matmul %18, %20, %cst_11 {dimension_numbers = #tpu.dot_dimension_numbers<[1], [0], [0], [1], [0, 0, 1, 1], [], []>} : vector<16x64xf32>, vector<64x64xf32>, vector<16x64xf32> -> vector<16x64xf32>
    %22 = arith.addf %15, %21 : vector<16x64xf32>
    %c0_12 = arith.constant 0 : index
    %c0_13 = arith.constant 0 : index
    %23 = vector.load %arg16[%c0_12, %c0_13] : memref<1x64xf32, #tpu.memory_space<vmem>>, vector<1x64xf32>
    %24 = vector.broadcast %23 : vector<1x64xf32> to vector<16x64xf32>
    %25 = arith.addf %22, %24 : vector<16x64xf32>
    %26 = arith.negf %25 : vector<16x64xf32>
    %27 = math.exp %26 : vector<16x64xf32>
    %cst_14 = arith.constant 1.000000e+00 : f32
    %28 = vector.broadcast %cst_14 : f32 to vector<16x64xf32>
    %29 = arith.addf %28, %27 : vector<16x64xf32>
    %30 = arith.divf %28, %29 : vector<16x64xf32>
    %31 = arith.mulf %25, %30 : vector<16x64xf32>
    %c0_15 = arith.constant 0 : index
    %c0_16 = arith.constant 0 : index
    %c0_17 = arith.constant 0 : index
    %32 = vector.load %arg2[%c0_15, %c0_16, %c0_17] : memref<3x16x16xf32, #tpu.memory_space<vmem>>, vector<3x16x16xf32>
    %c0_18 = arith.constant 0 : index
    %c0_19 = arith.constant 0 : index
    %c0_20 = arith.constant 0 : index
    %33 = vector.load %arg6[%c0_18, %c0_19, %c0_20] : memref<3x64x64xf32, #tpu.memory_space<vmem>>, vector<3x64x64xf32>
    %34 = vector.extract_strided_slice %32 {offsets = [0, 0, 0], sizes = [1, 16, 16], strides = [1, 1, 1]} : vector<3x16x16xf32> to vector<1x16x16xf32>
    %35 = vector.shape_cast %34 : vector<1x16x16xf32> to vector<16x16xf32>
    %cst_21 = arith.constant dense<0.000000e+00> : vector<16x64xf32>
    %36 = tpu.matmul %35, %31, %cst_21 {dimension_numbers = #tpu.dot_dimension_numbers<[1], [0], [0], [1], [0, 0, 1, 1], [], []>} : vector<16x16xf32>, vector<16x64xf32>, vector<16x64xf32> -> vector<16x64xf32>
    %37 = vector.extract_strided_slice %33 {offsets = [0, 0, 0], sizes = [1, 64, 64], strides = [1, 1, 1]} : vector<3x64x64xf32> to vector<1x64x64xf32>
    %38 = vector.shape_cast %37 : vector<1x64x64xf32> to vector<64x64xf32>
    %cst_22 = arith.constant dense<0.000000e+00> : vector<16x64xf32>
    %39 = tpu.matmul %36, %38, %cst_22 {dimension_numbers = #tpu.dot_dimension_numbers<[1], [0], [0], [1], [0, 0, 1, 1], [], []>} : vector<16x64xf32>, vector<64x64xf32>, vector<16x64xf32> -> vector<16x64xf32>
    %40 = vector.extract_strided_slice %32 {offsets = [1, 0, 0], sizes = [1, 16, 16], strides = [1, 1, 1]} : vector<3x16x16xf32> to vector<1x16x16xf32>
    %41 = vector.shape_cast %40 : vector<1x16x16xf32> to vector<16x16xf32>
    %cst_23 = arith.constant dense<0.000000e+00> : vector<16x64xf32>
    %42 = tpu.matmul %41, %31, %cst_23 {dimension_numbers = #tpu.dot_dimension_numbers<[1], [0], [0], [1], [0, 0, 1, 1], [], []>} : vector<16x16xf32>, vector<16x64xf32>, vector<16x64xf32> -> vector<16x64xf32>
    %43 = vector.extract_strided_slice %33 {offsets = [1, 0, 0], sizes = [1, 64, 64], strides = [1, 1, 1]} : vector<3x64x64xf32> to vector<1x64x64xf32>
    %44 = vector.shape_cast %43 : vector<1x64x64xf32> to vector<64x64xf32>
    %cst_24 = arith.constant dense<0.000000e+00> : vector<16x64xf32>
    %45 = tpu.matmul %42, %44, %cst_24 {dimension_numbers = #tpu.dot_dimension_numbers<[1], [0], [0], [1], [0, 0, 1, 1], [], []>} : vector<16x64xf32>, vector<64x64xf32>, vector<16x64xf32> -> vector<16x64xf32>
    %46 = arith.addf %39, %45 : vector<16x64xf32>
    %47 = vector.extract_strided_slice %32 {offsets = [2, 0, 0], sizes = [1, 16, 16], strides = [1, 1, 1]} : vector<3x16x16xf32> to vector<1x16x16xf32>
    %48 = vector.shape_cast %47 : vector<1x16x16xf32> to vector<16x16xf32>
    %cst_25 = arith.constant dense<0.000000e+00> : vector<16x64xf32>
    %49 = tpu.matmul %48, %31, %cst_25 {dimension_numbers = #tpu.dot_dimension_numbers<[1], [0], [0], [1], [0, 0, 1, 1], [], []>} : vector<16x16xf32>, vector<16x64xf32>, vector<16x64xf32> -> vector<16x64xf32>
    %50 = vector.extract_strided_slice %33 {offsets = [2, 0, 0], sizes = [1, 64, 64], strides = [1, 1, 1]} : vector<3x64x64xf32> to vector<1x64x64xf32>
    %51 = vector.shape_cast %50 : vector<1x64x64xf32> to vector<64x64xf32>
    %cst_26 = arith.constant dense<0.000000e+00> : vector<16x64xf32>
    %52 = tpu.matmul %49, %51, %cst_26 {dimension_numbers = #tpu.dot_dimension_numbers<[1], [0], [0], [1], [0, 0, 1, 1], [], []>} : vector<16x64xf32>, vector<64x64xf32>, vector<16x64xf32> -> vector<16x64xf32>
    %53 = arith.addf %46, %52 : vector<16x64xf32>
    %c0_27 = arith.constant 0 : index
    %c0_28 = arith.constant 0 : index
    %54 = vector.load %arg17[%c0_27, %c0_28] : memref<1x64xf32, #tpu.memory_space<vmem>>, vector<1x64xf32>
    %55 = vector.broadcast %54 : vector<1x64xf32> to vector<16x64xf32>
    %56 = arith.addf %53, %55 : vector<16x64xf32>
    %57 = arith.negf %56 : vector<16x64xf32>
    %58 = math.exp %57 : vector<16x64xf32>
    %cst_29 = arith.constant 1.000000e+00 : f32
    %59 = vector.broadcast %cst_29 : f32 to vector<16x64xf32>
    %60 = arith.addf %59, %58 : vector<16x64xf32>
    %61 = arith.divf %59, %60 : vector<16x64xf32>
    %62 = arith.mulf %56, %61 : vector<16x64xf32>
    %c0_30 = arith.constant 0 : index
    %c0_31 = arith.constant 0 : index
    %c0_32 = arith.constant 0 : index
    %63 = vector.load %arg2[%c0_30, %c0_31, %c0_32] : memref<3x16x16xf32, #tpu.memory_space<vmem>>, vector<3x16x16xf32>
    %c0_33 = arith.constant 0 : index
    %c0_34 = arith.constant 0 : index
    %c0_35 = arith.constant 0 : index
    %64 = vector.load %arg7[%c0_33, %c0_34, %c0_35] : memref<3x64x64xf32, #tpu.memory_space<vmem>>, vector<3x64x64xf32>
    %65 = vector.extract_strided_slice %63 {offsets = [0, 0, 0], sizes = [1, 16, 16], strides = [1, 1, 1]} : vector<3x16x16xf32> to vector<1x16x16xf32>
    %66 = vector.shape_cast %65 : vector<1x16x16xf32> to vector<16x16xf32>
    %cst_36 = arith.constant dense<0.000000e+00> : vector<16x64xf32>
    %67 = tpu.matmul %66, %62, %cst_36 {dimension_numbers = #tpu.dot_dimension_numbers<[1], [0], [0], [1], [0, 0, 1, 1], [], []>} : vector<16x16xf32>, vector<16x64xf32>, vector<16x64xf32> -> vector<16x64xf32>
    %68 = vector.extract_strided_slice %64 {offsets = [0, 0, 0], sizes = [1, 64, 64], strides = [1, 1, 1]} : vector<3x64x64xf32> to vector<1x64x64xf32>
    %69 = vector.shape_cast %68 : vector<1x64x64xf32> to vector<64x64xf32>
    %cst_37 = arith.constant dense<0.000000e+00> : vector<16x64xf32>
    %70 = tpu.matmul %67, %69, %cst_37 {dimension_numbers = #tpu.dot_dimension_numbers<[1], [0], [0], [1], [0, 0, 1, 1], [], []>} : vector<16x64xf32>, vector<64x64xf32>, vector<16x64xf32> -> vector<16x64xf32>
    %71 = vector.extract_strided_slice %63 {offsets = [1, 0, 0], sizes = [1, 16, 16], strides = [1, 1, 1]} : vector<3x16x16xf32> to vector<1x16x16xf32>
    %72 = vector.shape_cast %71 : vector<1x16x16xf32> to vector<16x16xf32>
    %cst_38 = arith.constant dense<0.000000e+00> : vector<16x64xf32>
    %73 = tpu.matmul %72, %62, %cst_38 {dimension_numbers = #tpu.dot_dimension_numbers<[1], [0], [0], [1], [0, 0, 1, 1], [], []>} : vector<16x16xf32>, vector<16x64xf32>, vector<16x64xf32> -> vector<16x64xf32>
    %74 = vector.extract_strided_slice %64 {offsets = [1, 0, 0], sizes = [1, 64, 64], strides = [1, 1, 1]} : vector<3x64x64xf32> to vector<1x64x64xf32>
    %75 = vector.shape_cast %74 : vector<1x64x64xf32> to vector<64x64xf32>
    %cst_39 = arith.constant dense<0.000000e+00> : vector<16x64xf32>
    %76 = tpu.matmul %73, %75, %cst_39 {dimension_numbers = #tpu.dot_dimension_numbers<[1], [0], [0], [1], [0, 0, 1, 1], [], []>} : vector<16x64xf32>, vector<64x64xf32>, vector<16x64xf32> -> vector<16x64xf32>
    %77 = arith.addf %70, %76 : vector<16x64xf32>
    %78 = vector.extract_strided_slice %63 {offsets = [2, 0, 0], sizes = [1, 16, 16], strides = [1, 1, 1]} : vector<3x16x16xf32> to vector<1x16x16xf32>
    %79 = vector.shape_cast %78 : vector<1x16x16xf32> to vector<16x16xf32>
    %cst_40 = arith.constant dense<0.000000e+00> : vector<16x64xf32>
    %80 = tpu.matmul %79, %62, %cst_40 {dimension_numbers = #tpu.dot_dimension_numbers<[1], [0], [0], [1], [0, 0, 1, 1], [], []>} : vector<16x16xf32>, vector<16x64xf32>, vector<16x64xf32> -> vector<16x64xf32>
    %81 = vector.extract_strided_slice %64 {offsets = [2, 0, 0], sizes = [1, 64, 64], strides = [1, 1, 1]} : vector<3x64x64xf32> to vector<1x64x64xf32>
    %82 = vector.shape_cast %81 : vector<1x64x64xf32> to vector<64x64xf32>
    %cst_41 = arith.constant dense<0.000000e+00> : vector<16x64xf32>
    %83 = tpu.matmul %80, %82, %cst_41 {dimension_numbers = #tpu.dot_dimension_numbers<[1], [0], [0], [1], [0, 0, 1, 1], [], []>} : vector<16x64xf32>, vector<64x64xf32>, vector<16x64xf32> -> vector<16x64xf32>
    %84 = arith.addf %77, %83 : vector<16x64xf32>
    %c0_42 = arith.constant 0 : index
    %c0_43 = arith.constant 0 : index
    %85 = vector.load %arg18[%c0_42, %c0_43] : memref<1x64xf32, #tpu.memory_space<vmem>>, vector<1x64xf32>
    %86 = vector.broadcast %85 : vector<1x64xf32> to vector<16x64xf32>
    %87 = arith.addf %84, %86 : vector<16x64xf32>
    %88 = arith.negf %87 : vector<16x64xf32>
    %89 = math.exp %88 : vector<16x64xf32>
    %cst_44 = arith.constant 1.000000e+00 : f32
    %90 = vector.broadcast %cst_44 : f32 to vector<16x64xf32>
    %91 = arith.addf %90, %89 : vector<16x64xf32>
    %92 = arith.divf %90, %91 : vector<16x64xf32>
    %93 = arith.mulf %87, %92 : vector<16x64xf32>
    %c0_45 = arith.constant 0 : index
    %c0_46 = arith.constant 0 : index
    %c0_47 = arith.constant 0 : index
    %94 = vector.load %arg3[%c0_45, %c0_46, %c0_47] : memref<3x8x16xf32, #tpu.memory_space<vmem>>, vector<3x8x16xf32>
    %c0_48 = arith.constant 0 : index
    %c0_49 = arith.constant 0 : index
    %c0_50 = arith.constant 0 : index
    %95 = vector.load %arg8[%c0_48, %c0_49, %c0_50] : memref<3x64x64xf32, #tpu.memory_space<vmem>>, vector<3x64x64xf32>
    %96 = vector.extract_strided_slice %94 {offsets = [0, 0, 0], sizes = [1, 8, 16], strides = [1, 1, 1]} : vector<3x8x16xf32> to vector<1x8x16xf32>
    %97 = vector.shape_cast %96 : vector<1x8x16xf32> to vector<8x16xf32>
    %cst_51 = arith.constant dense<0.000000e+00> : vector<8x64xf32>
    %98 = tpu.matmul %97, %93, %cst_51 {dimension_numbers = #tpu.dot_dimension_numbers<[1], [0], [0], [1], [0, 0, 1, 1], [], []>} : vector<8x16xf32>, vector<16x64xf32>, vector<8x64xf32> -> vector<8x64xf32>
    %99 = vector.extract_strided_slice %95 {offsets = [0, 0, 0], sizes = [1, 64, 64], strides = [1, 1, 1]} : vector<3x64x64xf32> to vector<1x64x64xf32>
    %100 = vector.shape_cast %99 : vector<1x64x64xf32> to vector<64x64xf32>
    %cst_52 = arith.constant dense<0.000000e+00> : vector<8x64xf32>
    %101 = tpu.matmul %98, %100, %cst_52 {dimension_numbers = #tpu.dot_dimension_numbers<[1], [0], [0], [1], [0, 0, 1, 1], [], []>} : vector<8x64xf32>, vector<64x64xf32>, vector<8x64xf32> -> vector<8x64xf32>
    %102 = vector.extract_strided_slice %94 {offsets = [1, 0, 0], sizes = [1, 8, 16], strides = [1, 1, 1]} : vector<3x8x16xf32> to vector<1x8x16xf32>
    %103 = vector.shape_cast %102 : vector<1x8x16xf32> to vector<8x16xf32>
    %cst_53 = arith.constant dense<0.000000e+00> : vector<8x64xf32>
    %104 = tpu.matmul %103, %93, %cst_53 {dimension_numbers = #tpu.dot_dimension_numbers<[1], [0], [0], [1], [0, 0, 1, 1], [], []>} : vector<8x16xf32>, vector<16x64xf32>, vector<8x64xf32> -> vector<8x64xf32>
    %105 = vector.extract_strided_slice %95 {offsets = [1, 0, 0], sizes = [1, 64, 64], strides = [1, 1, 1]} : vector<3x64x64xf32> to vector<1x64x64xf32>
    %106 = vector.shape_cast %105 : vector<1x64x64xf32> to vector<64x64xf32>
    %cst_54 = arith.constant dense<0.000000e+00> : vector<8x64xf32>
    %107 = tpu.matmul %104, %106, %cst_54 {dimension_numbers = #tpu.dot_dimension_numbers<[1], [0], [0], [1], [0, 0, 1, 1], [], []>} : vector<8x64xf32>, vector<64x64xf32>, vector<8x64xf32> -> vector<8x64xf32>
    %108 = arith.addf %101, %107 : vector<8x64xf32>
    %109 = vector.extract_strided_slice %94 {offsets = [2, 0, 0], sizes = [1, 8, 16], strides = [1, 1, 1]} : vector<3x8x16xf32> to vector<1x8x16xf32>
    %110 = vector.shape_cast %109 : vector<1x8x16xf32> to vector<8x16xf32>
    %cst_55 = arith.constant dense<0.000000e+00> : vector<8x64xf32>
    %111 = tpu.matmul %110, %93, %cst_55 {dimension_numbers = #tpu.dot_dimension_numbers<[1], [0], [0], [1], [0, 0, 1, 1], [], []>} : vector<8x16xf32>, vector<16x64xf32>, vector<8x64xf32> -> vector<8x64xf32>
    %112 = vector.extract_strided_slice %95 {offsets = [2, 0, 0], sizes = [1, 64, 64], strides = [1, 1, 1]} : vector<3x64x64xf32> to vector<1x64x64xf32>
    %113 = vector.shape_cast %112 : vector<1x64x64xf32> to vector<64x64xf32>
    %cst_56 = arith.constant dense<0.000000e+00> : vector<8x64xf32>
    %114 = tpu.matmul %111, %113, %cst_56 {dimension_numbers = #tpu.dot_dimension_numbers<[1], [0], [0], [1], [0, 0, 1, 1], [], []>} : vector<8x64xf32>, vector<64x64xf32>, vector<8x64xf32> -> vector<8x64xf32>
    %115 = arith.addf %108, %114 : vector<8x64xf32>
    %c0_57 = arith.constant 0 : index
    %c0_58 = arith.constant 0 : index
    %116 = vector.load %arg19[%c0_57, %c0_58] : memref<1x64xf32, #tpu.memory_space<vmem>>, vector<1x64xf32>
    %117 = vector.broadcast %116 : vector<1x64xf32> to vector<8x64xf32>
    %118 = arith.addf %115, %117 : vector<8x64xf32>
    %119 = arith.negf %118 : vector<8x64xf32>
    %120 = math.exp %119 : vector<8x64xf32>
    %cst_59 = arith.constant 1.000000e+00 : f32
    %121 = vector.broadcast %cst_59 : f32 to vector<8x64xf32>
    %122 = arith.addf %121, %120 : vector<8x64xf32>
    %123 = arith.divf %121, %122 : vector<8x64xf32>
    %124 = arith.mulf %118, %123 : vector<8x64xf32>
    %c0_60 = arith.constant 0 : index
    %c0_61 = arith.constant 0 : index
    %c0_62 = arith.constant 0 : index
    %125 = vector.load %arg3[%c0_60, %c0_61, %c0_62] : memref<3x8x16xf32, #tpu.memory_space<vmem>>, vector<3x8x16xf32>
    %c0_63 = arith.constant 0 : index
    %c0_64 = arith.constant 0 : index
    %c0_65 = arith.constant 0 : index
    %126 = vector.load %arg9[%c0_63, %c0_64, %c0_65] : memref<3x64x64xf32, #tpu.memory_space<vmem>>, vector<3x64x64xf32>
    %127 = vector.extract_strided_slice %125 {offsets = [0, 0, 0], sizes = [1, 8, 16], strides = [1, 1, 1]} : vector<3x8x16xf32> to vector<1x8x16xf32>
    %128 = vector.shape_cast %127 : vector<1x8x16xf32> to vector<8x16xf32>
    %cst_66 = arith.constant dense<0.000000e+00> : vector<8x64xf32>
    %129 = tpu.matmul %128, %31, %cst_66 {dimension_numbers = #tpu.dot_dimension_numbers<[1], [0], [0], [1], [0, 0, 1, 1], [], []>} : vector<8x16xf32>, vector<16x64xf32>, vector<8x64xf32> -> vector<8x64xf32>
    %130 = vector.extract_strided_slice %126 {offsets = [0, 0, 0], sizes = [1, 64, 64], strides = [1, 1, 1]} : vector<3x64x64xf32> to vector<1x64x64xf32>
    %131 = vector.shape_cast %130 : vector<1x64x64xf32> to vector<64x64xf32>
    %cst_67 = arith.constant dense<0.000000e+00> : vector<8x64xf32>
    %132 = tpu.matmul %129, %131, %cst_67 {dimension_numbers = #tpu.dot_dimension_numbers<[1], [0], [0], [1], [0, 0, 1, 1], [], []>} : vector<8x64xf32>, vector<64x64xf32>, vector<8x64xf32> -> vector<8x64xf32>
    %133 = vector.extract_strided_slice %125 {offsets = [1, 0, 0], sizes = [1, 8, 16], strides = [1, 1, 1]} : vector<3x8x16xf32> to vector<1x8x16xf32>
    %134 = vector.shape_cast %133 : vector<1x8x16xf32> to vector<8x16xf32>
    %cst_68 = arith.constant dense<0.000000e+00> : vector<8x64xf32>
    %135 = tpu.matmul %134, %31, %cst_68 {dimension_numbers = #tpu.dot_dimension_numbers<[1], [0], [0], [1], [0, 0, 1, 1], [], []>} : vector<8x16xf32>, vector<16x64xf32>, vector<8x64xf32> -> vector<8x64xf32>
    %136 = vector.extract_strided_slice %126 {offsets = [1, 0, 0], sizes = [1, 64, 64], strides = [1, 1, 1]} : vector<3x64x64xf32> to vector<1x64x64xf32>
    %137 = vector.shape_cast %136 : vector<1x64x64xf32> to vector<64x64xf32>
    %cst_69 = arith.constant dense<0.000000e+00> : vector<8x64xf32>
    %138 = tpu.matmul %135, %137, %cst_69 {dimension_numbers = #tpu.dot_dimension_numbers<[1], [0], [0], [1], [0, 0, 1, 1], [], []>} : vector<8x64xf32>, vector<64x64xf32>, vector<8x64xf32> -> vector<8x64xf32>
    %139 = arith.addf %132, %138 : vector<8x64xf32>
    %140 = vector.extract_strided_slice %125 {offsets = [2, 0, 0], sizes = [1, 8, 16], strides = [1, 1, 1]} : vector<3x8x16xf32> to vector<1x8x16xf32>
    %141 = vector.shape_cast %140 : vector<1x8x16xf32> to vector<8x16xf32>
    %cst_70 = arith.constant dense<0.000000e+00> : vector<8x64xf32>
    %142 = tpu.matmul %141, %31, %cst_70 {dimension_numbers = #tpu.dot_dimension_numbers<[1], [0], [0], [1], [0, 0, 1, 1], [], []>} : vector<8x16xf32>, vector<16x64xf32>, vector<8x64xf32> -> vector<8x64xf32>
    %143 = vector.extract_strided_slice %126 {offsets = [2, 0, 0], sizes = [1, 64, 64], strides = [1, 1, 1]} : vector<3x64x64xf32> to vector<1x64x64xf32>
    %144 = vector.shape_cast %143 : vector<1x64x64xf32> to vector<64x64xf32>
    %cst_71 = arith.constant dense<0.000000e+00> : vector<8x64xf32>
    %145 = tpu.matmul %142, %144, %cst_71 {dimension_numbers = #tpu.dot_dimension_numbers<[1], [0], [0], [1], [0, 0, 1, 1], [], []>} : vector<8x64xf32>, vector<64x64xf32>, vector<8x64xf32> -> vector<8x64xf32>
    %146 = arith.addf %139, %145 : vector<8x64xf32>
    %c0_72 = arith.constant 0 : index
    %c0_73 = arith.constant 0 : index
    %147 = vector.load %arg20[%c0_72, %c0_73] : memref<1x64xf32, #tpu.memory_space<vmem>>, vector<1x64xf32>
    %148 = vector.broadcast %147 : vector<1x64xf32> to vector<8x64xf32>
    %149 = arith.addf %146, %148 : vector<8x64xf32>
    %150 = arith.negf %149 : vector<8x64xf32>
    %151 = math.exp %150 : vector<8x64xf32>
    %cst_74 = arith.constant 1.000000e+00 : f32
    %152 = vector.broadcast %cst_74 : f32 to vector<8x64xf32>
    %153 = arith.addf %152, %151 : vector<8x64xf32>
    %154 = arith.divf %152, %153 : vector<8x64xf32>
    %155 = arith.mulf %149, %154 : vector<8x64xf32>
    %c0_75 = arith.constant 0 : index
    %c0_76 = arith.constant 0 : index
    %c0_77 = arith.constant 0 : index
    %156 = vector.load %arg4[%c0_75, %c0_76, %c0_77] : memref<3x8x8xf32, #tpu.memory_space<vmem>>, vector<3x8x8xf32>
    %c0_78 = arith.constant 0 : index
    %c0_79 = arith.constant 0 : index
    %c0_80 = arith.constant 0 : index
    %157 = vector.load %arg10[%c0_78, %c0_79, %c0_80] : memref<3x64x64xf32, #tpu.memory_space<vmem>>, vector<3x64x64xf32>
    %158 = vector.extract_strided_slice %156 {offsets = [0, 0, 0], sizes = [1, 8, 8], strides = [1, 1, 1]} : vector<3x8x8xf32> to vector<1x8x8xf32>
    %159 = vector.shape_cast %158 : vector<1x8x8xf32> to vector<8x8xf32>
    %cst_81 = arith.constant dense<0.000000e+00> : vector<8x64xf32>
    %160 = tpu.matmul %159, %155, %cst_81 {dimension_numbers = #tpu.dot_dimension_numbers<[1], [0], [0], [1], [0, 0, 1, 1], [], []>} : vector<8x8xf32>, vector<8x64xf32>, vector<8x64xf32> -> vector<8x64xf32>
    %161 = vector.extract_strided_slice %157 {offsets = [0, 0, 0], sizes = [1, 64, 64], strides = [1, 1, 1]} : vector<3x64x64xf32> to vector<1x64x64xf32>
    %162 = vector.shape_cast %161 : vector<1x64x64xf32> to vector<64x64xf32>
    %cst_82 = arith.constant dense<0.000000e+00> : vector<8x64xf32>
    %163 = tpu.matmul %160, %162, %cst_82 {dimension_numbers = #tpu.dot_dimension_numbers<[1], [0], [0], [1], [0, 0, 1, 1], [], []>} : vector<8x64xf32>, vector<64x64xf32>, vector<8x64xf32> -> vector<8x64xf32>
    %164 = vector.extract_strided_slice %156 {offsets = [1, 0, 0], sizes = [1, 8, 8], strides = [1, 1, 1]} : vector<3x8x8xf32> to vector<1x8x8xf32>
    %165 = vector.shape_cast %164 : vector<1x8x8xf32> to vector<8x8xf32>
    %cst_83 = arith.constant dense<0.000000e+00> : vector<8x64xf32>
    %166 = tpu.matmul %165, %155, %cst_83 {dimension_numbers = #tpu.dot_dimension_numbers<[1], [0], [0], [1], [0, 0, 1, 1], [], []>} : vector<8x8xf32>, vector<8x64xf32>, vector<8x64xf32> -> vector<8x64xf32>
    %167 = vector.extract_strided_slice %157 {offsets = [1, 0, 0], sizes = [1, 64, 64], strides = [1, 1, 1]} : vector<3x64x64xf32> to vector<1x64x64xf32>
    %168 = vector.shape_cast %167 : vector<1x64x64xf32> to vector<64x64xf32>
    %cst_84 = arith.constant dense<0.000000e+00> : vector<8x64xf32>
    %169 = tpu.matmul %166, %168, %cst_84 {dimension_numbers = #tpu.dot_dimension_numbers<[1], [0], [0], [1], [0, 0, 1, 1], [], []>} : vector<8x64xf32>, vector<64x64xf32>, vector<8x64xf32> -> vector<8x64xf32>
    %170 = arith.addf %163, %169 : vector<8x64xf32>
    %171 = vector.extract_strided_slice %156 {offsets = [2, 0, 0], sizes = [1, 8, 8], strides = [1, 1, 1]} : vector<3x8x8xf32> to vector<1x8x8xf32>
    %172 = vector.shape_cast %171 : vector<1x8x8xf32> to vector<8x8xf32>
    %cst_85 = arith.constant dense<0.000000e+00> : vector<8x64xf32>
    %173 = tpu.matmul %172, %155, %cst_85 {dimension_numbers = #tpu.dot_dimension_numbers<[1], [0], [0], [1], [0, 0, 1, 1], [], []>} : vector<8x8xf32>, vector<8x64xf32>, vector<8x64xf32> -> vector<8x64xf32>
    %174 = vector.extract_strided_slice %157 {offsets = [2, 0, 0], sizes = [1, 64, 64], strides = [1, 1, 1]} : vector<3x64x64xf32> to vector<1x64x64xf32>
    %175 = vector.shape_cast %174 : vector<1x64x64xf32> to vector<64x64xf32>
    %cst_86 = arith.constant dense<0.000000e+00> : vector<8x64xf32>
    %176 = tpu.matmul %173, %175, %cst_86 {dimension_numbers = #tpu.dot_dimension_numbers<[1], [0], [0], [1], [0, 0, 1, 1], [], []>} : vector<8x64xf32>, vector<64x64xf32>, vector<8x64xf32> -> vector<8x64xf32>
    %177 = arith.addf %170, %176 : vector<8x64xf32>
    %c0_87 = arith.constant 0 : index
    %c0_88 = arith.constant 0 : index
    %178 = vector.load %arg21[%c0_87, %c0_88] : memref<1x64xf32, #tpu.memory_space<vmem>>, vector<1x64xf32>
    %179 = vector.broadcast %178 : vector<1x64xf32> to vector<8x64xf32>
    %180 = arith.addf %177, %179 : vector<8x64xf32>
    %181 = arith.negf %180 : vector<8x64xf32>
    %182 = math.exp %181 : vector<8x64xf32>
    %cst_89 = arith.constant 1.000000e+00 : f32
    %183 = vector.broadcast %cst_89 : f32 to vector<8x64xf32>
    %184 = arith.addf %183, %182 : vector<8x64xf32>
    %185 = arith.divf %183, %184 : vector<8x64xf32>
    %186 = arith.mulf %180, %185 : vector<8x64xf32>
    %c0_90 = arith.constant 0 : index
    %c0_91 = arith.constant 0 : index
    %c0_92 = arith.constant 0 : index
    %187 = vector.load %arg4[%c0_90, %c0_91, %c0_92] : memref<3x8x8xf32, #tpu.memory_space<vmem>>, vector<3x8x8xf32>
    %c0_93 = arith.constant 0 : index
    %c0_94 = arith.constant 0 : index
    %c0_95 = arith.constant 0 : index
    %188 = vector.load %arg11[%c0_93, %c0_94, %c0_95] : memref<3x64x64xf32, #tpu.memory_space<vmem>>, vector<3x64x64xf32>
    %189 = vector.extract_strided_slice %187 {offsets = [0, 0, 0], sizes = [1, 8, 8], strides = [1, 1, 1]} : vector<3x8x8xf32> to vector<1x8x8xf32>
    %190 = vector.shape_cast %189 : vector<1x8x8xf32> to vector<8x8xf32>
    %cst_96 = arith.constant dense<0.000000e+00> : vector<8x64xf32>
    %191 = tpu.matmul %190, %186, %cst_96 {dimension_numbers = #tpu.dot_dimension_numbers<[1], [0], [0], [1], [0, 0, 1, 1], [], []>} : vector<8x8xf32>, vector<8x64xf32>, vector<8x64xf32> -> vector<8x64xf32>
    %192 = vector.extract_strided_slice %188 {offsets = [0, 0, 0], sizes = [1, 64, 64], strides = [1, 1, 1]} : vector<3x64x64xf32> to vector<1x64x64xf32>
    %193 = vector.shape_cast %192 : vector<1x64x64xf32> to vector<64x64xf32>
    %cst_97 = arith.constant dense<0.000000e+00> : vector<8x64xf32>
    %194 = tpu.matmul %191, %193, %cst_97 {dimension_numbers = #tpu.dot_dimension_numbers<[1], [0], [0], [1], [0, 0, 1, 1], [], []>} : vector<8x64xf32>, vector<64x64xf32>, vector<8x64xf32> -> vector<8x64xf32>
    %195 = vector.extract_strided_slice %187 {offsets = [1, 0, 0], sizes = [1, 8, 8], strides = [1, 1, 1]} : vector<3x8x8xf32> to vector<1x8x8xf32>
    %196 = vector.shape_cast %195 : vector<1x8x8xf32> to vector<8x8xf32>
    %cst_98 = arith.constant dense<0.000000e+00> : vector<8x64xf32>
    %197 = tpu.matmul %196, %186, %cst_98 {dimension_numbers = #tpu.dot_dimension_numbers<[1], [0], [0], [1], [0, 0, 1, 1], [], []>} : vector<8x8xf32>, vector<8x64xf32>, vector<8x64xf32> -> vector<8x64xf32>
    %198 = vector.extract_strided_slice %188 {offsets = [1, 0, 0], sizes = [1, 64, 64], strides = [1, 1, 1]} : vector<3x64x64xf32> to vector<1x64x64xf32>
    %199 = vector.shape_cast %198 : vector<1x64x64xf32> to vector<64x64xf32>
    %cst_99 = arith.constant dense<0.000000e+00> : vector<8x64xf32>
    %200 = tpu.matmul %197, %199, %cst_99 {dimension_numbers = #tpu.dot_dimension_numbers<[1], [0], [0], [1], [0, 0, 1, 1], [], []>} : vector<8x64xf32>, vector<64x64xf32>, vector<8x64xf32> -> vector<8x64xf32>
    %201 = arith.addf %194, %200 : vector<8x64xf32>
    %202 = vector.extract_strided_slice %187 {offsets = [2, 0, 0], sizes = [1, 8, 8], strides = [1, 1, 1]} : vector<3x8x8xf32> to vector<1x8x8xf32>
    %203 = vector.shape_cast %202 : vector<1x8x8xf32> to vector<8x8xf32>
    %cst_100 = arith.constant dense<0.000000e+00> : vector<8x64xf32>
    %204 = tpu.matmul %203, %186, %cst_100 {dimension_numbers = #tpu.dot_dimension_numbers<[1], [0], [0], [1], [0, 0, 1, 1], [], []>} : vector<8x8xf32>, vector<8x64xf32>, vector<8x64xf32> -> vector<8x64xf32>
    %205 = vector.extract_strided_slice %188 {offsets = [2, 0, 0], sizes = [1, 64, 64], strides = [1, 1, 1]} : vector<3x64x64xf32> to vector<1x64x64xf32>
    %206 = vector.shape_cast %205 : vector<1x64x64xf32> to vector<64x64xf32>
    %cst_101 = arith.constant dense<0.000000e+00> : vector<8x64xf32>
    %207 = tpu.matmul %204, %206, %cst_101 {dimension_numbers = #tpu.dot_dimension_numbers<[1], [0], [0], [1], [0, 0, 1, 1], [], []>} : vector<8x64xf32>, vector<64x64xf32>, vector<8x64xf32> -> vector<8x64xf32>
    %208 = arith.addf %201, %207 : vector<8x64xf32>
    %c0_102 = arith.constant 0 : index
    %c0_103 = arith.constant 0 : index
    %209 = vector.load %arg22[%c0_102, %c0_103] : memref<1x64xf32, #tpu.memory_space<vmem>>, vector<1x64xf32>
    %210 = vector.broadcast %209 : vector<1x64xf32> to vector<8x64xf32>
    %211 = arith.addf %208, %210 : vector<8x64xf32>
    %212 = arith.negf %211 : vector<8x64xf32>
    %213 = math.exp %212 : vector<8x64xf32>
    %cst_104 = arith.constant 1.000000e+00 : f32
    %214 = vector.broadcast %cst_104 : f32 to vector<8x64xf32>
    %215 = arith.addf %214, %213 : vector<8x64xf32>
    %216 = arith.divf %214, %215 : vector<8x64xf32>
    %217 = arith.mulf %211, %216 : vector<8x64xf32>
    %c0_105 = arith.constant 0 : index
    %c0_106 = arith.constant 0 : index
    %c0_107 = arith.constant 0 : index
    %218 = vector.load %arg4[%c0_105, %c0_106, %c0_107] : memref<3x8x8xf32, #tpu.memory_space<vmem>>, vector<3x8x8xf32>
    %c0_108 = arith.constant 0 : index
    %c0_109 = arith.constant 0 : index
    %c0_110 = arith.constant 0 : index
    %219 = vector.load %arg12[%c0_108, %c0_109, %c0_110] : memref<3x64x64xf32, #tpu.memory_space<vmem>>, vector<3x64x64xf32>
    %220 = vector.extract_strided_slice %218 {offsets = [0, 0, 0], sizes = [1, 8, 8], strides = [1, 1, 1]} : vector<3x8x8xf32> to vector<1x8x8xf32>
    %221 = vector.shape_cast %220 : vector<1x8x8xf32> to vector<8x8xf32>
    %cst_111 = arith.constant dense<0.000000e+00> : vector<8x64xf32>
    %222 = tpu.matmul %221, %217, %cst_111 {dimension_numbers = #tpu.dot_dimension_numbers<[1], [0], [0], [1], [0, 0, 1, 1], [], []>} : vector<8x8xf32>, vector<8x64xf32>, vector<8x64xf32> -> vector<8x64xf32>
    %223 = vector.extract_strided_slice %219 {offsets = [0, 0, 0], sizes = [1, 64, 64], strides = [1, 1, 1]} : vector<3x64x64xf32> to vector<1x64x64xf32>
    %224 = vector.shape_cast %223 : vector<1x64x64xf32> to vector<64x64xf32>
    %cst_112 = arith.constant dense<0.000000e+00> : vector<8x64xf32>
    %225 = tpu.matmul %222, %224, %cst_112 {dimension_numbers = #tpu.dot_dimension_numbers<[1], [0], [0], [1], [0, 0, 1, 1], [], []>} : vector<8x64xf32>, vector<64x64xf32>, vector<8x64xf32> -> vector<8x64xf32>
    %226 = vector.extract_strided_slice %218 {offsets = [1, 0, 0], sizes = [1, 8, 8], strides = [1, 1, 1]} : vector<3x8x8xf32> to vector<1x8x8xf32>
    %227 = vector.shape_cast %226 : vector<1x8x8xf32> to vector<8x8xf32>
    %cst_113 = arith.constant dense<0.000000e+00> : vector<8x64xf32>
    %228 = tpu.matmul %227, %217, %cst_113 {dimension_numbers = #tpu.dot_dimension_numbers<[1], [0], [0], [1], [0, 0, 1, 1], [], []>} : vector<8x8xf32>, vector<8x64xf32>, vector<8x64xf32> -> vector<8x64xf32>
    %229 = vector.extract_strided_slice %219 {offsets = [1, 0, 0], sizes = [1, 64, 64], strides = [1, 1, 1]} : vector<3x64x64xf32> to vector<1x64x64xf32>
    %230 = vector.shape_cast %229 : vector<1x64x64xf32> to vector<64x64xf32>
    %cst_114 = arith.constant dense<0.000000e+00> : vector<8x64xf32>
    %231 = tpu.matmul %228, %230, %cst_114 {dimension_numbers = #tpu.dot_dimension_numbers<[1], [0], [0], [1], [0, 0, 1, 1], [], []>} : vector<8x64xf32>, vector<64x64xf32>, vector<8x64xf32> -> vector<8x64xf32>
    %232 = arith.addf %225, %231 : vector<8x64xf32>
    %233 = vector.extract_strided_slice %218 {offsets = [2, 0, 0], sizes = [1, 8, 8], strides = [1, 1, 1]} : vector<3x8x8xf32> to vector<1x8x8xf32>
    %234 = vector.shape_cast %233 : vector<1x8x8xf32> to vector<8x8xf32>
    %cst_115 = arith.constant dense<0.000000e+00> : vector<8x64xf32>
    %235 = tpu.matmul %234, %217, %cst_115 {dimension_numbers = #tpu.dot_dimension_numbers<[1], [0], [0], [1], [0, 0, 1, 1], [], []>} : vector<8x8xf32>, vector<8x64xf32>, vector<8x64xf32> -> vector<8x64xf32>
    %236 = vector.extract_strided_slice %219 {offsets = [2, 0, 0], sizes = [1, 64, 64], strides = [1, 1, 1]} : vector<3x64x64xf32> to vector<1x64x64xf32>
    %237 = vector.shape_cast %236 : vector<1x64x64xf32> to vector<64x64xf32>
    %cst_116 = arith.constant dense<0.000000e+00> : vector<8x64xf32>
    %238 = tpu.matmul %235, %237, %cst_116 {dimension_numbers = #tpu.dot_dimension_numbers<[1], [0], [0], [1], [0, 0, 1, 1], [], []>} : vector<8x64xf32>, vector<64x64xf32>, vector<8x64xf32> -> vector<8x64xf32>
    %239 = arith.addf %232, %238 : vector<8x64xf32>
    %c0_117 = arith.constant 0 : index
    %c0_118 = arith.constant 0 : index
    %240 = vector.load %arg23[%c0_117, %c0_118] : memref<1x64xf32, #tpu.memory_space<vmem>>, vector<1x64xf32>
    %241 = vector.broadcast %240 : vector<1x64xf32> to vector<8x64xf32>
    %242 = arith.addf %239, %241 : vector<8x64xf32>
    %243 = arith.negf %242 : vector<8x64xf32>
    %244 = math.exp %243 : vector<8x64xf32>
    %cst_119 = arith.constant 1.000000e+00 : f32
    %245 = vector.broadcast %cst_119 : f32 to vector<8x64xf32>
    %246 = arith.addf %245, %244 : vector<8x64xf32>
    %247 = arith.divf %245, %246 : vector<8x64xf32>
    %248 = arith.mulf %242, %247 : vector<8x64xf32>
    %c0_120 = arith.constant 0 : index
    %c0_121 = arith.constant 0 : index
    %249 = vector.load %arg13[%c0_120, %c0_121] : memref<64x64xf32, #tpu.memory_space<vmem>>, vector<64x64xf32>
    %cst_122 = arith.constant dense<0.000000e+00> : vector<8x64xf32>
    %250 = tpu.matmul %124, %249, %cst_122 {dimension_numbers = #tpu.dot_dimension_numbers<[1], [0], [0], [1], [0, 0, 1, 1], [], []>} : vector<8x64xf32>, vector<64x64xf32>, vector<8x64xf32> -> vector<8x64xf32>
    %c0_123 = arith.constant 0 : index
    %c0_124 = arith.constant 0 : index
    %251 = vector.load %arg14[%c0_123, %c0_124] : memref<64x64xf32, #tpu.memory_space<vmem>>, vector<64x64xf32>
    %cst_125 = arith.constant dense<0.000000e+00> : vector<8x64xf32>
    %252 = tpu.matmul %248, %251, %cst_125 {dimension_numbers = #tpu.dot_dimension_numbers<[1], [0], [0], [1], [0, 0, 1, 1], [], []>} : vector<8x64xf32>, vector<64x64xf32>, vector<8x64xf32> -> vector<8x64xf32>
    %253 = arith.addf %250, %252 : vector<8x64xf32>
    %c0_126 = arith.constant 0 : index
    %c0_127 = arith.constant 0 : index
    %254 = vector.load %arg24[%c0_126, %c0_127] : memref<1x64xf32, #tpu.memory_space<vmem>>, vector<1x64xf32>
    %255 = vector.broadcast %254 : vector<1x64xf32> to vector<8x64xf32>
    %256 = arith.addf %253, %255 : vector<8x64xf32>
    %257 = arith.negf %256 : vector<8x64xf32>
    %258 = math.exp %257 : vector<8x64xf32>
    %cst_128 = arith.constant 1.000000e+00 : f32
    %259 = vector.broadcast %cst_128 : f32 to vector<8x64xf32>
    %260 = arith.addf %259, %258 : vector<8x64xf32>
    %261 = arith.divf %259, %260 : vector<8x64xf32>
    %262 = arith.mulf %256, %261 : vector<8x64xf32>
    %c0_129 = arith.constant 0 : index
    %c0_130 = arith.constant 0 : index
    %263 = vector.load %arg15[%c0_129, %c0_130] : memref<64x64xf32, #tpu.memory_space<vmem>>, vector<64x64xf32>
    %cst_131 = arith.constant dense<0.000000e+00> : vector<8x64xf32>
    %264 = tpu.matmul %262, %263, %cst_131 {dimension_numbers = #tpu.dot_dimension_numbers<[1], [0], [0], [1], [0, 0, 1, 1], [], []>} : vector<8x64xf32>, vector<64x64xf32>, vector<8x64xf32> -> vector<8x64xf32>
    %c0_132 = arith.constant 0 : index
    %c0_133 = arith.constant 0 : index
    %265 = vector.load %arg25[%c0_132, %c0_133] : memref<1x64xf32, #tpu.memory_space<vmem>>, vector<1x64xf32>
    %266 = vector.broadcast %265 : vector<1x64xf32> to vector<8x64xf32>
    %267 = arith.addf %264, %266 : vector<8x64xf32>
    %c0_134 = arith.constant 0 : index
    %c0_135 = arith.constant 0 : index
    %268 = vector.load %arg26[%c0_134, %c0_135] : memref<8x64xf32, #tpu.memory_space<vmem>>, vector<8x64xf32>
    tpu.vector_store %arg26[%c0_134, %c0_135], %267 {strides = array<i32>} : memref<8x64xf32, #tpu.memory_space<vmem>>, vector<8x64xf32>,
    %c0_136 = arith.constant 0 : index
    %c0_137 = arith.constant 0 : index
    %269 = vector.load %arg27[%c0_136, %c0_137] : memref<8x64xf32, #tpu.memory_space<vmem>>, vector<8x64xf32>
    tpu.vector_store %arg27[%c0_136, %c0_137], %155 {strides = array<i32>} : memref<8x64xf32, #tpu.memory_space<vmem>>, vector<8x64xf32>,
    %c0_138 = arith.constant 0 : index
    %c0_139 = arith.constant 0 : index
    %270 = vector.load %arg28[%c0_138, %c0_139] : memref<16x64xf32, #tpu.memory_space<vmem>>, vector<16x64xf32>
    tpu.vector_store %arg28[%c0_138, %c0_139], %93 {strides = array<i32>} : memref<16x64xf32, #tpu.memory_space<vmem>>, vector<16x64xf32>,
    %c0_140 = arith.constant 0 : index
    %c0_141 = arith.constant 0 : index
    %271 = vector.load %arg29[%c0_140, %c0_141] : memref<8x64xf32, #tpu.memory_space<vmem>>, vector<8x64xf32>
    tpu.vector_store %arg29[%c0_140, %c0_141], %186 {strides = array<i32>} : memref<8x64xf32, #tpu.memory_space<vmem>>, vector<8x64xf32>,
    %c0_142 = arith.constant 0 : index
    %c0_143 = arith.constant 0 : index
    %272 = vector.load %arg30[%c0_142, %c0_143] : memref<8x64xf32, #tpu.memory_space<vmem>>, vector<8x64xf32>
    tpu.vector_store %arg30[%c0_142, %c0_143], %217 {strides = array<i32>} : memref<8x64xf32, #tpu.memory_space<vmem>>, vector<8x64xf32>,
    return
  }
}

</mosaic_0001>

<llo_original>
// kernel: yolo_block1_forward.1
$region0: #{yolo_block1_forward.1}
  #allocation0 [shape = 'u32[]', space=smem, size = 0x4, offset = 0x4, fixed_abs, tag = 'smem constant byte address 0x4 - core index']
  #allocation1 [shape = 'u32[144,128]{1,0:T(1,128)}', space=vmem, size = 0x12000, scoped, tag = 'internal scratch']
  %s0 = inlined_call_operand.smem [shape: u32[31], index: -1, kind: input, shape index: {}]
  %s1 = sld [smem:[%s0]]
  %s2 = scalar_lea.smem %s0, 1
  %s3 = sld [smem:[%s2]]
  %s4 = scalar_lea.smem %s0, 2
  %s5 = sld [smem:[%s4]]
  %s6 = scalar_lea.smem %s0, 3
  %s7 = sld [smem:[%s6]]
  %s8 = scalar_lea.smem %s0, 4
  %s9 = sld [smem:[%s8]]
  %s10 = scalar_lea.smem %s0, 5
  %s11 = sld [smem:[%s10]]
  %s12 = scalar_lea.smem %s0, 6
  %s13 = sld [smem:[%s12]]
  %s14 = scalar_lea.smem %s0, 7
  %s15 = sld [smem:[%s14]]
  %s16 = scalar_lea.smem %s0, 8
  %s17 = sld [smem:[%s16]]
  %s18 = scalar_lea.smem %s0, 9
  %s19 = sld [smem:[%s18]]
  %s20 = scalar_lea.smem %s0, 10
  %s21 = sld [smem:[%s20]]
  %s22 = scalar_lea.smem %s0, 11
  %s23 = sld [smem:[%s22]]
  %s24 = scalar_lea.smem %s0, 12
  %s25 = sld [smem:[%s24]]
  %s26 = scalar_lea.smem %s0, 13
  %s27 = sld [smem:[%s26]]
  %s28 = scalar_lea.smem %s0, 14
  %s29 = sld [smem:[%s28]]
  %s30 = scalar_lea.smem %s0, 15
  %s31 = sld [smem:[%s30]]
  %s32 = scalar_lea.smem %s0, 16
  %s33 = sld [smem:[%s32]]
  %s34 = scalar_lea.smem %s0, 17
  %s35 = sld [smem:[%s34]]
  %s36 = scalar_lea.smem %s0, 18
  %s37 = sld [smem:[%s36]]
  %s38 = scalar_lea.smem %s0, 19
  %s39 = sld [smem:[%s38]]
  %s40 = scalar_lea.smem %s0, 20
  %s41 = sld [smem:[%s40]]
  %s42 = scalar_lea.smem %s0, 21
  %s43 = sld [smem:[%s42]]
  %s44 = scalar_lea.smem %s0, 22
  %s45 = sld [smem:[%s44]]
  %s46 = scalar_lea.smem %s0, 23
  %s47 = sld [smem:[%s46]]
  %s48 = scalar_lea.smem %s0, 24
  %s49 = sld [smem:[%s48]]
  %s50 = scalar_lea.smem %s0, 25
  %s51 = sld [smem:[%s50]]
  %s52 = scalar_lea.smem %s0, 26
  %s53 = sld [smem:[%s52]]
  %s54 = scalar_lea.smem %s0, 27
  %s55 = sld [smem:[%s54]]
  %s56 = scalar_lea.smem %s0, 28
  %s57 = sld [smem:[%s56]]
  %s58 = scalar_lea.smem %s0, 29
  %s59 = sld [smem:[%s58]]
  %s60 = scalar_lea.smem %s0, 30
  %s61 = sld [smem:[%s60]]
  %62 = xla_tuple %s53, %s55, %s57, %s59, %s61
  %s63 = sld [smem:[#allocation0]]
  $region218: #{yolo_block1_forward.1} parent=0
    _
  %s65 = ssub.s32 1, %s63
  %s66 = scalar_select 0, %s65, %s63
  $region1: #{yolo_block1_forward.1} parent=0
    #allocation2 [shape = 'u8[24576]{0}', space=vmem, size = 0x6000, scoped, tag = 'input window, operand 2, single buffered']
    #allocation3 [shape = 's32[1]{0}', space=sflag, size = 0x4, scoped, tag = 'scoped memory for yolo_block1_forward.1']
    #allocation4 [shape = 'u8[12288]{0}', space=vmem, size = 0x3000, scoped, tag = 'input window, operand 3, single buffered']
    #allocation5 [shape = 's32[1]{0}', space=sflag, size = 0x4, scoped, tag = 'scoped memory for yolo_block1_forward.1']
    #allocation6 [shape = 'u8[12288]{0}', space=vmem, size = 0x3000, scoped, tag = 'input window, operand 4, single buffered']
    #allocation7 [shape = 'u8[98304]{0}', space=vmem, size = 0x18000, scoped, tag = 'input window, operand 8, single buffered']
    #allocation8 [shape = 's32[1]{0}', space=sflag, size = 0x4, scoped, tag = 'scoped memory for yolo_block1_forward.1']
    #allocation9 [shape = 'u8[98304]{0}', space=vmem, size = 0x18000, scoped, tag = 'input window, operand 9, single buffered']
    #allocation10 [shape = 'u8[98304]{0}', space=vmem, size = 0x18000, scoped, tag = 'input window, operand 10, single buffered']
    #allocation11 [shape = 's32[1]{0}', space=sflag, size = 0x4, scoped, tag = 'scoped memory for yolo_block1_forward.1']
    #allocation12 [shape = 'u8[98304]{0}', space=vmem, size = 0x18000, scoped, tag = 'input window, operand 11, single buffered']
    #allocation13 [shape = 'u8[98304]{0}', space=vmem, size = 0x18000, scoped, tag = 'input window, operand 12, single buffered']
    #allocation14 [shape = 's32[1]{0}', space=sflag, size = 0x4, scoped, tag = 'scoped memory for yolo_block1_forward.1']
    #allocation15 [shape = 'u8[32768]{0}', space=vmem, size = 0x8000, scoped, tag = 'input window, operand 13, single buffered']
    #allocation16 [shape = 'u8[32768]{0}', space=vmem, size = 0x8000, scoped, tag = 'input window, operand 14, single buffered']
    #allocation17 [shape = 's32[1]{0}', space=sflag, size = 0x4, scoped, tag = 'scoped memory for yolo_block1_forward.1']
    #allocation18 [shape = 'u8[32768]{0}', space=vmem, size = 0x8000, scoped, tag = 'input window, operand 15, single buffered']
    #allocation19 [shape = 'u8[512]{0}', space=vmem, size = 0x400, scoped, tag = 'input window, operand 19, single buffered']
    #allocation20 [shape = 's32[1]{0}', space=sflag, size = 0x4, scoped, tag = 'scoped memory for yolo_block1_forward.1']
    #allocation21 [shape = 'u8[512]{0}', space=vmem, size = 0x400, scoped, tag = 'input window, operand 20, single buffered']
    #allocation22 [shape = 'u8[512]{0}', space=vmem, size = 0x400, scoped, tag = 'input window, operand 21, single buffered']
    #allocation23 [shape = 's32[1]{0}', space=sflag, size = 0x4, scoped, tag = 'scoped memory for yolo_block1_forward.1']
    #allocation24 [shape = 'u8[512]{0}', space=vmem, size = 0x400, scoped, tag = 'input window, operand 22, single buffered']
    #allocation25 [shape = 'u8[512]{0}', space=vmem, size = 0x400, scoped, tag = 'input window, operand 23, single buffered']
    #allocation26 [shape = 's32[1]{0}', space=sflag, size = 0x4, scoped, tag = 'scoped memory for yolo_block1_forward.1']
    #allocation27 [shape = 'u8[512]{0}', space=vmem, size = 0x400, scoped, tag = 'input window, operand 24, single buffered']
    #allocation28 [shape = 'u8[512]{0}', space=vmem, size = 0x400, scoped, tag = 'input window, operand 25, single buffered']
    #allocation29 [shape = 's32[1]{0}', space=sflag, size = 0x4, scoped, tag = 'scoped memory for yolo_block1_forward.1']
    %67 = vsyncpa [#allocation3], 0
    %68 = vsyncpa [#allocation5], 0
    %69 = vsyncpa [#allocation8], 0
    %70 = vsyncpa [#allocation11], 0
    %71 = vsyncpa [#allocation14], 0
    %72 = vsyncpa [#allocation17], 0
    %73 = vsyncpa [#allocation20], 0
    %74 = vsyncpa [#allocation23], 0
    %75 = vsyncpa [#allocation26], 0
    %76 = vsyncpa [#allocation29], 0
    // Predicated region
    $region2: #{yolo_block1_forward.1} parent=1 // pred_check
      _
    $region3: #{yolo_block1_forward.1} parent=1 // pred_check_branch
      %78 = sbr.rel (0) target = $region5
    $region4: #{yolo_block1_forward.1} parent=1 // pred_region
      _
    $region5: #{yolo_block1_forward.1} parent=1 // pred_fallthru
      _
    // Predicated region
    $region6: #{yolo_block1_forward.1} parent=1 // pred_check
      _
    $region7: #{yolo_block1_forward.1} parent=1 // pred_check_branch
      %80 = sbr.rel (0) target = $region9
    $region8: #{yolo_block1_forward.1} parent=1 // pred_region
      _
    $region9: #{yolo_block1_forward.1} parent=1 // pred_fallthru
      _
    // Predicated region
    $region10: #{yolo_block1_forward.1} parent=1 // pred_check
      _
    $region11: #{yolo_block1_forward.1} parent=1 // pred_check_branch
      %82 = sbr.rel (0) target = $region13
    $region12: #{yolo_block1_forward.1} parent=1 // pred_region
      %s84 = ssub.s32 768, 768
      %85 = vsyncadd [#allocation3], %s84
      %s86 = sshll.u32 [#allocation2], 4
      %s87 = int_to_ptr.vmem [resolvable:$true] %s86
      %92 = dma.hbm_to_vmem [thread:$0]  %s5, 768, %s87, [#allocation3], 128, 128, 8
    $region13: #{yolo_block1_forward.1} parent=1 // pred_fallthru
      _
    // Predicated region
    $region14: #{yolo_block1_forward.1} parent=1 // pred_check
      _
    $region15: #{yolo_block1_forward.1} parent=1 // pred_check_branch
      %94 = sbr.rel (0) target = $region17
    $region16: #{yolo_block1_forward.1} parent=1 // pred_region
      %s96 = ssub.s32 384, 384
      %97 = vsyncadd [#allocation5], %s96
      %s98 = sshll.u32 [#allocation4], 4
      %s99 = int_to_ptr.vmem [resolvable:$true] %s98
      %104 = dma.hbm_to_vmem [thread:$0]  %s7, 384, %s99, [#allocation5], 128, 128, 8
    $region17: #{yolo_block1_forward.1} parent=1 // pred_fallthru
      _
    // Predicated region
    $region18: #{yolo_block1_forward.1} parent=1 // pred_check
      _
    $region19: #{yolo_block1_forward.1} parent=1 // pred_check_branch
      %106 = sbr.rel (0) target = $region21
    $region20: #{yolo_block1_forward.1} parent=1 // pred_region
      %s108 = ssub.s32 384, 384
      %109 = vsyncadd [#allocation5], %s108
      %s110 = sshll.u32 [#allocation6], 4
      %s111 = int_to_ptr.vmem [resolvable:$true] %s110
      %116 = dma.hbm_to_vmem [thread:$0]  %s9, 384, %s111, [#allocation5], 128, 128, 8
    $region21: #{yolo_block1_forward.1} parent=1 // pred_fallthru
      _
    // Predicated region
    $region22: #{yolo_block1_forward.1} parent=1 // pred_check
      _
    $region23: #{yolo_block1_forward.1} parent=1 // pred_check_branch
      %118 = sbr.rel (0) target = $region25
    $region24: #{yolo_block1_forward.1} parent=1 // pred_region
      _
    $region25: #{yolo_block1_forward.1} parent=1 // pred_fallthru
      _
    // Predicated region
    $region26: #{yolo_block1_forward.1} parent=1 // pred_check
      _
    $region27: #{yolo_block1_forward.1} parent=1 // pred_check_branch
      %120 = sbr.rel (0) target = $region29
    $region28: #{yolo_block1_forward.1} parent=1 // pred_region
      _
    $region29: #{yolo_block1_forward.1} parent=1 // pred_fallthru
      _
    // Predicated region
    $region30: #{yolo_block1_forward.1} parent=1 // pred_check
      _
    $region31: #{yolo_block1_forward.1} parent=1 // pred_check_branch
      %122 = sbr.rel (0) target = $region33
    $region32: #{yolo_block1_forward.1} parent=1 // pred_region
      _
    $region33: #{yolo_block1_forward.1} parent=1 // pred_fallthru
      _
    // Predicated region
    $region34: #{yolo_block1_forward.1} parent=1 // pred_check
      _
    $region35: #{yolo_block1_forward.1} parent=1 // pred_check_branch
      %124 = sbr.rel (0) target = $region37
    $region36: #{yolo_block1_forward.1} parent=1 // pred_region
      %s126 = ssub.s32 3072, 3072
      %127 = vsyncadd [#allocation8], %s126
      %s128 = sshll.u32 [#allocation7], 4
      %s129 = int_to_ptr.vmem [resolvable:$true] %s128
      %134 = dma.hbm_to_vmem [thread:$0]  %s17, 3072, %s129, [#allocation8], 128, 128, 8
    $region37: #{yolo_block1_forward.1} parent=1 // pred_fallthru
      _
    // Predicated region
    $region38: #{yolo_block1_forward.1} parent=1 // pred_check
      _
    $region39: #{yolo_block1_forward.1} parent=1 // pred_check_branch
      %136 = sbr.rel (0) target = $region41
    $region40: #{yolo_block1_forward.1} parent=1 // pred_region
      %s138 = ssub.s32 3072, 3072
      %139 = vsyncadd [#allocation8], %s138
      %s140 = sshll.u32 [#allocation9], 4
      %s141 = int_to_ptr.vmem [resolvable:$true] %s140
      %146 = dma.hbm_to_vmem [thread:$0]  %s19, 3072, %s141, [#allocation8], 128, 128, 8
    $region41: #{yolo_block1_forward.1} parent=1 // pred_fallthru
      _
    // Predicated region
    $region42: #{yolo_block1_forward.1} parent=1 // pred_check
      _
    $region43: #{yolo_block1_forward.1} parent=1 // pred_check_branch
      %148 = sbr.rel (0) target = $region45
    $region44: #{yolo_block1_forward.1} parent=1 // pred_region
      %s150 = ssub.s32 3072, 3072
      %151 = vsyncadd [#allocation11], %s150
      %s152 = sshll.u32 [#allocation10], 4
      %s153 = int_to_ptr.vmem [resolvable:$true] %s152
      %158 = dma.hbm_to_vmem [thread:$0]  %s21, 3072, %s153, [#allocation11], 128, 128, 8
    $region45: #{yolo_block1_forward.1} parent=1 // pred_fallthru
      _
    // Predicated region
    $region46: #{yolo_block1_forward.1} parent=1 // pred_check
      _
    $region47: #{yolo_block1_forward.1} parent=1 // pred_check_branch
      %160 = sbr.rel (0) target = $region49
    $region48: #{yolo_block1_forward.1} parent=1 // pred_region
      %s162 = ssub.s32 3072, 3072
      %163 = vsyncadd [#allocation11], %s162
      %s164 = sshll.u32 [#allocation12], 4
      %s165 = int_to_ptr.vmem [resolvable:$true] %s164
      %170 = dma.hbm_to_vmem [thread:$0]  %s23, 3072, %s165, [#allocation11], 128, 128, 8
    $region49: #{yolo_block1_forward.1} parent=1 // pred_fallthru
      _
    // Predicated region
    $region50: #{yolo_block1_forward.1} parent=1 // pred_check
      _
    $region51: #{yolo_block1_forward.1} parent=1 // pred_check_branch
      %172 = sbr.rel (0) target = $region53
    $region52: #{yolo_block1_forward.1} parent=1 // pred_region
      %s174 = ssub.s32 3072, 3072
      %175 = vsyncadd [#allocation14], %s174
      %s176 = sshll.u32 [#allocation13], 4
      %s177 = int_to_ptr.vmem [resolvable:$true] %s176
      %182 = dma.hbm_to_vmem [thread:$0]  %s25, 3072, %s177, [#allocation14], 128, 128, 8
    $region53: #{yolo_block1_forward.1} parent=1 // pred_fallthru
      _
    // Predicated region
    $region54: #{yolo_block1_forward.1} parent=1 // pred_check
      _
    $region55: #{yolo_block1_forward.1} parent=1 // pred_check_branch
      %184 = sbr.rel (0) target = $region57
    $region56: #{yolo_block1_forward.1} parent=1 // pred_region
      %s186 = ssub.s32 1024, 1024
      %187 = vsyncadd [#allocation14], %s186
      %s188 = sshll.u32 [#allocation15], 4
      %s189 = int_to_ptr.vmem [resolvable:$true] %s188
      %194 = dma.hbm_to_vmem [thread:$0]  %s27, 1024, %s189, [#allocation14], 128, 128, 8
    $region57: #{yolo_block1_forward.1} parent=1 // pred_fallthru
      _
    // Predicated region
    $region58: #{yolo_block1_forward.1} parent=1 // pred_check
      _
    $region59: #{yolo_block1_forward.1} parent=1 // pred_check_branch
      %196 = sbr.rel (0) target = $region61
    $region60: #{yolo_block1_forward.1} parent=1 // pred_region
      %s198 = ssub.s32 1024, 1024
      %199 = vsyncadd [#allocation17], %s198
      %s200 = sshll.u32 [#allocation16], 4
      %s201 = int_to_ptr.vmem [resolvable:$true] %s200
      %206 = dma.hbm_to_vmem [thread:$0]  %s29, 1024, %s201, [#allocation17], 128, 128, 8
    $region61: #{yolo_block1_forward.1} parent=1 // pred_fallthru
      _
    // Predicated region
    $region62: #{yolo_block1_forward.1} parent=1 // pred_check
      _
    $region63: #{yolo_block1_forward.1} parent=1 // pred_check_branch
      %208 = sbr.rel (0) target = $region65
    $region64: #{yolo_block1_forward.1} parent=1 // pred_region
      %s210 = ssub.s32 1024, 1024
      %211 = vsyncadd [#allocation17], %s210
      %s212 = sshll.u32 [#allocation18], 4
      %s213 = int_to_ptr.vmem [resolvable:$true] %s212
      %218 = dma.hbm_to_vmem [thread:$0]  %s31, 1024, %s213, [#allocation17], 128, 128, 8
    $region65: #{yolo_block1_forward.1} parent=1 // pred_fallthru
      _
    // Predicated region
    $region66: #{yolo_block1_forward.1} parent=1 // pred_check
      _
    $region67: #{yolo_block1_forward.1} parent=1 // pred_check_branch
      %220 = sbr.rel (0) target = $region69
    $region68: #{yolo_block1_forward.1} parent=1 // pred_region
      _
    $region69: #{yolo_block1_forward.1} parent=1 // pred_fallthru
      _
    // Predicated region
    $region70: #{yolo_block1_forward.1} parent=1 // pred_check
      _
    $region71: #{yolo_block1_forward.1} parent=1 // pred_check_branch
      %222 = sbr.rel (0) target = $region73
    $region72: #{yolo_block1_forward.1} parent=1 // pred_region
      _
    $region73: #{yolo_block1_forward.1} parent=1 // pred_fallthru
      _
    // Predicated region
    $region74: #{yolo_block1_forward.1} parent=1 // pred_check
      _
    $region75: #{yolo_block1_forward.1} parent=1 // pred_check_branch
      %224 = sbr.rel (0) target = $region77
    $region76: #{yolo_block1_forward.1} parent=1 // pred_region
      _
    $region77: #{yolo_block1_forward.1} parent=1 // pred_fallthru
      _
    // Predicated region
    $region78: #{yolo_block1_forward.1} parent=1 // pred_check
      _
    $region79: #{yolo_block1_forward.1} parent=1 // pred_check_branch
      %226 = sbr.rel (0) target = $region81
    $region80: #{yolo_block1_forward.1} parent=1 // pred_region
      %s228 = ssub.s32 16, 16
      %229 = vsyncadd [#allocation20], %s228
      %s231 = sshll.u32 [#allocation19], 4
      %s232 = int_to_ptr.vmem [resolvable:$true] %s231
      %234 = dma.hbm_to_vmem [thread:$0]  %s39, 16, %s232, [#allocation20]
    $region81: #{yolo_block1_forward.1} parent=1 // pred_fallthru
      _
    // Predicated region
    $region82: #{yolo_block1_forward.1} parent=1 // pred_check
      _
    $region83: #{yolo_block1_forward.1} parent=1 // pred_check_branch
      %236 = sbr.rel (0) target = $region85
    $region84: #{yolo_block1_forward.1} parent=1 // pred_region
      %s238 = ssub.s32 16, 16
      %239 = vsyncadd [#allocation20], %s238
      %s241 = sshll.u32 [#allocation21], 4
      %s242 = int_to_ptr.vmem [resolvable:$true] %s241
      %244 = dma.hbm_to_vmem [thread:$0]  %s41, 16, %s242, [#allocation20]
    $region85: #{yolo_block1_forward.1} parent=1 // pred_fallthru
      _
    // Predicated region
    $region86: #{yolo_block1_forward.1} parent=1 // pred_check
      _
    $region87: #{yolo_block1_forward.1} parent=1 // pred_check_branch
      %246 = sbr.rel (0) target = $region89
    $region88: #{yolo_block1_forward.1} parent=1 // pred_region
      %s248 = ssub.s32 16, 16
      %249 = vsyncadd [#allocation23], %s248
      %s251 = sshll.u32 [#allocation22], 4
      %s252 = int_to_ptr.vmem [resolvable:$true] %s251
      %254 = dma.hbm_to_vmem [thread:$0]  %s43, 16, %s252, [#allocation23]
    $region89: #{yolo_block1_forward.1} parent=1 // pred_fallthru
      _
    // Predicated region
    $region90: #{yolo_block1_forward.1} parent=1 // pred_check
      _
    $region91: #{yolo_block1_forward.1} parent=1 // pred_check_branch
      %256 = sbr.rel (0) target = $region93
    $region92: #{yolo_block1_forward.1} parent=1 // pred_region
      %s258 = ssub.s32 16, 16
      %259 = vsyncadd [#allocation23], %s258
      %s261 = sshll.u32 [#allocation24], 4
      %s262 = int_to_ptr.vmem [resolvable:$true] %s261
      %264 = dma.hbm_to_vmem [thread:$0]  %s45, 16, %s262, [#allocation23]
    $region93: #{yolo_block1_forward.1} parent=1 // pred_fallthru
      _
    // Predicated region
    $region94: #{yolo_block1_forward.1} parent=1 // pred_check
      _
    $region95: #{yolo_block1_forward.1} parent=1 // pred_check_branch
      %266 = sbr.rel (0) target = $region97
    $region96: #{yolo_block1_forward.1} parent=1 // pred_region
      %s268 = ssub.s32 16, 16
      %269 = vsyncadd [#allocation26], %s268
      %s271 = sshll.u32 [#allocation25], 4
      %s272 = int_to_ptr.vmem [resolvable:$true] %s271
      %274 = dma.hbm_to_vmem [thread:$0]  %s47, 16, %s272, [#allocation26]
    $region97: #{yolo_block1_forward.1} parent=1 // pred_fallthru
      _
    // Predicated region
    $region98: #{yolo_block1_forward.1} parent=1 // pred_check
      _
    $region99: #{yolo_block1_forward.1} parent=1 // pred_check_branch
      %276 = sbr.rel (0) target = $region101
    $region100: #{yolo_block1_forward.1} parent=1 // pred_region
      %s278 = ssub.s32 16, 16
      %279 = vsyncadd [#allocation26], %s278
      %s281 = sshll.u32 [#allocation27], 4
      %s282 = int_to_ptr.vmem [resolvable:$true] %s281
      %284 = dma.hbm_to_vmem [thread:$0]  %s49, 16, %s282, [#allocation26]
    $region101: #{yolo_block1_forward.1} parent=1 // pred_fallthru
      _
    // Predicated region
    $region102: #{yolo_block1_forward.1} parent=1 // pred_check
      _
    $region103: #{yolo_block1_forward.1} parent=1 // pred_check_branch
      %286 = sbr.rel (0) target = $region105
    $region104: #{yolo_block1_forward.1} parent=1 // pred_region
      %s288 = ssub.s32 16, 16
      %289 = vsyncadd [#allocation29], %s288
      %s291 = sshll.u32 [#allocation28], 4
      %s292 = int_to_ptr.vmem [resolvable:$true] %s291
      %294 = dma.hbm_to_vmem [thread:$0]  %s51, 16, %s292, [#allocation29]
    $region105: #{yolo_block1_forward.1} parent=1 // pred_fallthru
      _
    // Predicated region
    $region106: #{yolo_block1_forward.1} parent=1 // pred_check
      _
    $region107: #{yolo_block1_forward.1} parent=1 // pred_check_branch
      %296 = sbr.rel (0) target = $region109
    $region108: #{yolo_block1_forward.1} parent=1 // pred_region
      %297 = dma.done [#allocation3], 768
    $region109: #{yolo_block1_forward.1} parent=1 // pred_fallthru
      _
    // Predicated region
    $region110: #{yolo_block1_forward.1} parent=1 // pred_check
      _
    $region111: #{yolo_block1_forward.1} parent=1 // pred_check_branch
      %299 = sbr.rel (0) target = $region113
    $region112: #{yolo_block1_forward.1} parent=1 // pred_region
      %300 = dma.done [#allocation5], 384
    $region113: #{yolo_block1_forward.1} parent=1 // pred_fallthru
      _
    // Predicated region
    $region114: #{yolo_block1_forward.1} parent=1 // pred_check
      _
    $region115: #{yolo_block1_forward.1} parent=1 // pred_check_branch
      %302 = sbr.rel (0) target = $region117
    $region116: #{yolo_block1_forward.1} parent=1 // pred_region
      %303 = dma.done [#allocation5], 384
    $region117: #{yolo_block1_forward.1} parent=1 // pred_fallthru
      _
    // Predicated region
    $region118: #{yolo_block1_forward.1} parent=1 // pred_check
      _
    $region119: #{yolo_block1_forward.1} parent=1 // pred_check_branch
      %305 = sbr.rel (0) target = $region121
    $region120: #{yolo_block1_forward.1} parent=1 // pred_region
      %306 = dma.done [#allocation8], 3072
    $region121: #{yolo_block1_forward.1} parent=1 // pred_fallthru
      _
    // Predicated region
    $region122: #{yolo_block1_forward.1} parent=1 // pred_check
      _
    $region123: #{yolo_block1_forward.1} parent=1 // pred_check_branch
      %308 = sbr.rel (0) target = $region125
    $region124: #{yolo_block1_forward.1} parent=1 // pred_region
      %309 = dma.done [#allocation8], 3072
    $region125: #{yolo_block1_forward.1} parent=1 // pred_fallthru
      _
    // Predicated region
    $region126: #{yolo_block1_forward.1} parent=1 // pred_check
      _
    $region127: #{yolo_block1_forward.1} parent=1 // pred_check_branch
      %311 = sbr.rel (0) target = $region129
    $region128: #{yolo_block1_forward.1} parent=1 // pred_region
      %312 = dma.done [#allocation11], 3072
    $region129: #{yolo_block1_forward.1} parent=1 // pred_fallthru
      _
    // Predicated region
    $region130: #{yolo_block1_forward.1} parent=1 // pred_check
      _
    $region131: #{yolo_block1_forward.1} parent=1 // pred_check_branch
      %314 = sbr.rel (0) target = $region133
    $region132: #{yolo_block1_forward.1} parent=1 // pred_region
      %315 = dma.done [#allocation11], 3072
    $region133: #{yolo_block1_forward.1} parent=1 // pred_fallthru
      _
    // Predicated region
    $region134: #{yolo_block1_forward.1} parent=1 // pred_check
      _
    $region135: #{yolo_block1_forward.1} parent=1 // pred_check_branch
      %317 = sbr.rel (0) target = $region137
    $region136: #{yolo_block1_forward.1} parent=1 // pred_region
      %318 = dma.done [#allocation14], 3072
    $region137: #{yolo_block1_forward.1} parent=1 // pred_fallthru
      _
    // Predicated region
    $region138: #{yolo_block1_forward.1} parent=1 // pred_check
      _
    $region139: #{yolo_block1_forward.1} parent=1 // pred_check_branch
      %320 = sbr.rel (0) target = $region141
    $region140: #{yolo_block1_forward.1} parent=1 // pred_region
      %321 = dma.done [#allocation14], 1024
    $region141: #{yolo_block1_forward.1} parent=1 // pred_fallthru
      _
    // Predicated region
    $region142: #{yolo_block1_forward.1} parent=1 // pred_check
      _
    $region143: #{yolo_block1_forward.1} parent=1 // pred_check_branch
      %323 = sbr.rel (0) target = $region145
    $region144: #{yolo_block1_forward.1} parent=1 // pred_region
      %324 = dma.done [#allocation17], 1024
    $region145: #{yolo_block1_forward.1} parent=1 // pred_fallthru
      _
    // Predicated region
    $region146: #{yolo_block1_forward.1} parent=1 // pred_check
      _
    $region147: #{yolo_block1_forward.1} parent=1 // pred_check_branch
      %326 = sbr.rel (0) target = $region149
    $region148: #{yolo_block1_forward.1} parent=1 // pred_region
      %327 = dma.done [#allocation17], 1024
    $region149: #{yolo_block1_forward.1} parent=1 // pred_fallthru
      _
    // Predicated region
    $region150: #{yolo_block1_forward.1} parent=1 // pred_check
      _
    $region151: #{yolo_block1_forward.1} parent=1 // pred_check_branch
      %329 = sbr.rel (0) target = $region153
    $region152: #{yolo_block1_forward.1} parent=1 // pred_region
      %330 = dma.done [#allocation20], 16
    $region153: #{yolo_block1_forward.1} parent=1 // pred_fallthru
      _
    // Predicated region
    $region154: #{yolo_block1_forward.1} parent=1 // pred_check
      _
    $region155: #{yolo_block1_forward.1} parent=1 // pred_check_branch
      %332 = sbr.rel (0) target = $region157
    $region156: #{yolo_block1_forward.1} parent=1 // pred_region
      %333 = dma.done [#allocation20], 16
    $region157: #{yolo_block1_forward.1} parent=1 // pred_fallthru
      _
    // Predicated region
    $region158: #{yolo_block1_forward.1} parent=1 // pred_check
      _
    $region159: #{yolo_block1_forward.1} parent=1 // pred_check_branch
      %335 = sbr.rel (0) target = $region161
    $region160: #{yolo_block1_forward.1} parent=1 // pred_region
      %336 = dma.done [#allocation23], 16
    $region161: #{yolo_block1_forward.1} parent=1 // pred_fallthru
      _
    // Predicated region
    $region162: #{yolo_block1_forward.1} parent=1 // pred_check
      _
    $region163: #{yolo_block1_forward.1} parent=1 // pred_check_branch
      %338 = sbr.rel (0) target = $region165
    $region164: #{yolo_block1_forward.1} parent=1 // pred_region
      %339 = dma.done [#allocation23], 16
    $region165: #{yolo_block1_forward.1} parent=1 // pred_fallthru
      _
    // Predicated region
    $region166: #{yolo_block1_forward.1} parent=1 // pred_check
      _
    $region167: #{yolo_block1_forward.1} parent=1 // pred_check_branch
      %341 = sbr.rel (0) target = $region169
    $region168: #{yolo_block1_forward.1} parent=1 // pred_region
      %342 = dma.done [#allocation26], 16
    $region169: #{yolo_block1_forward.1} parent=1 // pred_fallthru
      _
    // Predicated region
    $region170: #{yolo_block1_forward.1} parent=1 // pred_check
      _
    $region171: #{yolo_block1_forward.1} parent=1 // pred_check_branch
      %344 = sbr.rel (0) target = $region173
    $region172: #{yolo_block1_forward.1} parent=1 // pred_region
      %345 = dma.done [#allocation26], 16
    $region173: #{yolo_block1_forward.1} parent=1 // pred_fallthru
      _
    // Predicated region
    $region174: #{yolo_block1_forward.1} parent=1 // pred_check
      _
    $region175: #{yolo_block1_forward.1} parent=1 // pred_check_branch
      %347 = sbr.rel (0) target = $region177
    $region176: #{yolo_block1_forward.1} parent=1 // pred_region
      %348 = dma.done [#allocation29], 16
    $region177: #{yolo_block1_forward.1} parent=1 // pred_fallthru
      _
    %v349 = vld [vmem:[%s1] sm:$0xff]
    %v350 = vld [vmem:[%s1 + $0x8] sm:$0xff]
    %v351 = vld [vmem:[%s1 + $0x10] sm:$0xff]
    %v352 = vld [vmem:[%s1 + $0x18] sm:$0xff]
    %v353 = vld [vmem:[%s3] sm:$0xff]
    %v354 = vld [vmem:[%s3 + $0x8] sm:$0xff]
    %v355 = vld [vmem:[%s3 + $0x10] sm:$0xff]
    %v356 = vld [vmem:[%s3 + $0x18] sm:$0xff]
    %v357 = vld [vmem:[%s3 + $0x20] sm:$0xff]
    %v358 = vld [vmem:[%s3 + $0x28] sm:$0xff]
    %v359 = vld [vmem:[%s11] sm:$0xff]
    %v360 = vld [vmem:[%s11 + $0x8] sm:$0xff]
    %v361 = vld [vmem:[%s11 + $0x10] sm:$0xff]
    %v362 = vld [vmem:[%s11 + $0x18] sm:$0xff]
    %v363 = vld [vmem:[%s11 + $0x20] sm:$0xff]
    %v364 = vld [vmem:[%s11 + $0x28] sm:$0xff]
    %v365 = vld [vmem:[%s11 + $0x30] sm:$0xff]
    %v366 = vld [vmem:[%s11 + $0x38] sm:$0xff]
    %v367 = vld [vmem:[%s11 + $0x40] sm:$0xff]
    %v368 = vld [vmem:[%s11 + $0x48] sm:$0xff]
    %v369 = vld [vmem:[%s11 + $0x50] sm:$0xff]
    %v370 = vld [vmem:[%s11 + $0x58] sm:$0xff]
    %v371 = vld [vmem:[%s11 + $0x60] sm:$0xff]
    %v372 = vld [vmem:[%s11 + $0x68] sm:$0xff]
    %v373 = vld [vmem:[%s11 + $0x70] sm:$0xff]
    %v374 = vld [vmem:[%s11 + $0x78] sm:$0xff]
    %v375 = vld [vmem:[%s11 + $0x80] sm:$0xff]
    %v376 = vld [vmem:[%s11 + $0x88] sm:$0xff]
    %v377 = vld [vmem:[%s11 + $0x90] sm:$0xff]
    %v378 = vld [vmem:[%s11 + $0x98] sm:$0xff]
    %v379 = vld [vmem:[%s11 + $0xa0] sm:$0xff]
    %v380 = vld [vmem:[%s11 + $0xa8] sm:$0xff]
    %v381 = vld [vmem:[%s11 + $0xb0] sm:$0xff]
    %v382 = vld [vmem:[%s11 + $0xb8] sm:$0xff]
    %vm383 = vcmask 261120
    %v385 = vsel %vm383, %v353, 0
    %v388 = vsel %vm383, %v354, 0
    %390 = vmatprep.subr.mxu0 0.0
    %391 = vmatpush1.msra.mxu0 %v349
    %392 = vmatprep.subr.mxu0 0.0
    %393 = vmatpush1.msra.mxu0 %v350
    %394 = vmatprep.subr.mxu0 0.0
    %395 = vmatpush1.msra.mxu0 %v351
    %396 = vmatprep.subr.mxu0 0.0
    %397 = vmatpush1.msra.mxu0 %v352
    %398 = vmatprep.subr.mxu0 0.0
    %399 = vmatpush1.msra.mxu0 0.0
    %400 = vmatprep.subr.mxu0 0.0
    %401 = vmatpush1.msra.mxu0 0.0
    %402 = vmatprep.subr.mxu0 0.0
    %403 = vmatpush1.msra.mxu0 0.0
    %404 = vmatprep.subr.mxu0 0.0
    %405 = vmatpush1.msra.mxu0 0.0
    %406 = vmatprep.subr.mxu0 0.0
    %407 = vmatpush1.msra.mxu0 0.0
    %408 = vmatprep.subr.mxu0 0.0
    %409 = vmatpush1.msra.mxu0 0.0
    %410 = vmatprep.subr.mxu0 0.0
    %411 = vmatpush1.msra.mxu0 0.0
    %412 = vmatprep.subr.mxu0 0.0
    %413 = vmatpush1.msra.mxu0 0.0
    %414 = vmatprep.subr.mxu0 0.0
    %415 = vmatpush1.msra.mxu0 0.0
    %416 = vmatprep.subr.mxu0 0.0
    %417 = vmatpush1.msra.mxu0 0.0
    %418 = vmatprep.subr.mxu0 0.0
    %419 = vmatpush1.msra.mxu0 0.0
    %420 = vmatprep.subr.mxu0 0.0
    %421 = vmatpush1.msra.mxu0 0.0
    %422 = vmatprep.subr.mxu0 0.0
    %423 = vmatpush1.msra.mxu0 0.0
    %424 = vmatprep.subr.mxu0 0.0
    %425 = vmatpush1.msra.mxu0 0.0
    %426 = vmatprep.subr.mxu0 0.0
    %427 = vmatpush1.msra.mxu0 0.0
    %428 = vmatprep.subr.mxu0 0.0
    %429 = vmatpush1.msra.mxu0 0.0
    %430 = vmatprep.subr.mxu0 0.0
    %431 = vmatpush1.msra.mxu0 0.0
    %432 = vmatprep.subr.mxu0 0.0
    %433 = vmatpush1.msra.mxu0 0.0
    %434 = vmatprep.subr.mxu0 0.0
    %435 = vmatpush1.msra.mxu0 0.0
    %436 = vmatprep.subr.mxu0 0.0
    %437 = vmatpush1.msra.mxu0 0.0
    %438 = vmatprep.subr.mxu0 0.0
    %439 = vmatpush1.msra.mxu0 0.0
    %440 = vmatprep.subr.mxu0 0.0
    %441 = vmatpush1.msra.mxu0 0.0
    %442 = vmatprep.subr.mxu0 0.0
    %443 = vmatpush1.msra.mxu0 0.0
    %444 = vmatprep.subr.mxu0 0.0
    %445 = vmatpush1.msra.mxu0 0.0
    %446 = vmatprep.subr.mxu0 0.0
    %447 = vmatpush1.msra.mxu0 0.0
    %448 = vmatprep.subr.mxu0 0.0
    %449 = vmatpush1.msra.mxu0 0.0
    %450 = vmatprep.subr.mxu0 0.0
    %451 = vmatpush1.msra.mxu0 0.0
    %452 = vmatprep.subr.mxu0 0.0
    %453 = vmatpush1.msra.mxu0 0.0
    %454 = vmatprep.mubr.f32.mxu0 0.0
    %455 = vmatmul.mubr.f32.gmra.mrb[0].mxu0 %v385
    %v456 = vpop.f32.mrb[0].mxu0
    %v457 = vadd.f32 0.0, %v456
    %v458 = vpop.f32.mrb[0].mxu0
    %459 = vmatprep.mubr.f32.mxu0 0.0
    %460 = vmatmul.mubr.f32.gmra.mrb[0].mxu0 %v388
    %v461 = vpop.f32.mrb[0].mxu0
    %v462 = vadd.f32 0.0, %v461
    %v463 = vpop.f32.mrb[0].mxu0
    %464 = vdwg.mxu0
    %v466 = vsel %vm383, %v355, 0
    %v469 = vsel %vm383, %v356, 0
    %471 = vmatprep.subr.mxu0 0.0
    %472 = vmatpush1.msra.mxu0 %v349
    %473 = vmatprep.subr.mxu0 0.0
    %474 = vmatpush1.msra.mxu0 %v350
    %475 = vmatprep.subr.mxu0 0.0
    %476 = vmatpush1.msra.mxu0 %v351
    %477 = vmatprep.subr.mxu0 0.0
    %478 = vmatpush1.msra.mxu0 %v352
    %479 = vmatprep.subr.mxu0 0.0
    %480 = vmatpush1.msra.mxu0 0.0
    %481 = vmatprep.subr.mxu0 0.0
    %482 = vmatpush1.msra.mxu0 0.0
    %483 = vmatprep.subr.mxu0 0.0
    %484 = vmatpush1.msra.mxu0 0.0
    %485 = vmatprep.subr.mxu0 0.0
    %486 = vmatpush1.msra.mxu0 0.0
    %487 = vmatprep.subr.mxu0 0.0
    %488 = vmatpush1.msra.mxu0 0.0
    %489 = vmatprep.subr.mxu0 0.0
    %490 = vmatpush1.msra.mxu0 0.0
    %491 = vmatprep.subr.mxu0 0.0
    %492 = vmatpush1.msra.mxu0 0.0
    %493 = vmatprep.subr.mxu0 0.0
    %494 = vmatpush1.msra.mxu0 0.0
    %495 = vmatprep.subr.mxu0 0.0
    %496 = vmatpush1.msra.mxu0 0.0
    %497 = vmatprep.subr.mxu0 0.0
    %498 = vmatpush1.msra.mxu0 0.0
    %499 = vmatprep.subr.mxu0 0.0
    %500 = vmatpush1.msra.mxu0 0.0
    %501 = vmatprep.subr.mxu0 0.0
    %502 = vmatpush1.msra.mxu0 0.0
    %503 = vmatprep.subr.mxu0 0.0
    %504 = vmatpush1.msra.mxu0 0.0
    %505 = vmatprep.subr.mxu0 0.0
    %506 = vmatpush1.msra.mxu0 0.0
    %507 = vmatprep.subr.mxu0 0.0
    %508 = vmatpush1.msra.mxu0 0.0
    %509 = vmatprep.subr.mxu0 0.0
    %510 = vmatpush1.msra.mxu0 0.0
    %511 = vmatprep.subr.mxu0 0.0
    %512 = vmatpush1.msra.mxu0 0.0
    %513 = vmatprep.subr.mxu0 0.0
    %514 = vmatpush1.msra.mxu0 0.0
    %515 = vmatprep.subr.mxu0 0.0
    %516 = vmatpush1.msra.mxu0 0.0
    %517 = vmatprep.subr.mxu0 0.0
    %518 = vmatpush1.msra.mxu0 0.0
    %519 = vmatprep.subr.mxu0 0.0
    %520 = vmatpush1.msra.mxu0 0.0
    %521 = vmatprep.subr.mxu0 0.0
    %522 = vmatpush1.msra.mxu0 0.0
    %523 = vmatprep.subr.mxu0 0.0
    %524 = vmatpush1.msra.mxu0 0.0
    %525 = vmatprep.subr.mxu0 0.0
    %526 = vmatpush1.msra.mxu0 0.0
    %527 = vmatprep.subr.mxu0 0.0
    %528 = vmatpush1.msra.mxu0 0.0
    %529 = vmatprep.subr.mxu0 0.0
    %530 = vmatpush1.msra.mxu0 0.0
    %531 = vmatprep.subr.mxu0 0.0
    %532 = vmatpush1.msra.mxu0 0.0
    %533 = vmatprep.subr.mxu0 0.0
    %534 = vmatpush1.msra.mxu0 0.0
    %535 = vmatprep.mubr.f32.mxu0 0.0
    %536 = vmatmul.mubr.f32.gmra.mrb[0].mxu0 %v466
    %v537 = vpop.f32.mrb[0].mxu0
    %v538 = vadd.f32 0.0, %v537
    %v539 = vpop.f32.mrb[0].mxu0
    %540 = vmatprep.mubr.f32.mxu0 0.0
    %541 = vmatmul.mubr.f32.gmra.mrb[0].mxu0 %v469
    %v542 = vpop.f32.mrb[0].mxu0
    %v543 = vadd.f32 0.0, %v542
    %v544 = vpop.f32.mrb[0].mxu0
    %545 = vdwg.mxu0
    %vm546 = vcmask 523264
    %v548 = vsel %vm546, %v538, 0
    %v551 = vsel %vm546, %v543, 0
    %553 = vmatprep.subr.mxu0 0.0
    %554 = vmatpush1.msra.mxu0 %v367
    %555 = vmatprep.subr.mxu0 0.0
    %556 = vmatpush1.msra.mxu0 %v368
    %557 = vmatprep.subr.mxu0 0.0
    %558 = vmatpush1.msra.mxu0 %v369
    %559 = vmatprep.subr.mxu0 0.0
    %560 = vmatpush1.msra.mxu0 %v370
    %561 = vmatprep.subr.mxu0 0.0
    %562 = vmatpush1.msra.mxu0 %v371
    %563 = vmatprep.subr.mxu0 0.0
    %564 = vmatpush1.msra.mxu0 %v372
    %565 = vmatprep.subr.mxu0 0.0
    %566 = vmatpush1.msra.mxu0 %v373
    %567 = vmatprep.subr.mxu0 0.0
    %568 = vmatpush1.msra.mxu0 %v374
    %569 = vmatprep.subr.mxu0 0.0
    %570 = vmatpush1.msra.mxu0 0.0
    %571 = vmatprep.subr.mxu0 0.0
    %572 = vmatpush1.msra.mxu0 0.0
    %573 = vmatprep.subr.mxu0 0.0
    %574 = vmatpush1.msra.mxu0 0.0
    %575 = vmatprep.subr.mxu0 0.0
    %576 = vmatpush1.msra.mxu0 0.0
    %577 = vmatprep.subr.mxu0 0.0
    %578 = vmatpush1.msra.mxu0 0.0
    %579 = vmatprep.subr.mxu0 0.0
    %580 = vmatpush1.msra.mxu0 0.0
    %581 = vmatprep.subr.mxu0 0.0
    %582 = vmatpush1.msra.mxu0 0.0
    %583 = vmatprep.subr.mxu0 0.0
    %584 = vmatpush1.msra.mxu0 0.0
    %585 = vmatprep.subr.mxu0 0.0
    %586 = vmatpush1.msra.mxu0 0.0
    %587 = vmatprep.subr.mxu0 0.0
    %588 = vmatpush1.msra.mxu0 0.0
    %589 = vmatprep.subr.mxu0 0.0
    %590 = vmatpush1.msra.mxu0 0.0
    %591 = vmatprep.subr.mxu0 0.0
    %592 = vmatpush1.msra.mxu0 0.0
    %593 = vmatprep.subr.mxu0 0.0
    %594 = vmatpush1.msra.mxu0 0.0
    %595 = vmatprep.subr.mxu0 0.0
    %596 = vmatpush1.msra.mxu0 0.0
    %597 = vmatprep.subr.mxu0 0.0
    %598 = vmatpush1.msra.mxu0 0.0
    %599 = vmatprep.subr.mxu0 0.0
    %600 = vmatpush1.msra.mxu0 0.0
    %601 = vmatprep.subr.mxu0 0.0
    %602 = vmatpush1.msra.mxu0 0.0
    %603 = vmatprep.subr.mxu0 0.0
    %604 = vmatpush1.msra.mxu0 0.0
    %605 = vmatprep.subr.mxu0 0.0
    %606 = vmatpush1.msra.mxu0 0.0
    %607 = vmatprep.subr.mxu0 0.0
    %608 = vmatpush1.msra.mxu0 0.0
    %609 = vmatprep.subr.mxu0 0.0
    %610 = vmatpush1.msra.mxu0 0.0
    %611 = vmatprep.subr.mxu0 0.0
    %612 = vmatpush1.msra.mxu0 0.0
    %613 = vmatprep.subr.mxu0 0.0
    %614 = vmatpush1.msra.mxu0 0.0
    %615 = vmatprep.subr.mxu0 0.0
    %616 = vmatpush1.msra.mxu0 0.0
    %617 = vmatprep.mubr.f32.mxu0 0.0
    %618 = vmatmul.mubr.f32.gmra.mrb[0].mxu0 %v548
    %v619 = vpop.f32.mrb[0].mxu0
    %v620 = vadd.f32 0.0, %v619
    %v621 = vpop.f32.mrb[0].mxu0
    %622 = vmatprep.mubr.f32.mxu0 0.0
    %623 = vmatmul.mubr.f32.gmra.mrb[0].mxu0 %v551
    %v624 = vpop.f32.mrb[0].mxu0
    %v625 = vadd.f32 0.0, %v624
    %v626 = vpop.f32.mrb[0].mxu0
    %627 = vdwg.mxu0
    %v629 = vsel %vm546, %v457, 0
    %v632 = vsel %vm546, %v462, 0
    %634 = vmatprep.subr.mxu0 0.0
    %635 = vmatpush1.msra.mxu0 %v359
    %636 = vmatprep.subr.mxu0 0.0
    %637 = vmatpush1.msra.mxu0 %v360
    %638 = vmatprep.subr.mxu0 0.0
    %639 = vmatpush1.msra.mxu0 %v361
    %640 = vmatprep.subr.mxu0 0.0
    %641 = vmatpush1.msra.mxu0 %v362
    %642 = vmatprep.subr.mxu0 0.0
    %643 = vmatpush1.msra.mxu0 %v363
    %644 = vmatprep.subr.mxu0 0.0
    %645 = vmatpush1.msra.mxu0 %v364
    %646 = vmatprep.subr.mxu0 0.0
    %647 = vmatpush1.msra.mxu0 %v365
    %648 = vmatprep.subr.mxu0 0.0
    %649 = vmatpush1.msra.mxu0 %v366
    %650 = vmatprep.subr.mxu0 0.0
    %651 = vmatpush1.msra.mxu0 0.0
    %652 = vmatprep.subr.mxu0 0.0
    %653 = vmatpush1.msra.mxu0 0.0
    %654 = vmatprep.subr.mxu0 0.0
    %655 = vmatpush1.msra.mxu0 0.0
    %656 = vmatprep.subr.mxu0 0.0
    %657 = vmatpush1.msra.mxu0 0.0
    %658 = vmatprep.subr.mxu0 0.0
    %659 = vmatpush1.msra.mxu0 0.0
    %660 = vmatprep.subr.mxu0 0.0
    %661 = vmatpush1.msra.mxu0 0.0
    %662 = vmatprep.subr.mxu0 0.0
    %663 = vmatpush1.msra.mxu0 0.0
    %664 = vmatprep.subr.mxu0 0.0
    %665 = vmatpush1.msra.mxu0 0.0
    %666 = vmatprep.subr.mxu0 0.0
    %667 = vmatpush1.msra.mxu0 0.0
    %668 = vmatprep.subr.mxu0 0.0
    %669 = vmatpush1.msra.mxu0 0.0
    %670 = vmatprep.subr.mxu0 0.0
    %671 = vmatpush1.msra.mxu0 0.0
    %672 = vmatprep.subr.mxu0 0.0
    %673 = vmatpush1.msra.mxu0 0.0
    %674 = vmatprep.subr.mxu0 0.0
    %675 = vmatpush1.msra.mxu0 0.0
    %676 = vmatprep.subr.mxu0 0.0
    %677 = vmatpush1.msra.mxu0 0.0
    %678 = vmatprep.subr.mxu0 0.0
    %679 = vmatpush1.msra.mxu0 0.0
    %680 = vmatprep.subr.mxu0 0.0
    %681 = vmatpush1.msra.mxu0 0.0
    %682 = vmatprep.subr.mxu0 0.0
    %683 = vmatpush1.msra.mxu0 0.0
    %684 = vmatprep.subr.mxu0 0.0
    %685 = vmatpush1.msra.mxu0 0.0
    %686 = vmatprep.subr.mxu0 0.0
    %687 = vmatpush1.msra.mxu0 0.0
    %688 = vmatprep.subr.mxu0 0.0
    %689 = vmatpush1.msra.mxu0 0.0
    %690 = vmatprep.subr.mxu0 0.0
    %691 = vmatpush1.msra.mxu0 0.0
    %692 = vmatprep.subr.mxu0 0.0
    %693 = vmatpush1.msra.mxu0 0.0
    %694 = vmatprep.subr.mxu0 0.0
    %695 = vmatpush1.msra.mxu0 0.0
    %696 = vmatprep.subr.mxu0 0.0
    %697 = vmatpush1.msra.mxu0 0.0
    %698 = vmatprep.mubr.f32.mxu0 0.0
    %699 = vmatmul.mubr.f32.gmra.mrb[0].mxu0 %v629
    %v700 = vpop.f32.mrb[0].mxu0
    %v701 = vadd.f32 %v620, %v700
    %v702 = vpop.f32.mrb[0].mxu0
    %703 = vmatprep.mubr.f32.mxu0 0.0
    %704 = vmatmul.mubr.f32.gmra.mrb[0].mxu0 %v632
    %v705 = vpop.f32.mrb[0].mxu0
    %v706 = vadd.f32 %v625, %v705
    %v707 = vpop.f32.mrb[0].mxu0
    %708 = vdwg.mxu0
    %v710 = vsel %vm383, %v357, 0
    %v713 = vsel %vm383, %v358, 0
    %715 = vmatprep.subr.mxu0 0.0
    %716 = vmatpush1.msra.mxu0 %v349
    %717 = vmatprep.subr.mxu0 0.0
    %718 = vmatpush1.msra.mxu0 %v350
    %719 = vmatprep.subr.mxu0 0.0
    %720 = vmatpush1.msra.mxu0 %v351
    %721 = vmatprep.subr.mxu0 0.0
    %722 = vmatpush1.msra.mxu0 %v352
    %723 = vmatprep.subr.mxu0 0.0
    %724 = vmatpush1.msra.mxu0 0.0
    %725 = vmatprep.subr.mxu0 0.0
    %726 = vmatpush1.msra.mxu0 0.0
    %727 = vmatprep.subr.mxu0 0.0
    %728 = vmatpush1.msra.mxu0 0.0
    %729 = vmatprep.subr.mxu0 0.0
    %730 = vmatpush1.msra.mxu0 0.0
    %731 = vmatprep.subr.mxu0 0.0
    %732 = vmatpush1.msra.mxu0 0.0
    %733 = vmatprep.subr.mxu0 0.0
    %734 = vmatpush1.msra.mxu0 0.0
    %735 = vmatprep.subr.mxu0 0.0
    %736 = vmatpush1.msra.mxu0 0.0
    %737 = vmatprep.subr.mxu0 0.0
    %738 = vmatpush1.msra.mxu0 0.0
    %739 = vmatprep.subr.mxu0 0.0
    %740 = vmatpush1.msra.mxu0 0.0
    %741 = vmatprep.subr.mxu0 0.0
    %742 = vmatpush1.msra.mxu0 0.0
    %743 = vmatprep.subr.mxu0 0.0
    %744 = vmatpush1.msra.mxu0 0.0
    %745 = vmatprep.subr.mxu0 0.0
    %746 = vmatpush1.msra.mxu0 0.0
    %747 = vmatprep.subr.mxu0 0.0
    %748 = vmatpush1.msra.mxu0 0.0
    %749 = vmatprep.subr.mxu0 0.0
    %750 = vmatpush1.msra.mxu0 0.0
    %751 = vmatprep.subr.mxu0 0.0
    %752 = vmatpush1.msra.mxu0 0.0
    %753 = vmatprep.subr.mxu0 0.0
    %754 = vmatpush1.msra.mxu0 0.0
    %755 = vmatprep.subr.mxu0 0.0
    %756 = vmatpush1.msra.mxu0 0.0
    %757 = vmatprep.subr.mxu0 0.0
    %758 = vmatpush1.msra.mxu0 0.0
    %759 = vmatprep.subr.mxu0 0.0
    %760 = vmatpush1.msra.mxu0 0.0
    %761 = vmatprep.subr.mxu0 0.0
    %762 = vmatpush1.msra.mxu0 0.0
    %763 = vmatprep.subr.mxu0 0.0
    %764 = vmatpush1.msra.mxu0 0.0
    %765 = vmatprep.subr.mxu0 0.0
    %766 = vmatpush1.msra.mxu0 0.0
    %767 = vmatprep.subr.mxu0 0.0
    %768 = vmatpush1.msra.mxu0 0.0
    %769 = vmatprep.subr.mxu0 0.0
    %770 = vmatpush1.msra.mxu0 0.0
    %771 = vmatprep.subr.mxu0 0.0
    %772 = vmatpush1.msra.mxu0 0.0
    %773 = vmatprep.subr.mxu0 0.0
    %774 = vmatpush1.msra.mxu0 0.0
    %775 = vmatprep.subr.mxu0 0.0
    %776 = vmatpush1.msra.mxu0 0.0
    %777 = vmatprep.subr.mxu0 0.0
    %778 = vmatpush1.msra.mxu0 0.0
    %779 = vmatprep.mubr.f32.mxu0 0.0
    %780 = vmatmul.mubr.f32.gmra.mrb[0].mxu0 %v710
    %v781 = vpop.f32.mrb[0].mxu0
    %v782 = vadd.f32 0.0, %v781
    %v783 = vpop.f32.mrb[0].mxu0
    %784 = vmatprep.mubr.f32.mxu0 0.0
    %785 = vmatmul.mubr.f32.gmra.mrb[0].mxu0 %v713
    %v786 = vpop.f32.mrb[0].mxu0
    %v787 = vadd.f32 0.0, %v786
    %v788 = vpop.f32.mrb[0].mxu0
    %789 = vdwg.mxu0
    %v791 = vsel %vm546, %v782, 0
    %v794 = vsel %vm546, %v787, 0
    %796 = vmatprep.subr.mxu0 0.0
    %797 = vmatpush1.msra.mxu0 %v375
    %798 = vmatprep.subr.mxu0 0.0
    %799 = vmatpush1.msra.mxu0 %v376
    %800 = vmatprep.subr.mxu0 0.0
    %801 = vmatpush1.msra.mxu0 %v377
    %802 = vmatprep.subr.mxu0 0.0
    %803 = vmatpush1.msra.mxu0 %v378
    %804 = vmatprep.subr.mxu0 0.0
    %805 = vmatpush1.msra.mxu0 %v379
    %806 = vmatprep.subr.mxu0 0.0
    %807 = vmatpush1.msra.mxu0 %v380
    %808 = vmatprep.subr.mxu0 0.0
    %809 = vmatpush1.msra.mxu0 %v381
    %810 = vmatprep.subr.mxu0 0.0
    %811 = vmatpush1.msra.mxu0 %v382
    %812 = vmatprep.subr.mxu0 0.0
    %813 = vmatpush1.msra.mxu0 0.0
    %814 = vmatprep.subr.mxu0 0.0
    %815 = vmatpush1.msra.mxu0 0.0
    %816 = vmatprep.subr.mxu0 0.0
    %817 = vmatpush1.msra.mxu0 0.0
    %818 = vmatprep.subr.mxu0 0.0
    %819 = vmatpush1.msra.mxu0 0.0
    %820 = vmatprep.subr.mxu0 0.0
    %821 = vmatpush1.msra.mxu0 0.0
    %822 = vmatprep.subr.mxu0 0.0
    %823 = vmatpush1.msra.mxu0 0.0
    %824 = vmatprep.subr.mxu0 0.0
    %825 = vmatpush1.msra.mxu0 0.0
    %826 = vmatprep.subr.mxu0 0.0
    %827 = vmatpush1.msra.mxu0 0.0
    %828 = vmatprep.subr.mxu0 0.0
    %829 = vmatpush1.msra.mxu0 0.0
    %830 = vmatprep.subr.mxu0 0.0
    %831 = vmatpush1.msra.mxu0 0.0
    %832 = vmatprep.subr.mxu0 0.0
    %833 = vmatpush1.msra.mxu0 0.0
    %834 = vmatprep.subr.mxu0 0.0
    %835 = vmatpush1.msra.mxu0 0.0
    %836 = vmatprep.subr.mxu0 0.0
    %837 = vmatpush1.msra.mxu0 0.0
    %838 = vmatprep.subr.mxu0 0.0
    %839 = vmatpush1.msra.mxu0 0.0
    %840 = vmatprep.subr.mxu0 0.0
    %841 = vmatpush1.msra.mxu0 0.0
    %842 = vmatprep.subr.mxu0 0.0
    %843 = vmatpush1.msra.mxu0 0.0
    %844 = vmatprep.subr.mxu0 0.0
    %845 = vmatpush1.msra.mxu0 0.0
    %846 = vmatprep.subr.mxu0 0.0
    %847 = vmatpush1.msra.mxu0 0.0
    %848 = vmatprep.subr.mxu0 0.0
    %849 = vmatpush1.msra.mxu0 0.0
    %850 = vmatprep.subr.mxu0 0.0
    %851 = vmatpush1.msra.mxu0 0.0
    %852 = vmatprep.subr.mxu0 0.0
    %853 = vmatpush1.msra.mxu0 0.0
    %854 = vmatprep.subr.mxu0 0.0
    %855 = vmatpush1.msra.mxu0 0.0
    %856 = vmatprep.subr.mxu0 0.0
    %857 = vmatpush1.msra.mxu0 0.0
    %858 = vmatprep.subr.mxu0 0.0
    %859 = vmatpush1.msra.mxu0 0.0
    %860 = vmatprep.mubr.f32.mxu0 0.0
    %861 = vmatmul.mubr.f32.gmra.mrb[0].mxu0 %v791
    %v862 = vpop.f32.mrb[0].mxu0
    %v863 = vadd.f32 0.0, %v862
    %v864 = vpop.f32.mrb[0].mxu0
    %865 = vmatprep.mubr.f32.mxu0 0.0
    %866 = vmatmul.mubr.f32.gmra.mrb[0].mxu0 %v794
    %v867 = vpop.f32.mrb[0].mxu0
    %v868 = vadd.f32 0.0, %v867
    %v869 = vpop.f32.mrb[0].mxu0
    %870 = vdwg.mxu0
    %v871 = vadd.f32 %v701, %v863
    %v872 = vadd.f32 %v706, %v868
    %v873 = vld [vmem:[%s33] sm:$0x1]
    %v875 = vlaneseq
    %v876 = vshrl.u32 %v875, 7
    %v877 = vsub.s32 0, %v876
    %v878 = vrot.slane %v873, %v877
    %v880 = vadd.f32 %v871, %v878
    %v881 = vadd.f32 %v872, %v878
    %v882 = vxor.u32 %v880, 2147483648
    %v883 = vxor.u32 %v881, 2147483648
    %v884 = vmul.f32 %v882, 1.442695
    %v885 = vpow.pop %v884
    %v886 = vmul.f32 %v883, 1.442695
    %v887 = vpow.pop %v886
    %v888 = vadd.f32 %v885, 1.0
    %v889 = vadd.f32 %v887, 1.0
    %v890 = vrcp.pop %v888
    %v891 = vmul.f32 1.0, %v890
    %v892 = vrcp.pop %v889
    %v893 = vmul.f32 1.0, %v892
    %v894 = vmul.f32 %v880, %v891
    %v895 = vmul.f32 %v881, %v893
    %v896 = vld [vmem:[#allocation2] sm:$0xff]
    %v897 = vld [vmem:[#allocation2 + $0x8] sm:$0xff]
    %v898 = vld [vmem:[#allocation2 + $0x10] sm:$0xff]
    %v899 = vld [vmem:[#allocation2 + $0x18] sm:$0xff]
    %v900 = vld [vmem:[#allocation2 + $0x20] sm:$0xff]
    %v901 = vld [vmem:[#allocation2 + $0x28] sm:$0xff]
    %v902 = vld [vmem:[%s13] sm:$0xff]
    %v903 = vld [vmem:[%s13 + $0x8] sm:$0xff]
    %v904 = vld [vmem:[%s13 + $0x10] sm:$0xff]
    %v905 = vld [vmem:[%s13 + $0x18] sm:$0xff]
    %v906 = vld [vmem:[%s13 + $0x20] sm:$0xff]
    %v907 = vld [vmem:[%s13 + $0x28] sm:$0xff]
    %v908 = vld [vmem:[%s13 + $0x30] sm:$0xff]
    %v909 = vld [vmem:[%s13 + $0x38] sm:$0xff]
    %v910 = vld [vmem:[%s13 + $0x40] sm:$0xff]
    %v911 = vld [vmem:[%s13 + $0x48] sm:$0xff]
    %v912 = vld [vmem:[%s13 + $0x50] sm:$0xff]
    %v913 = vld [vmem:[%s13 + $0x58] sm:$0xff]
    %v914 = vld [vmem:[%s13 + $0x60] sm:$0xff]
    %v915 = vld [vmem:[%s13 + $0x68] sm:$0xff]
    %v916 = vld [vmem:[%s13 + $0x70] sm:$0xff]
    %v917 = vld [vmem:[%s13 + $0x78] sm:$0xff]
    %v918 = vld [vmem:[%s13 + $0x80] sm:$0xff]
    %v919 = vld [vmem:[%s13 + $0x88] sm:$0xff]
    %v920 = vld [vmem:[%s13 + $0x90] sm:$0xff]
    %v921 = vld [vmem:[%s13 + $0x98] sm:$0xff]
    %v922 = vld [vmem:[%s13 + $0xa0] sm:$0xff]
    %v923 = vld [vmem:[%s13 + $0xa8] sm:$0xff]
    %v924 = vld [vmem:[%s13 + $0xb0] sm:$0xff]
    %v925 = vld [vmem:[%s13 + $0xb8] sm:$0xff]
    %vm926 = vcmask 130048
    %v928 = vsel %vm926, %v896, 0
    %v931 = vsel %vm926, %v897, 0
    %933 = vmatprep.subr.mxu0 0.0
    %934 = vmatpush1.msra.mxu0 %v894
    %935 = vmatprep.subr.mxu0 0.0
    %936 = vmatpush1.msra.mxu0 %v895
    %937 = vmatprep.subr.mxu0 0.0
    %938 = vmatpush1.msra.mxu0 0.0
    %939 = vmatprep.subr.mxu0 0.0
    %940 = vmatpush1.msra.mxu0 0.0
    %941 = vmatprep.subr.mxu0 0.0
    %942 = vmatpush1.msra.mxu0 0.0
    %943 = vmatprep.subr.mxu0 0.0
    %944 = vmatpush1.msra.mxu0 0.0
    %945 = vmatprep.subr.mxu0 0.0
    %946 = vmatpush1.msra.mxu0 0.0
    %947 = vmatprep.subr.mxu0 0.0
    %948 = vmatpush1.msra.mxu0 0.0
    %949 = vmatprep.subr.mxu0 0.0
    %950 = vmatpush1.msra.mxu0 0.0
    %951 = vmatprep.subr.mxu0 0.0
    %952 = vmatpush1.msra.mxu0 0.0
    %953 = vmatprep.subr.mxu0 0.0
    %954 = vmatpush1.msra.mxu0 0.0
    %955 = vmatprep.subr.mxu0 0.0
    %956 = vmatpush1.msra.mxu0 0.0
    %957 = vmatprep.subr.mxu0 0.0
    %958 = vmatpush1.msra.mxu0 0.0
    %959 = vmatprep.subr.mxu0 0.0
    %960 = vmatpush1.msra.mxu0 0.0
    %961 = vmatprep.subr.mxu0 0.0
    %962 = vmatpush1.msra.mxu0 0.0
    %963 = vmatprep.subr.mxu0 0.0
    %964 = vmatpush1.msra.mxu0 0.0
    %965 = vmatprep.subr.mxu0 0.0
    %966 = vmatpush1.msra.mxu0 0.0
    %967 = vmatprep.subr.mxu0 0.0
    %968 = vmatpush1.msra.mxu0 0.0
    %969 = vmatprep.subr.mxu0 0.0
    %970 = vmatpush1.msra.mxu0 0.0
    %971 = vmatprep.subr.mxu0 0.0
    %972 = vmatpush1.msra.mxu0 0.0
    %973 = vmatprep.subr.mxu0 0.0
    %974 = vmatpush1.msra.mxu0 0.0
    %975 = vmatprep.subr.mxu0 0.0
    %976 = vmatpush1.msra.mxu0 0.0
    %977 = vmatprep.subr.mxu0 0.0
    %978 = vmatpush1.msra.mxu0 0.0
    %979 = vmatprep.subr.mxu0 0.0
    %980 = vmatpush1.msra.mxu0 0.0
    %981 = vmatprep.subr.mxu0 0.0
    %982 = vmatpush1.msra.mxu0 0.0
    %983 = vmatprep.subr.mxu0 0.0
    %984 = vmatpush1.msra.mxu0 0.0
    %985 = vmatprep.subr.mxu0 0.0
    %986 = vmatpush1.msra.mxu0 0.0
    %987 = vmatprep.subr.mxu0 0.0
    %988 = vmatpush1.msra.mxu0 0.0
    %989 = vmatprep.subr.mxu0 0.0
    %990 = vmatpush1.msra.mxu0 0.0
    %991 = vmatprep.subr.mxu0 0.0
    %992 = vmatpush1.msra.mxu0 0.0
    %993 = vmatprep.subr.mxu0 0.0
    %994 = vmatpush1.msra.mxu0 0.0
    %995 = vmatprep.subr.mxu0 0.0
    %996 = vmatpush1.msra.mxu0 0.0
    %997 = vmatprep.mubr.f32.mxu0 0.0
    %998 = vmatmul.mubr.f32.gmra.mrb[0].mxu0 %v928
    %v999 = vpop.f32.mrb[0].mxu0
    %v1000 = vadd.f32 0.0, %v999
    %v1001 = vpop.f32.mrb[0].mxu0
    %1002 = vmatprep.mubr.f32.mxu0 0.0
    %1003 = vmatmul.mubr.f32.gmra.mrb[0].mxu0 %v931
    %v1004 = vpop.f32.mrb[0].mxu0
    %v1005 = vadd.f32 0.0, %v1004
    %v1006 = vpop.f32.mrb[0].mxu0
    %1007 = vdwg.mxu0
    %v1009 = vsel %vm926, %v898, 0
    %v1012 = vsel %vm926, %v899, 0
    %1014 = vmatprep.subr.mxu0 0.0
    %1015 = vmatpush1.msra.mxu0 %v894
    %1016 = vmatprep.subr.mxu0 0.0
    %1017 = vmatpush1.msra.mxu0 %v895
    %1018 = vmatprep.subr.mxu0 0.0
    %1019 = vmatpush1.msra.mxu0 0.0
    %1020 = vmatprep.subr.mxu0 0.0
    %1021 = vmatpush1.msra.mxu0 0.0
    %1022 = vmatprep.subr.mxu0 0.0
    %1023 = vmatpush1.msra.mxu0 0.0
    %1024 = vmatprep.subr.mxu0 0.0
    %1025 = vmatpush1.msra.mxu0 0.0
    %1026 = vmatprep.subr.mxu0 0.0
    %1027 = vmatpush1.msra.mxu0 0.0
    %1028 = vmatprep.subr.mxu0 0.0
    %1029 = vmatpush1.msra.mxu0 0.0
    %1030 = vmatprep.subr.mxu0 0.0
    %1031 = vmatpush1.msra.mxu0 0.0
    %1032 = vmatprep.subr.mxu0 0.0
    %1033 = vmatpush1.msra.mxu0 0.0
    %1034 = vmatprep.subr.mxu0 0.0
    %1035 = vmatpush1.msra.mxu0 0.0
    %1036 = vmatprep.subr.mxu0 0.0
    %1037 = vmatpush1.msra.mxu0 0.0
    %1038 = vmatprep.subr.mxu0 0.0
    %1039 = vmatpush1.msra.mxu0 0.0
    %1040 = vmatprep.subr.mxu0 0.0
    %1041 = vmatpush1.msra.mxu0 0.0
    %1042 = vmatprep.subr.mxu0 0.0
    %1043 = vmatpush1.msra.mxu0 0.0
    %1044 = vmatprep.subr.mxu0 0.0
    %1045 = vmatpush1.msra.mxu0 0.0
    %1046 = vmatprep.subr.mxu0 0.0
    %1047 = vmatpush1.msra.mxu0 0.0
    %1048 = vmatprep.subr.mxu0 0.0
    %1049 = vmatpush1.msra.mxu0 0.0
    %1050 = vmatprep.subr.mxu0 0.0
    %1051 = vmatpush1.msra.mxu0 0.0
    %1052 = vmatprep.subr.mxu0 0.0
    %1053 = vmatpush1.msra.mxu0 0.0
    %1054 = vmatprep.subr.mxu0 0.0
    %1055 = vmatpush1.msra.mxu0 0.0
    %1056 = vmatprep.subr.mxu0 0.0
    %1057 = vmatpush1.msra.mxu0 0.0
    %1058 = vmatprep.subr.mxu0 0.0
    %1059 = vmatpush1.msra.mxu0 0.0
    %1060 = vmatprep.subr.mxu0 0.0
    %1061 = vmatpush1.msra.mxu0 0.0
    %1062 = vmatprep.subr.mxu0 0.0
    %1063 = vmatpush1.msra.mxu0 0.0
    %1064 = vmatprep.subr.mxu0 0.0
    %1065 = vmatpush1.msra.mxu0 0.0
    %1066 = vmatprep.subr.mxu0 0.0
    %1067 = vmatpush1.msra.mxu0 0.0
    %1068 = vmatprep.subr.mxu0 0.0
    %1069 = vmatpush1.msra.mxu0 0.0
    %1070 = vmatprep.subr.mxu0 0.0
    %1071 = vmatpush1.msra.mxu0 0.0
    %1072 = vmatprep.subr.mxu0 0.0
    %1073 = vmatpush1.msra.mxu0 0.0
    %1074 = vmatprep.subr.mxu0 0.0
    %1075 = vmatpush1.msra.mxu0 0.0
    %1076 = vmatprep.subr.mxu0 0.0
    %1077 = vmatpush1.msra.mxu0 0.0
    %1078 = vmatprep.mubr.f32.mxu0 0.0
    %1079 = vmatmul.mubr.f32.gmra.mrb[0].mxu0 %v1009
    %v1080 = vpop.f32.mrb[0].mxu0
    %v1081 = vadd.f32 0.0, %v1080
    %v1082 = vpop.f32.mrb[0].mxu0
    %1083 = vmatprep.mubr.f32.mxu0 0.0
    %1084 = vmatmul.mubr.f32.gmra.mrb[0].mxu0 %v1012
    %v1085 = vpop.f32.mrb[0].mxu0
    %v1086 = vadd.f32 0.0, %v1085
    %v1087 = vpop.f32.mrb[0].mxu0
    %1088 = vdwg.mxu0
    %v1090 = vsel %vm546, %v1081, 0
    %v1093 = vsel %vm546, %v1086, 0
    %1095 = vmatprep.subr.mxu0 0.0
    %1096 = vmatpush1.msra.mxu0 %v910
    %1097 = vmatprep.subr.mxu0 0.0
    %1098 = vmatpush1.msra.mxu0 %v911
    %1099 = vmatprep.subr.mxu0 0.0
    %1100 = vmatpush1.msra.mxu0 %v912
    %1101 = vmatprep.subr.mxu0 0.0
    %1102 = vmatpush1.msra.mxu0 %v913
    %1103 = vmatprep.subr.mxu0 0.0
    %1104 = vmatpush1.msra.mxu0 %v914
    %1105 = vmatprep.subr.mxu0 0.0
    %1106 = vmatpush1.msra.mxu0 %v915
    %1107 = vmatprep.subr.mxu0 0.0
    %1108 = vmatpush1.msra.mxu0 %v916
    %1109 = vmatprep.subr.mxu0 0.0
    %1110 = vmatpush1.msra.mxu0 %v917
    %1111 = vmatprep.subr.mxu0 0.0
    %1112 = vmatpush1.msra.mxu0 0.0
    %1113 = vmatprep.subr.mxu0 0.0
    %1114 = vmatpush1.msra.mxu0 0.0
    %1115 = vmatprep.subr.mxu0 0.0
    %1116 = vmatpush1.msra.mxu0 0.0
    %1117 = vmatprep.subr.mxu0 0.0
    %1118 = vmatpush1.msra.mxu0 0.0
    %1119 = vmatprep.subr.mxu0 0.0
    %1120 = vmatpush1.msra.mxu0 0.0
    %1121 = vmatprep.subr.mxu0 0.0
    %1122 = vmatpush1.msra.mxu0 0.0
    %1123 = vmatprep.subr.mxu0 0.0
    %1124 = vmatpush1.msra.mxu0 0.0
    %1125 = vmatprep.subr.mxu0 0.0
    %1126 = vmatpush1.msra.mxu0 0.0
    %1127 = vmatprep.subr.mxu0 0.0
    %1128 = vmatpush1.msra.mxu0 0.0
    %1129 = vmatprep.subr.mxu0 0.0
    %1130 = vmatpush1.msra.mxu0 0.0
    %1131 = vmatprep.subr.mxu0 0.0
    %1132 = vmatpush1.msra.mxu0 0.0
    %1133 = vmatprep.subr.mxu0 0.0
    %1134 = vmatpush1.msra.mxu0 0.0
    %1135 = vmatprep.subr.mxu0 0.0
    %1136 = vmatpush1.msra.mxu0 0.0
    %1137 = vmatprep.subr.mxu0 0.0
    %1138 = vmatpush1.msra.mxu0 0.0
    %1139 = vmatprep.subr.mxu0 0.0
    %1140 = vmatpush1.msra.mxu0 0.0
    %1141 = vmatprep.subr.mxu0 0.0
    %1142 = vmatpush1.msra.mxu0 0.0
    %1143 = vmatprep.subr.mxu0 0.0
    %1144 = vmatpush1.msra.mxu0 0.0
    %1145 = vmatprep.subr.mxu0 0.0
    %1146 = vmatpush1.msra.mxu0 0.0
    %1147 = vmatprep.subr.mxu0 0.0
    %1148 = vmatpush1.msra.mxu0 0.0
    %1149 = vmatprep.subr.mxu0 0.0
    %1150 = vmatpush1.msra.mxu0 0.0
    %1151 = vmatprep.subr.mxu0 0.0
    %1152 = vmatpush1.msra.mxu0 0.0
    %1153 = vmatprep.subr.mxu0 0.0
    %1154 = vmatpush1.msra.mxu0 0.0
    %1155 = vmatprep.subr.mxu0 0.0
    %1156 = vmatpush1.msra.mxu0 0.0
    %1157 = vmatprep.subr.mxu0 0.0
    %1158 = vmatpush1.msra.mxu0 0.0
    %1159 = vmatprep.mubr.f32.mxu0 0.0
    %1160 = vmatmul.mubr.f32.gmra.mrb[0].mxu0 %v1090
    %v1161 = vpop.f32.mrb[0].mxu0
    %v1162 = vadd.f32 0.0, %v1161
    %v1163 = vpop.f32.mrb[0].mxu0
    %1164 = vmatprep.mubr.f32.mxu0 0.0
    %1165 = vmatmul.mubr.f32.gmra.mrb[0].mxu0 %v1093
    %v1166 = vpop.f32.mrb[0].mxu0
    %v1167 = vadd.f32 0.0, %v1166
    %v1168 = vpop.f32.mrb[0].mxu0
    %1169 = vdwg.mxu0
    %v1171 = vsel %vm546, %v1000, 0
    %v1174 = vsel %vm546, %v1005, 0
    %1176 = vmatprep.subr.mxu0 0.0
    %1177 = vmatpush1.msra.mxu0 %v902
    %1178 = vmatprep.subr.mxu0 0.0
    %1179 = vmatpush1.msra.mxu0 %v903
    %1180 = vmatprep.subr.mxu0 0.0
    %1181 = vmatpush1.msra.mxu0 %v904
    %1182 = vmatprep.subr.mxu0 0.0
    %1183 = vmatpush1.msra.mxu0 %v905
    %1184 = vmatprep.subr.mxu0 0.0
    %1185 = vmatpush1.msra.mxu0 %v906
    %1186 = vmatprep.subr.mxu0 0.0
    %1187 = vmatpush1.msra.mxu0 %v907
    %1188 = vmatprep.subr.mxu0 0.0
    %1189 = vmatpush1.msra.mxu0 %v908
    %1190 = vmatprep.subr.mxu0 0.0
    %1191 = vmatpush1.msra.mxu0 %v909
    %1192 = vmatprep.subr.mxu0 0.0
    %1193 = vmatpush1.msra.mxu0 0.0
    %1194 = vmatprep.subr.mxu0 0.0
    %1195 = vmatpush1.msra.mxu0 0.0
    %1196 = vmatprep.subr.mxu0 0.0
    %1197 = vmatpush1.msra.mxu0 0.0
    %1198 = vmatprep.subr.mxu0 0.0
    %1199 = vmatpush1.msra.mxu0 0.0
    %1200 = vmatprep.subr.mxu0 0.0
    %1201 = vmatpush1.msra.mxu0 0.0
    %1202 = vmatprep.subr.mxu0 0.0
    %1203 = vmatpush1.msra.mxu0 0.0
    %1204 = vmatprep.subr.mxu0 0.0
    %1205 = vmatpush1.msra.mxu0 0.0
    %1206 = vmatprep.subr.mxu0 0.0
    %1207 = vmatpush1.msra.mxu0 0.0
    %1208 = vmatprep.subr.mxu0 0.0
    %1209 = vmatpush1.msra.mxu0 0.0
    %1210 = vmatprep.subr.mxu0 0.0
    %1211 = vmatpush1.msra.mxu0 0.0
    %1212 = vmatprep.subr.mxu0 0.0
    %1213 = vmatpush1.msra.mxu0 0.0
    %1214 = vmatprep.subr.mxu0 0.0
    %1215 = vmatpush1.msra.mxu0 0.0
    %1216 = vmatprep.subr.mxu0 0.0
    %1217 = vmatpush1.msra.mxu0 0.0
    %1218 = vmatprep.subr.mxu0 0.0
    %1219 = vmatpush1.msra.mxu0 0.0
    %1220 = vmatprep.subr.mxu0 0.0
    %1221 = vmatpush1.msra.mxu0 0.0
    %1222 = vmatprep.subr.mxu0 0.0
    %1223 = vmatpush1.msra.mxu0 0.0
    %1224 = vmatprep.subr.mxu0 0.0
    %1225 = vmatpush1.msra.mxu0 0.0
    %1226 = vmatprep.subr.mxu0 0.0
    %1227 = vmatpush1.msra.mxu0 0.0
    %1228 = vmatprep.subr.mxu0 0.0
    %1229 = vmatpush1.msra.mxu0 0.0
    %1230 = vmatprep.subr.mxu0 0.0
    %1231 = vmatpush1.msra.mxu0 0.0
    %1232 = vmatprep.subr.mxu0 0.0
    %1233 = vmatpush1.msra.mxu0 0.0
    %1234 = vmatprep.subr.mxu0 0.0
    %1235 = vmatpush1.msra.mxu0 0.0
    %1236 = vmatprep.subr.mxu0 0.0
    %1237 = vmatpush1.msra.mxu0 0.0
    %1238 = vmatprep.subr.mxu0 0.0
    %1239 = vmatpush1.msra.mxu0 0.0
    %1240 = vmatprep.mubr.f32.mxu0 0.0
    %1241 = vmatmul.mubr.f32.gmra.mrb[0].mxu0 %v1171
    %v1242 = vpop.f32.mrb[0].mxu0
    %v1243 = vadd.f32 %v1162, %v1242
    %v1244 = vpop.f32.mrb[0].mxu0
    %1245 = vmatprep.mubr.f32.mxu0 0.0
    %1246 = vmatmul.mubr.f32.gmra.mrb[0].mxu0 %v1174
    %v1247 = vpop.f32.mrb[0].mxu0
    %v1248 = vadd.f32 %v1167, %v1247
    %v1249 = vpop.f32.mrb[0].mxu0
    %1250 = vdwg.mxu0
    %v1252 = vsel %vm926, %v900, 0
    %v1255 = vsel %vm926, %v901, 0
    %1257 = vmatprep.subr.mxu0 0.0
    %1258 = vmatpush1.msra.mxu0 %v894
    %1259 = vmatprep.subr.mxu0 0.0
    %1260 = vmatpush1.msra.mxu0 %v895
    %1261 = vmatprep.subr.mxu0 0.0
    %1262 = vmatpush1.msra.mxu0 0.0
    %1263 = vmatprep.subr.mxu0 0.0
    %1264 = vmatpush1.msra.mxu0 0.0
    %1265 = vmatprep.subr.mxu0 0.0
    %1266 = vmatpush1.msra.mxu0 0.0
    %1267 = vmatprep.subr.mxu0 0.0
    %1268 = vmatpush1.msra.mxu0 0.0
    %1269 = vmatprep.subr.mxu0 0.0
    %1270 = vmatpush1.msra.mxu0 0.0
    %1271 = vmatprep.subr.mxu0 0.0
    %1272 = vmatpush1.msra.mxu0 0.0
    %1273 = vmatprep.subr.mxu0 0.0
    %1274 = vmatpush1.msra.mxu0 0.0
    %1275 = vmatprep.subr.mxu0 0.0
    %1276 = vmatpush1.msra.mxu0 0.0
    %1277 = vmatprep.subr.mxu0 0.0
    %1278 = vmatpush1.msra.mxu0 0.0
    %1279 = vmatprep.subr.mxu0 0.0
    %1280 = vmatpush1.msra.mxu0 0.0
    %1281 = vmatprep.subr.mxu0 0.0
    %1282 = vmatpush1.msra.mxu0 0.0
    %1283 = vmatprep.subr.mxu0 0.0
    %1284 = vmatpush1.msra.mxu0 0.0
    %1285 = vmatprep.subr.mxu0 0.0
    %1286 = vmatpush1.msra.mxu0 0.0
    %1287 = vmatprep.subr.mxu0 0.0
    %1288 = vmatpush1.msra.mxu0 0.0
    %1289 = vmatprep.subr.mxu0 0.0
    %1290 = vmatpush1.msra.mxu0 0.0
    %1291 = vmatprep.subr.mxu0 0.0
    %1292 = vmatpush1.msra.mxu0 0.0
    %1293 = vmatprep.subr.mxu0 0.0
    %1294 = vmatpush1.msra.mxu0 0.0
    %1295 = vmatprep.subr.mxu0 0.0
    %1296 = vmatpush1.msra.mxu0 0.0
    %1297 = vmatprep.subr.mxu0 0.0
    %1298 = vmatpush1.msra.mxu0 0.0
    %1299 = vmatprep.subr.mxu0 0.0
    %1300 = vmatpush1.msra.mxu0 0.0
    %1301 = vmatprep.subr.mxu0 0.0
    %1302 = vmatpush1.msra.mxu0 0.0
    %1303 = vmatprep.subr.mxu0 0.0
    %1304 = vmatpush1.msra.mxu0 0.0
    %1305 = vmatprep.subr.mxu0 0.0
    %1306 = vmatpush1.msra.mxu0 0.0
    %1307 = vmatprep.subr.mxu0 0.0
    %1308 = vmatpush1.msra.mxu0 0.0
    %1309 = vmatprep.subr.mxu0 0.0
    %1310 = vmatpush1.msra.mxu0 0.0
    %1311 = vmatprep.subr.mxu0 0.0
    %1312 = vmatpush1.msra.mxu0 0.0
    %1313 = vmatprep.subr.mxu0 0.0
    %1314 = vmatpush1.msra.mxu0 0.0
    %1315 = vmatprep.subr.mxu0 0.0
    %1316 = vmatpush1.msra.mxu0 0.0
    %1317 = vmatprep.subr.mxu0 0.0
    %1318 = vmatpush1.msra.mxu0 0.0
    %1319 = vmatprep.subr.mxu0 0.0
    %1320 = vmatpush1.msra.mxu0 0.0
    %1321 = vmatprep.mubr.f32.mxu0 0.0
    %1322 = vmatmul.mubr.f32.gmra.mrb[0].mxu0 %v1252
    %v1323 = vpop.f32.mrb[0].mxu0
    %v1324 = vadd.f32 0.0, %v1323
    %v1325 = vpop.f32.mrb[0].mxu0
    %1326 = vmatprep.mubr.f32.mxu0 0.0
    %1327 = vmatmul.mubr.f32.gmra.mrb[0].mxu0 %v1255
    %v1328 = vpop.f32.mrb[0].mxu0
    %v1329 = vadd.f32 0.0, %v1328
    %v1330 = vpop.f32.mrb[0].mxu0
    %1331 = vdwg.mxu0
    %v1333 = vsel %vm546, %v1324, 0
    %v1336 = vsel %vm546, %v1329, 0
    %1338 = vmatprep.subr.mxu0 0.0
    %1339 = vmatpush1.msra.mxu0 %v918
    %1340 = vmatprep.subr.mxu0 0.0
    %1341 = vmatpush1.msra.mxu0 %v919
    %1342 = vmatprep.subr.mxu0 0.0
    %1343 = vmatpush1.msra.mxu0 %v920
    %1344 = vmatprep.subr.mxu0 0.0
    %1345 = vmatpush1.msra.mxu0 %v921
    %1346 = vmatprep.subr.mxu0 0.0
    %1347 = vmatpush1.msra.mxu0 %v922
    %1348 = vmatprep.subr.mxu0 0.0
    %1349 = vmatpush1.msra.mxu0 %v923
    %1350 = vmatprep.subr.mxu0 0.0
    %1351 = vmatpush1.msra.mxu0 %v924
    %1352 = vmatprep.subr.mxu0 0.0
    %1353 = vmatpush1.msra.mxu0 %v925
    %1354 = vmatprep.subr.mxu0 0.0
    %1355 = vmatpush1.msra.mxu0 0.0
    %1356 = vmatprep.subr.mxu0 0.0
    %1357 = vmatpush1.msra.mxu0 0.0
    %1358 = vmatprep.subr.mxu0 0.0
    %1359 = vmatpush1.msra.mxu0 0.0
    %1360 = vmatprep.subr.mxu0 0.0
    %1361 = vmatpush1.msra.mxu0 0.0
    %1362 = vmatprep.subr.mxu0 0.0
    %1363 = vmatpush1.msra.mxu0 0.0
    %1364 = vmatprep.subr.mxu0 0.0
    %1365 = vmatpush1.msra.mxu0 0.0
    %1366 = vmatprep.subr.mxu0 0.0
    %1367 = vmatpush1.msra.mxu0 0.0
    %1368 = vmatprep.subr.mxu0 0.0
    %1369 = vmatpush1.msra.mxu0 0.0
    %1370 = vmatprep.subr.mxu0 0.0
    %1371 = vmatpush1.msra.mxu0 0.0
    %1372 = vmatprep.subr.mxu0 0.0
    %1373 = vmatpush1.msra.mxu0 0.0
    %1374 = vmatprep.subr.mxu0 0.0
    %1375 = vmatpush1.msra.mxu0 0.0
    %1376 = vmatprep.subr.mxu0 0.0
    %1377 = vmatpush1.msra.mxu0 0.0
    %1378 = vmatprep.subr.mxu0 0.0
    %1379 = vmatpush1.msra.mxu0 0.0
    %1380 = vmatprep.subr.mxu0 0.0
    %1381 = vmatpush1.msra.mxu0 0.0
    %1382 = vmatprep.subr.mxu0 0.0
    %1383 = vmatpush1.msra.mxu0 0.0
    %1384 = vmatprep.subr.mxu0 0.0
    %1385 = vmatpush1.msra.mxu0 0.0
    %1386 = vmatprep.subr.mxu0 0.0
    %1387 = vmatpush1.msra.mxu0 0.0
    %1388 = vmatprep.subr.mxu0 0.0
    %1389 = vmatpush1.msra.mxu0 0.0
    %1390 = vmatprep.subr.mxu0 0.0
    %1391 = vmatpush1.msra.mxu0 0.0
    %1392 = vmatprep.subr.mxu0 0.0
    %1393 = vmatpush1.msra.mxu0 0.0
    %1394 = vmatprep.subr.mxu0 0.0
    %1395 = vmatpush1.msra.mxu0 0.0
    %1396 = vmatprep.subr.mxu0 0.0
    %1397 = vmatpush1.msra.mxu0 0.0
    %1398 = vmatprep.subr.mxu0 0.0
    %1399 = vmatpush1.msra.mxu0 0.0
    %1400 = vmatprep.subr.mxu0 0.0
    %1401 = vmatpush1.msra.mxu0 0.0
    %1402 = vmatprep.mubr.f32.mxu0 0.0
    %1403 = vmatmul.mubr.f32.gmra.mrb[0].mxu0 %v1333
    %v1404 = vpop.f32.mrb[0].mxu0
    %v1405 = vadd.f32 0.0, %v1404
    %v1406 = vpop.f32.mrb[0].mxu0
    %1407 = vmatprep.mubr.f32.mxu0 0.0
    %1408 = vmatmul.mubr.f32.gmra.mrb[0].mxu0 %v1336
    %v1409 = vpop.f32.mrb[0].mxu0
    %v1410 = vadd.f32 0.0, %v1409
    %v1411 = vpop.f32.mrb[0].mxu0
    %1412 = vdwg.mxu0
    %v1413 = vadd.f32 %v1243, %v1405
    %v1414 = vadd.f32 %v1248, %v1410
    %v1415 = vld [vmem:[%s35] sm:$0x1]
    %v1417 = vlaneseq
    %v1418 = vshrl.u32 %v1417, 7
    %v1419 = vsub.s32 0, %v1418
    %v1420 = vrot.slane %v1415, %v1419
    %v1422 = vadd.f32 %v1413, %v1420
    %v1423 = vadd.f32 %v1414, %v1420
    %v1424 = vxor.u32 %v1422, 2147483648
    %v1425 = vxor.u32 %v1423, 2147483648
    %v1426 = vmul.f32 %v1424, 1.442695
    %v1427 = vpow.pop %v1426
    %v1428 = vmul.f32 %v1425, 1.442695
    %v1429 = vpow.pop %v1428
    %v1430 = vadd.f32 %v1427, 1.0
    %v1431 = vadd.f32 %v1429, 1.0
    %v1432 = vrcp.pop %v1430
    %v1433 = vmul.f32 1.0, %v1432
    %v1434 = vrcp.pop %v1431
    %v1435 = vmul.f32 1.0, %v1434
    %v1436 = vmul.f32 %v1422, %v1433
    %v1437 = vmul.f32 %v1423, %v1435
    %v1438 = vld [vmem:[%s15] sm:$0xff]
    %v1439 = vld [vmem:[%s15 + $0x8] sm:$0xff]
    %v1440 = vld [vmem:[%s15 + $0x10] sm:$0xff]
    %v1441 = vld [vmem:[%s15 + $0x18] sm:$0xff]
    %v1442 = vld [vmem:[%s15 + $0x20] sm:$0xff]
    %v1443 = vld [vmem:[%s15 + $0x28] sm:$0xff]
    %v1444 = vld [vmem:[%s15 + $0x30] sm:$0xff]
    %v1445 = vld [vmem:[%s15 + $0x38] sm:$0xff]
    %v1446 = vld [vmem:[%s15 + $0x40] sm:$0xff]
    %v1447 = vld [vmem:[%s15 + $0x48] sm:$0xff]
    %v1448 = vld [vmem:[%s15 + $0x50] sm:$0xff]
    %v1449 = vld [vmem:[%s15 + $0x58] sm:$0xff]
    %v1450 = vld [vmem:[%s15 + $0x60] sm:$0xff]
    %v1451 = vld [vmem:[%s15 + $0x68] sm:$0xff]
    %v1452 = vld [vmem:[%s15 + $0x70] sm:$0xff]
    %v1453 = vld [vmem:[%s15 + $0x78] sm:$0xff]
    %v1454 = vld [vmem:[%s15 + $0x80] sm:$0xff]
    %v1455 = vld [vmem:[%s15 + $0x88] sm:$0xff]
    %v1456 = vld [vmem:[%s15 + $0x90] sm:$0xff]
    %v1457 = vld [vmem:[%s15 + $0x98] sm:$0xff]
    %v1458 = vld [vmem:[%s15 + $0xa0] sm:$0xff]
    %v1459 = vld [vmem:[%s15 + $0xa8] sm:$0xff]
    %v1460 = vld [vmem:[%s15 + $0xb0] sm:$0xff]
    %v1461 = vld [vmem:[%s15 + $0xb8] sm:$0xff]
    %1462 = vmatprep.subr.mxu0 0.0
    %1463 = vmatpush1.msra.mxu0 %v1436
    %1464 = vmatprep.subr.mxu0 0.0
    %1465 = vmatpush1.msra.mxu0 %v1437
    %1466 = vmatprep.subr.mxu0 0.0
    %1467 = vmatpush1.msra.mxu0 0.0
    %1468 = vmatprep.subr.mxu0 0.0
    %1469 = vmatpush1.msra.mxu0 0.0
    %1470 = vmatprep.subr.mxu0 0.0
    %1471 = vmatpush1.msra.mxu0 0.0
    %1472 = vmatprep.subr.mxu0 0.0
    %1473 = vmatpush1.msra.mxu0 0.0
    %1474 = vmatprep.subr.mxu0 0.0
    %1475 = vmatpush1.msra.mxu0 0.0
    %1476 = vmatprep.subr.mxu0 0.0
    %1477 = vmatpush1.msra.mxu0 0.0
    %1478 = vmatprep.subr.mxu0 0.0
    %1479 = vmatpush1.msra.mxu0 0.0
    %1480 = vmatprep.subr.mxu0 0.0
    %1481 = vmatpush1.msra.mxu0 0.0
    %1482 = vmatprep.subr.mxu0 0.0
    %1483 = vmatpush1.msra.mxu0 0.0
    %1484 = vmatprep.subr.mxu0 0.0
    %1485 = vmatpush1.msra.mxu0 0.0
    %1486 = vmatprep.subr.mxu0 0.0
    %1487 = vmatpush1.msra.mxu0 0.0
    %1488 = vmatprep.subr.mxu0 0.0
    %1489 = vmatpush1.msra.mxu0 0.0
    %1490 = vmatprep.subr.mxu0 0.0
    %1491 = vmatpush1.msra.mxu0 0.0
    %1492 = vmatprep.subr.mxu0 0.0
    %1493 = vmatpush1.msra.mxu0 0.0
    %1494 = vmatprep.subr.mxu0 0.0
    %1495 = vmatpush1.msra.mxu0 0.0
    %1496 = vmatprep.subr.mxu0 0.0
    %1497 = vmatpush1.msra.mxu0 0.0
    %1498 = vmatprep.subr.mxu0 0.0
    %1499 = vmatpush1.msra.mxu0 0.0
    %1500 = vmatprep.subr.mxu0 0.0
    %1501 = vmatpush1.msra.mxu0 0.0
    %1502 = vmatprep.subr.mxu0 0.0
    %1503 = vmatpush1.msra.mxu0 0.0
    %1504 = vmatprep.subr.mxu0 0.0
    %1505 = vmatpush1.msra.mxu0 0.0
    %1506 = vmatprep.subr.mxu0 0.0
    %1507 = vmatpush1.msra.mxu0 0.0
    %1508 = vmatprep.subr.mxu0 0.0
    %1509 = vmatpush1.msra.mxu0 0.0
    %1510 = vmatprep.subr.mxu0 0.0
    %1511 = vmatpush1.msra.mxu0 0.0
    %1512 = vmatprep.subr.mxu0 0.0
    %1513 = vmatpush1.msra.mxu0 0.0
    %1514 = vmatprep.subr.mxu0 0.0
    %1515 = vmatpush1.msra.mxu0 0.0
    %1516 = vmatprep.subr.mxu0 0.0
    %1517 = vmatpush1.msra.mxu0 0.0
    %1518 = vmatprep.subr.mxu0 0.0
    %1519 = vmatpush1.msra.mxu0 0.0
    %1520 = vmatprep.subr.mxu0 0.0
    %1521 = vmatpush1.msra.mxu0 0.0
    %1522 = vmatprep.subr.mxu0 0.0
    %1523 = vmatpush1.msra.mxu0 0.0
    %1524 = vmatprep.subr.mxu0 0.0
    %1525 = vmatpush1.msra.mxu0 0.0
    %1526 = vmatprep.mubr.f32.mxu0 0.0
    %1527 = vmatmul.mubr.f32.gmra.mrb[0].mxu0 %v928
    %v1528 = vpop.f32.mrb[0].mxu0
    %v1529 = vadd.f32 0.0, %v1528
    %v1530 = vpop.f32.mrb[0].mxu0
    %1531 = vmatprep.mubr.f32.mxu0 0.0
    %1532 = vmatmul.mubr.f32.gmra.mrb[0].mxu0 %v931
    %v1533 = vpop.f32.mrb[0].mxu0
    %v1534 = vadd.f32 0.0, %v1533
    %v1535 = vpop.f32.mrb[0].mxu0
    %1536 = vdwg.mxu0
    %1537 = vmatprep.subr.mxu0 0.0
    %1538 = vmatpush1.msra.mxu0 %v1436
    %1539 = vmatprep.subr.mxu0 0.0
    %1540 = vmatpush1.msra.mxu0 %v1437
    %1541 = vmatprep.subr.mxu0 0.0
    %1542 = vmatpush1.msra.mxu0 0.0
    %1543 = vmatprep.subr.mxu0 0.0
    %1544 = vmatpush1.msra.mxu0 0.0
    %1545 = vmatprep.subr.mxu0 0.0
    %1546 = vmatpush1.msra.mxu0 0.0
    %1547 = vmatprep.subr.mxu0 0.0
    %1548 = vmatpush1.msra.mxu0 0.0
    %1549 = vmatprep.subr.mxu0 0.0
    %1550 = vmatpush1.msra.mxu0 0.0
    %1551 = vmatprep.subr.mxu0 0.0
    %1552 = vmatpush1.msra.mxu0 0.0
    %1553 = vmatprep.subr.mxu0 0.0
    %1554 = vmatpush1.msra.mxu0 0.0
    %1555 = vmatprep.subr.mxu0 0.0
    %1556 = vmatpush1.msra.mxu0 0.0
    %1557 = vmatprep.subr.mxu0 0.0
    %1558 = vmatpush1.msra.mxu0 0.0
    %1559 = vmatprep.subr.mxu0 0.0
    %1560 = vmatpush1.msra.mxu0 0.0
    %1561 = vmatprep.subr.mxu0 0.0
    %1562 = vmatpush1.msra.mxu0 0.0
    %1563 = vmatprep.subr.mxu0 0.0
    %1564 = vmatpush1.msra.mxu0 0.0
    %1565 = vmatprep.subr.mxu0 0.0
    %1566 = vmatpush1.msra.mxu0 0.0
    %1567 = vmatprep.subr.mxu0 0.0
    %1568 = vmatpush1.msra.mxu0 0.0
    %1569 = vmatprep.subr.mxu0 0.0
    %1570 = vmatpush1.msra.mxu0 0.0
    %1571 = vmatprep.subr.mxu0 0.0
    %1572 = vmatpush1.msra.mxu0 0.0
    %1573 = vmatprep.subr.mxu0 0.0
    %1574 = vmatpush1.msra.mxu0 0.0
    %1575 = vmatprep.subr.mxu0 0.0
    %1576 = vmatpush1.msra.mxu0 0.0
    %1577 = vmatprep.subr.mxu0 0.0
    %1578 = vmatpush1.msra.mxu0 0.0
    %1579 = vmatprep.subr.mxu0 0.0
    %1580 = vmatpush1.msra.mxu0 0.0
    %1581 = vmatprep.subr.mxu0 0.0
    %1582 = vmatpush1.msra.mxu0 0.0
    %1583 = vmatprep.subr.mxu0 0.0
    %1584 = vmatpush1.msra.mxu0 0.0
    %1585 = vmatprep.subr.mxu0 0.0
    %1586 = vmatpush1.msra.mxu0 0.0
    %1587 = vmatprep.subr.mxu0 0.0
    %1588 = vmatpush1.msra.mxu0 0.0
    %1589 = vmatprep.subr.mxu0 0.0
    %1590 = vmatpush1.msra.mxu0 0.0
    %1591 = vmatprep.subr.mxu0 0.0
    %1592 = vmatpush1.msra.mxu0 0.0
    %1593 = vmatprep.subr.mxu0 0.0
    %1594 = vmatpush1.msra.mxu0 0.0
    %1595 = vmatprep.subr.mxu0 0.0
    %1596 = vmatpush1.msra.mxu0 0.0
    %1597 = vmatprep.subr.mxu0 0.0
    %1598 = vmatpush1.msra.mxu0 0.0
    %1599 = vmatprep.subr.mxu0 0.0
    %1600 = vmatpush1.msra.mxu0 0.0
    %1601 = vmatprep.mubr.f32.mxu0 0.0
    %1602 = vmatmul.mubr.f32.gmra.mrb[0].mxu0 %v1009
    %v1603 = vpop.f32.mrb[0].mxu0
    %v1604 = vadd.f32 0.0, %v1603
    %v1605 = vpop.f32.mrb[0].mxu0
    %1606 = vmatprep.mubr.f32.mxu0 0.0
    %1607 = vmatmul.mubr.f32.gmra.mrb[0].mxu0 %v1012
    %v1608 = vpop.f32.mrb[0].mxu0
    %v1609 = vadd.f32 0.0, %v1608
    %v1610 = vpop.f32.mrb[0].mxu0
    %1611 = vdwg.mxu0
    %v1613 = vsel %vm546, %v1604, 0
    %v1616 = vsel %vm546, %v1609, 0
    %1618 = vmatprep.subr.mxu0 0.0
    %1619 = vmatpush1.msra.mxu0 %v1446
    %1620 = vmatprep.subr.mxu0 0.0
    %1621 = vmatpush1.msra.mxu0 %v1447
    %1622 = vmatprep.subr.mxu0 0.0
    %1623 = vmatpush1.msra.mxu0 %v1448
    %1624 = vmatprep.subr.mxu0 0.0
    %1625 = vmatpush1.msra.mxu0 %v1449
    %1626 = vmatprep.subr.mxu0 0.0
    %1627 = vmatpush1.msra.mxu0 %v1450
    %1628 = vmatprep.subr.mxu0 0.0
    %1629 = vmatpush1.msra.mxu0 %v1451
    %1630 = vmatprep.subr.mxu0 0.0
    %1631 = vmatpush1.msra.mxu0 %v1452
    %1632 = vmatprep.subr.mxu0 0.0
    %1633 = vmatpush1.msra.mxu0 %v1453
    %1634 = vmatprep.subr.mxu0 0.0
    %1635 = vmatpush1.msra.mxu0 0.0
    %1636 = vmatprep.subr.mxu0 0.0
    %1637 = vmatpush1.msra.mxu0 0.0
    %1638 = vmatprep.subr.mxu0 0.0
    %1639 = vmatpush1.msra.mxu0 0.0
    %1640 = vmatprep.subr.mxu0 0.0
    %1641 = vmatpush1.msra.mxu0 0.0
    %1642 = vmatprep.subr.mxu0 0.0
    %1643 = vmatpush1.msra.mxu0 0.0
    %1644 = vmatprep.subr.mxu0 0.0
    %1645 = vmatpush1.msra.mxu0 0.0
    %1646 = vmatprep.subr.mxu0 0.0
    %1647 = vmatpush1.msra.mxu0 0.0
    %1648 = vmatprep.subr.mxu0 0.0
    %1649 = vmatpush1.msra.mxu0 0.0
    %1650 = vmatprep.subr.mxu0 0.0
    %1651 = vmatpush1.msra.mxu0 0.0
    %1652 = vmatprep.subr.mxu0 0.0
    %1653 = vmatpush1.msra.mxu0 0.0
    %1654 = vmatprep.subr.mxu0 0.0
    %1655 = vmatpush1.msra.mxu0 0.0
    %1656 = vmatprep.subr.mxu0 0.0
    %1657 = vmatpush1.msra.mxu0 0.0
    %1658 = vmatprep.subr.mxu0 0.0
    %1659 = vmatpush1.msra.mxu0 0.0
    %1660 = vmatprep.subr.mxu0 0.0
    %1661 = vmatpush1.msra.mxu0 0.0
    %1662 = vmatprep.subr.mxu0 0.0
    %1663 = vmatpush1.msra.mxu0 0.0
    %1664 = vmatprep.subr.mxu0 0.0
    %1665 = vmatpush1.msra.mxu0 0.0
    %1666 = vmatprep.subr.mxu0 0.0
    %1667 = vmatpush1.msra.mxu0 0.0
    %1668 = vmatprep.subr.mxu0 0.0
    %1669 = vmatpush1.msra.mxu0 0.0
    %1670 = vmatprep.subr.mxu0 0.0
    %1671 = vmatpush1.msra.mxu0 0.0
    %1672 = vmatprep.subr.mxu0 0.0
    %1673 = vmatpush1.msra.mxu0 0.0
    %1674 = vmatprep.subr.mxu0 0.0
    %1675 = vmatpush1.msra.mxu0 0.0
    %1676 = vmatprep.subr.mxu0 0.0
    %1677 = vmatpush1.msra.mxu0 0.0
    %1678 = vmatprep.subr.mxu0 0.0
    %1679 = vmatpush1.msra.mxu0 0.0
    %1680 = vmatprep.subr.mxu0 0.0
    %1681 = vmatpush1.msra.mxu0 0.0
    %1682 = vmatprep.mubr.f32.mxu0 0.0
    %1683 = vmatmul.mubr.f32.gmra.mrb[0].mxu0 %v1613
    %v1684 = vpop.f32.mrb[0].mxu0
    %v1685 = vadd.f32 0.0, %v1684
    %v1686 = vpop.f32.mrb[0].mxu0
    %1687 = vmatprep.mubr.f32.mxu0 0.0
    %1688 = vmatmul.mubr.f32.gmra.mrb[0].mxu0 %v1616
    %v1689 = vpop.f32.mrb[0].mxu0
    %v1690 = vadd.f32 0.0, %v1689
    %v1691 = vpop.f32.mrb[0].mxu0
    %1692 = vdwg.mxu0
    %v1694 = vsel %vm546, %v1529, 0
    %v1697 = vsel %vm546, %v1534, 0
    %1699 = vmatprep.subr.mxu0 0.0
    %1700 = vmatpush1.msra.mxu0 %v1438
    %1701 = vmatprep.subr.mxu0 0.0
    %1702 = vmatpush1.msra.mxu0 %v1439
    %1703 = vmatprep.subr.mxu0 0.0
    %1704 = vmatpush1.msra.mxu0 %v1440
    %1705 = vmatprep.subr.mxu0 0.0
    %1706 = vmatpush1.msra.mxu0 %v1441
    %1707 = vmatprep.subr.mxu0 0.0
    %1708 = vmatpush1.msra.mxu0 %v1442
    %1709 = vmatprep.subr.mxu0 0.0
    %1710 = vmatpush1.msra.mxu0 %v1443
    %1711 = vmatprep.subr.mxu0 0.0
    %1712 = vmatpush1.msra.mxu0 %v1444
    %1713 = vmatprep.subr.mxu0 0.0
    %1714 = vmatpush1.msra.mxu0 %v1445
    %1715 = vmatprep.subr.mxu0 0.0
    %1716 = vmatpush1.msra.mxu0 0.0
    %1717 = vmatprep.subr.mxu0 0.0
    %1718 = vmatpush1.msra.mxu0 0.0
    %1719 = vmatprep.subr.mxu0 0.0
    %1720 = vmatpush1.msra.mxu0 0.0
    %1721 = vmatprep.subr.mxu0 0.0
    %1722 = vmatpush1.msra.mxu0 0.0
    %1723 = vmatprep.subr.mxu0 0.0
    %1724 = vmatpush1.msra.mxu0 0.0
    %1725 = vmatprep.subr.mxu0 0.0
    %1726 = vmatpush1.msra.mxu0 0.0
    %1727 = vmatprep.subr.mxu0 0.0
    %1728 = vmatpush1.msra.mxu0 0.0
    %1729 = vmatprep.subr.mxu0 0.0
    %1730 = vmatpush1.msra.mxu0 0.0
    %1731 = vmatprep.subr.mxu0 0.0
    %1732 = vmatpush1.msra.mxu0 0.0
    %1733 = vmatprep.subr.mxu0 0.0
    %1734 = vmatpush1.msra.mxu0 0.0
    %1735 = vmatprep.subr.mxu0 0.0
    %1736 = vmatpush1.msra.mxu0 0.0
    %1737 = vmatprep.subr.mxu0 0.0
    %1738 = vmatpush1.msra.mxu0 0.0
    %1739 = vmatprep.subr.mxu0 0.0
    %1740 = vmatpush1.msra.mxu0 0.0
    %1741 = vmatprep.subr.mxu0 0.0
    %1742 = vmatpush1.msra.mxu0 0.0
    %1743 = vmatprep.subr.mxu0 0.0
    %1744 = vmatpush1.msra.mxu0 0.0
    %1745 = vmatprep.subr.mxu0 0.0
    %1746 = vmatpush1.msra.mxu0 0.0
    %1747 = vmatprep.subr.mxu0 0.0
    %1748 = vmatpush1.msra.mxu0 0.0
    %1749 = vmatprep.subr.mxu0 0.0
    %1750 = vmatpush1.msra.mxu0 0.0
    %1751 = vmatprep.subr.mxu0 0.0
    %1752 = vmatpush1.msra.mxu0 0.0
    %1753 = vmatprep.subr.mxu0 0.0
    %1754 = vmatpush1.msra.mxu0 0.0
    %1755 = vmatprep.subr.mxu0 0.0
    %1756 = vmatpush1.msra.mxu0 0.0
    %1757 = vmatprep.subr.mxu0 0.0
    %1758 = vmatpush1.msra.mxu0 0.0
    %1759 = vmatprep.subr.mxu0 0.0
    %1760 = vmatpush1.msra.mxu0 0.0
    %1761 = vmatprep.subr.mxu0 0.0
    %1762 = vmatpush1.msra.mxu0 0.0
    %1763 = vmatprep.mubr.f32.mxu0 0.0
    %1764 = vmatmul.mubr.f32.gmra.mrb[0].mxu0 %v1694
    %v1765 = vpop.f32.mrb[0].mxu0
    %v1766 = vadd.f32 %v1685, %v1765
    %v1767 = vpop.f32.mrb[0].mxu0
    %1768 = vmatprep.mubr.f32.mxu0 0.0
    %1769 = vmatmul.mubr.f32.gmra.mrb[0].mxu0 %v1697
    %v1770 = vpop.f32.mrb[0].mxu0
    %v1771 = vadd.f32 %v1690, %v1770
    %v1772 = vpop.f32.mrb[0].mxu0
    %1773 = vdwg.mxu0
    %1774 = vmatprep.subr.mxu0 0.0
    %1775 = vmatpush1.msra.mxu0 %v1436
    %1776 = vmatprep.subr.mxu0 0.0
    %1777 = vmatpush1.msra.mxu0 %v1437
    %1778 = vmatprep.subr.mxu0 0.0
    %1779 = vmatpush1.msra.mxu0 0.0
    %1780 = vmatprep.subr.mxu0 0.0
    %1781 = vmatpush1.msra.mxu0 0.0
    %1782 = vmatprep.subr.mxu0 0.0
    %1783 = vmatpush1.msra.mxu0 0.0
    %1784 = vmatprep.subr.mxu0 0.0
    %1785 = vmatpush1.msra.mxu0 0.0
    %1786 = vmatprep.subr.mxu0 0.0
    %1787 = vmatpush1.msra.mxu0 0.0
    %1788 = vmatprep.subr.mxu0 0.0
    %1789 = vmatpush1.msra.mxu0 0.0
    %1790 = vmatprep.subr.mxu0 0.0
    %1791 = vmatpush1.msra.mxu0 0.0
    %1792 = vmatprep.subr.mxu0 0.0
    %1793 = vmatpush1.msra.mxu0 0.0
    %1794 = vmatprep.subr.mxu0 0.0
    %1795 = vmatpush1.msra.mxu0 0.0
    %1796 = vmatprep.subr.mxu0 0.0
    %1797 = vmatpush1.msra.mxu0 0.0
    %1798 = vmatprep.subr.mxu0 0.0
    %1799 = vmatpush1.msra.mxu0 0.0
    %1800 = vmatprep.subr.mxu0 0.0
    %1801 = vmatpush1.msra.mxu0 0.0
    %1802 = vmatprep.subr.mxu0 0.0
    %1803 = vmatpush1.msra.mxu0 0.0
    %1804 = vmatprep.subr.mxu0 0.0
    %1805 = vmatpush1.msra.mxu0 0.0
    %1806 = vmatprep.subr.mxu0 0.0
    %1807 = vmatpush1.msra.mxu0 0.0
    %1808 = vmatprep.subr.mxu0 0.0
    %1809 = vmatpush1.msra.mxu0 0.0
    %1810 = vmatprep.subr.mxu0 0.0
    %1811 = vmatpush1.msra.mxu0 0.0
    %1812 = vmatprep.subr.mxu0 0.0
    %1813 = vmatpush1.msra.mxu0 0.0
    %1814 = vmatprep.subr.mxu0 0.0
    %1815 = vmatpush1.msra.mxu0 0.0
    %1816 = vmatprep.subr.mxu0 0.0
    %1817 = vmatpush1.msra.mxu0 0.0
    %1818 = vmatprep.subr.mxu0 0.0
    %1819 = vmatpush1.msra.mxu0 0.0
    %1820 = vmatprep.subr.mxu0 0.0
    %1821 = vmatpush1.msra.mxu0 0.0
    %1822 = vmatprep.subr.mxu0 0.0
    %1823 = vmatpush1.msra.mxu0 0.0
    %1824 = vmatprep.subr.mxu0 0.0
    %1825 = vmatpush1.msra.mxu0 0.0
    %1826 = vmatprep.subr.mxu0 0.0
    %1827 = vmatpush1.msra.mxu0 0.0
    %1828 = vmatprep.subr.mxu0 0.0
    %1829 = vmatpush1.msra.mxu0 0.0
    %1830 = vmatprep.subr.mxu0 0.0
    %1831 = vmatpush1.msra.mxu0 0.0
    %1832 = vmatprep.subr.mxu0 0.0
    %1833 = vmatpush1.msra.mxu0 0.0
    %1834 = vmatprep.subr.mxu0 0.0
    %1835 = vmatpush1.msra.mxu0 0.0
    %1836 = vmatprep.subr.mxu0 0.0
    %1837 = vmatpush1.msra.mxu0 0.0
    %1838 = vmatprep.mubr.f32.mxu0 0.0
    %1839 = vmatmul.mubr.f32.gmra.mrb[0].mxu0 %v1252
    %v1840 = vpop.f32.mrb[0].mxu0
    %v1841 = vadd.f32 0.0, %v1840
    %v1842 = vpop.f32.mrb[0].mxu0
    %1843 = vmatprep.mubr.f32.mxu0 0.0
    %1844 = vmatmul.mubr.f32.gmra.mrb[0].mxu0 %v1255
    %v1845 = vpop.f32.mrb[0].mxu0
    %v1846 = vadd.f32 0.0, %v1845
    %v1847 = vpop.f32.mrb[0].mxu0
    %1848 = vdwg.mxu0
    %v1850 = vsel %vm546, %v1841, 0
    %v1853 = vsel %vm546, %v1846, 0
    %1855 = vmatprep.subr.mxu0 0.0
    %1856 = vmatpush1.msra.mxu0 %v1454
    %1857 = vmatprep.subr.mxu0 0.0
    %1858 = vmatpush1.msra.mxu0 %v1455
    %1859 = vmatprep.subr.mxu0 0.0
    %1860 = vmatpush1.msra.mxu0 %v1456
    %1861 = vmatprep.subr.mxu0 0.0
    %1862 = vmatpush1.msra.mxu0 %v1457
    %1863 = vmatprep.subr.mxu0 0.0
    %1864 = vmatpush1.msra.mxu0 %v1458
    %1865 = vmatprep.subr.mxu0 0.0
    %1866 = vmatpush1.msra.mxu0 %v1459
    %1867 = vmatprep.subr.mxu0 0.0
    %1868 = vmatpush1.msra.mxu0 %v1460
    %1869 = vmatprep.subr.mxu0 0.0
    %1870 = vmatpush1.msra.mxu0 %v1461
    %1871 = vmatprep.subr.mxu0 0.0
    %1872 = vmatpush1.msra.mxu0 0.0
    %1873 = vmatprep.subr.mxu0 0.0
    %1874 = vmatpush1.msra.mxu0 0.0
    %1875 = vmatprep.subr.mxu0 0.0
    %1876 = vmatpush1.msra.mxu0 0.0
    %1877 = vmatprep.subr.mxu0 0.0
    %1878 = vmatpush1.msra.mxu0 0.0
    %1879 = vmatprep.subr.mxu0 0.0
    %1880 = vmatpush1.msra.mxu0 0.0
    %1881 = vmatprep.subr.mxu0 0.0
    %1882 = vmatpush1.msra.mxu0 0.0
    %1883 = vmatprep.subr.mxu0 0.0
    %1884 = vmatpush1.msra.mxu0 0.0
    %1885 = vmatprep.subr.mxu0 0.0
    %1886 = vmatpush1.msra.mxu0 0.0
    %1887 = vmatprep.subr.mxu0 0.0
    %1888 = vmatpush1.msra.mxu0 0.0
    %1889 = vmatprep.subr.mxu0 0.0
    %1890 = vmatpush1.msra.mxu0 0.0
    %1891 = vmatprep.subr.mxu0 0.0
    %1892 = vmatpush1.msra.mxu0 0.0
    %1893 = vmatprep.subr.mxu0 0.0
    %1894 = vmatpush1.msra.mxu0 0.0
    %1895 = vmatprep.subr.mxu0 0.0
    %1896 = vmatpush1.msra.mxu0 0.0
    %1897 = vmatprep.subr.mxu0 0.0
    %1898 = vmatpush1.msra.mxu0 0.0
    %1899 = vmatprep.subr.mxu0 0.0
    %1900 = vmatpush1.msra.mxu0 0.0
    %1901 = vmatprep.subr.mxu0 0.0
    %1902 = vmatpush1.msra.mxu0 0.0
    %1903 = vmatprep.subr.mxu0 0.0
    %1904 = vmatpush1.msra.mxu0 0.0
    %1905 = vmatprep.subr.mxu0 0.0
    %1906 = vmatpush1.msra.mxu0 0.0
    %1907 = vmatprep.subr.mxu0 0.0
    %1908 = vmatpush1.msra.mxu0 0.0
    %1909 = vmatprep.subr.mxu0 0.0
    %1910 = vmatpush1.msra.mxu0 0.0
    %1911 = vmatprep.subr.mxu0 0.0
    %1912 = vmatpush1.msra.mxu0 0.0
    %1913 = vmatprep.subr.mxu0 0.0
    %1914 = vmatpush1.msra.mxu0 0.0
    %1915 = vmatprep.subr.mxu0 0.0
    %1916 = vmatpush1.msra.mxu0 0.0
    %1917 = vmatprep.subr.mxu0 0.0
    %1918 = vmatpush1.msra.mxu0 0.0
    %1919 = vmatprep.mubr.f32.mxu0 0.0
    %1920 = vmatmul.mubr.f32.gmra.mrb[0].mxu0 %v1850
    %v1921 = vpop.f32.mrb[0].mxu0
    %v1922 = vadd.f32 0.0, %v1921
    %v1923 = vpop.f32.mrb[0].mxu0
    %1924 = vmatprep.mubr.f32.mxu0 0.0
    %1925 = vmatmul.mubr.f32.gmra.mrb[0].mxu0 %v1853
    %v1926 = vpop.f32.mrb[0].mxu0
    %v1927 = vadd.f32 0.0, %v1926
    %v1928 = vpop.f32.mrb[0].mxu0
    %1929 = vdwg.mxu0
    %v1930 = vadd.f32 %v1766, %v1922
    %v1931 = vadd.f32 %v1771, %v1927
    %v1932 = vld [vmem:[%s37] sm:$0x1]
    %v1934 = vlaneseq
    %v1935 = vshrl.u32 %v1934, 7
    %v1936 = vsub.s32 0, %v1935
    %v1937 = vrot.slane %v1932, %v1936
    %v1939 = vadd.f32 %v1930, %v1937
    %v1940 = vadd.f32 %v1931, %v1937
    %v1941 = vxor.u32 %v1939, 2147483648
    %v1942 = vxor.u32 %v1940, 2147483648
    %v1943 = vmul.f32 %v1941, 1.442695
    %v1944 = vpow.pop %v1943
    %v1945 = vmul.f32 %v1942, 1.442695
    %v1946 = vpow.pop %v1945
    %v1947 = vadd.f32 %v1944, 1.0
    %v1948 = vadd.f32 %v1946, 1.0
    %v1949 = vrcp.pop %v1947
    %v1950 = vmul.f32 1.0, %v1949
    %v1951 = vrcp.pop %v1948
    %v1952 = vmul.f32 1.0, %v1951
    %v1953 = vmul.f32 %v1939, %v1950
    %v1954 = vmul.f32 %v1940, %v1952
    %v1955 = vld [vmem:[#allocation4] sm:$0xff]
    %v1956 = vld [vmem:[#allocation4 + $0x8] sm:$0xff]
    %v1957 = vld [vmem:[#allocation4 + $0x10] sm:$0xff]
    %v1958 = vld [vmem:[#allocation7] sm:$0xff]
    %v1959 = vld [vmem:[#allocation7 + $0x8] sm:$0xff]
    %v1960 = vld [vmem:[#allocation7 + $0x10] sm:$0xff]
    %v1961 = vld [vmem:[#allocation7 + $0x18] sm:$0xff]
    %v1962 = vld [vmem:[#allocation7 + $0x20] sm:$0xff]
    %v1963 = vld [vmem:[#allocation7 + $0x28] sm:$0xff]
    %v1964 = vld [vmem:[#allocation7 + $0x30] sm:$0xff]
    %v1965 = vld [vmem:[#allocation7 + $0x38] sm:$0xff]
    %v1966 = vld [vmem:[#allocation7 + $0x40] sm:$0xff]
    %v1967 = vld [vmem:[#allocation7 + $0x48] sm:$0xff]
    %v1968 = vld [vmem:[#allocation7 + $0x50] sm:$0xff]
    %v1969 = vld [vmem:[#allocation7 + $0x58] sm:$0xff]
    %v1970 = vld [vmem:[#allocation7 + $0x60] sm:$0xff]
    %v1971 = vld [vmem:[#allocation7 + $0x68] sm:$0xff]
    %v1972 = vld [vmem:[#allocation7 + $0x70] sm:$0xff]
    %v1973 = vld [vmem:[#allocation7 + $0x78] sm:$0xff]
    %v1974 = vld [vmem:[#allocation7 + $0x80] sm:$0xff]
    %v1975 = vld [vmem:[#allocation7 + $0x88] sm:$0xff]
    %v1976 = vld [vmem:[#allocation7 + $0x90] sm:$0xff]
    %v1977 = vld [vmem:[#allocation7 + $0x98] sm:$0xff]
    %v1978 = vld [vmem:[#allocation7 + $0xa0] sm:$0xff]
    %v1979 = vld [vmem:[#allocation7 + $0xa8] sm:$0xff]
    %v1980 = vld [vmem:[#allocation7 + $0xb0] sm:$0xff]
    %v1981 = vld [vmem:[#allocation7 + $0xb8] sm:$0xff]
    %v1983 = vsel %vm926, %v1955, 0
    %1985 = vmatprep.subr.mxu0 0.0
    %1986 = vmatpush1.msra.mxu0 %v1953
    %1987 = vmatprep.subr.mxu0 0.0
    %1988 = vmatpush1.msra.mxu0 %v1954
    %1989 = vmatprep.subr.mxu0 0.0
    %1990 = vmatpush1.msra.mxu0 0.0
    %1991 = vmatprep.subr.mxu0 0.0
    %1992 = vmatpush1.msra.mxu0 0.0
    %1993 = vmatprep.subr.mxu0 0.0
    %1994 = vmatpush1.msra.mxu0 0.0
    %1995 = vmatprep.subr.mxu0 0.0
    %1996 = vmatpush1.msra.mxu0 0.0
    %1997 = vmatprep.subr.mxu0 0.0
    %1998 = vmatpush1.msra.mxu0 0.0
    %1999 = vmatprep.subr.mxu0 0.0
    %2000 = vmatpush1.msra.mxu0 0.0
    %2001 = vmatprep.subr.mxu0 0.0
    %2002 = vmatpush1.msra.mxu0 0.0
    %2003 = vmatprep.subr.mxu0 0.0
    %2004 = vmatpush1.msra.mxu0 0.0
    %2005 = vmatprep.subr.mxu0 0.0
    %2006 = vmatpush1.msra.mxu0 0.0
    %2007 = vmatprep.subr.mxu0 0.0
    %2008 = vmatpush1.msra.mxu0 0.0
    %2009 = vmatprep.subr.mxu0 0.0
    %2010 = vmatpush1.msra.mxu0 0.0
    %2011 = vmatprep.subr.mxu0 0.0
    %2012 = vmatpush1.msra.mxu0 0.0
    %2013 = vmatprep.subr.mxu0 0.0
    %2014 = vmatpush1.msra.mxu0 0.0
    %2015 = vmatprep.subr.mxu0 0.0
    %2016 = vmatpush1.msra.mxu0 0.0
    %2017 = vmatprep.subr.mxu0 0.0
    %2018 = vmatpush1.msra.mxu0 0.0
    %2019 = vmatprep.subr.mxu0 0.0
    %2020 = vmatpush1.msra.mxu0 0.0
    %2021 = vmatprep.subr.mxu0 0.0
    %2022 = vmatpush1.msra.mxu0 0.0
    %2023 = vmatprep.subr.mxu0 0.0
    %2024 = vmatpush1.msra.mxu0 0.0
    %2025 = vmatprep.subr.mxu0 0.0
    %2026 = vmatpush1.msra.mxu0 0.0
    %2027 = vmatprep.subr.mxu0 0.0
    %2028 = vmatpush1.msra.mxu0 0.0
    %2029 = vmatprep.subr.mxu0 0.0
    %2030 = vmatpush1.msra.mxu0 0.0
    %2031 = vmatprep.subr.mxu0 0.0
    %2032 = vmatpush1.msra.mxu0 0.0
    %2033 = vmatprep.subr.mxu0 0.0
    %2034 = vmatpush1.msra.mxu0 0.0
    %2035 = vmatprep.subr.mxu0 0.0
    %2036 = vmatpush1.msra.mxu0 0.0
    %2037 = vmatprep.subr.mxu0 0.0
    %2038 = vmatpush1.msra.mxu0 0.0
    %2039 = vmatprep.subr.mxu0 0.0
    %2040 = vmatpush1.msra.mxu0 0.0
    %2041 = vmatprep.subr.mxu0 0.0
    %2042 = vmatpush1.msra.mxu0 0.0
    %2043 = vmatprep.subr.mxu0 0.0
    %2044 = vmatpush1.msra.mxu0 0.0
    %2045 = vmatprep.subr.mxu0 0.0
    %2046 = vmatpush1.msra.mxu0 0.0
    %2047 = vmatprep.subr.mxu0 0.0
    %2048 = vmatpush1.msra.mxu0 0.0
    %2049 = vmatprep.mubr.f32.mxu0 0.0
    %2050 = vmatmul.mubr.f32.gmra.mrb[0].mxu0 %v1983
    %v2051 = vpop.f32.mrb[0].mxu0
    %v2052 = vadd.f32 0.0, %v2051
    %v2053 = vpop.f32.mrb[0].mxu0
    %2054 = vdwg.mxu0
    %v2056 = vsel %vm926, %v1956, 0
    %2058 = vmatprep.subr.mxu0 0.0
    %2059 = vmatpush1.msra.mxu0 %v1953
    %2060 = vmatprep.subr.mxu0 0.0
    %2061 = vmatpush1.msra.mxu0 %v1954
    %2062 = vmatprep.subr.mxu0 0.0
    %2063 = vmatpush1.msra.mxu0 0.0
    %2064 = vmatprep.subr.mxu0 0.0
    %2065 = vmatpush1.msra.mxu0 0.0
    %2066 = vmatprep.subr.mxu0 0.0
    %2067 = vmatpush1.msra.mxu0 0.0
    %2068 = vmatprep.subr.mxu0 0.0
    %2069 = vmatpush1.msra.mxu0 0.0
    %2070 = vmatprep.subr.mxu0 0.0
    %2071 = vmatpush1.msra.mxu0 0.0
    %2072 = vmatprep.subr.mxu0 0.0
    %2073 = vmatpush1.msra.mxu0 0.0
    %2074 = vmatprep.subr.mxu0 0.0
    %2075 = vmatpush1.msra.mxu0 0.0
    %2076 = vmatprep.subr.mxu0 0.0
    %2077 = vmatpush1.msra.mxu0 0.0
    %2078 = vmatprep.subr.mxu0 0.0
    %2079 = vmatpush1.msra.mxu0 0.0
    %2080 = vmatprep.subr.mxu0 0.0
    %2081 = vmatpush1.msra.mxu0 0.0
    %2082 = vmatprep.subr.mxu0 0.0
    %2083 = vmatpush1.msra.mxu0 0.0
    %2084 = vmatprep.subr.mxu0 0.0
    %2085 = vmatpush1.msra.mxu0 0.0
    %2086 = vmatprep.subr.mxu0 0.0
    %2087 = vmatpush1.msra.mxu0 0.0
    %2088 = vmatprep.subr.mxu0 0.0
    %2089 = vmatpush1.msra.mxu0 0.0
    %2090 = vmatprep.subr.mxu0 0.0
    %2091 = vmatpush1.msra.mxu0 0.0
    %2092 = vmatprep.subr.mxu0 0.0
    %2093 = vmatpush1.msra.mxu0 0.0
    %2094 = vmatprep.subr.mxu0 0.0
    %2095 = vmatpush1.msra.mxu0 0.0
    %2096 = vmatprep.subr.mxu0 0.0
    %2097 = vmatpush1.msra.mxu0 0.0
    %2098 = vmatprep.subr.mxu0 0.0
    %2099 = vmatpush1.msra.mxu0 0.0
    %2100 = vmatprep.subr.mxu0 0.0
    %2101 = vmatpush1.msra.mxu0 0.0
    %2102 = vmatprep.subr.mxu0 0.0
    %2103 = vmatpush1.msra.mxu0 0.0
    %2104 = vmatprep.subr.mxu0 0.0
    %2105 = vmatpush1.msra.mxu0 0.0
    %2106 = vmatprep.subr.mxu0 0.0
    %2107 = vmatpush1.msra.mxu0 0.0
    %2108 = vmatprep.subr.mxu0 0.0
    %2109 = vmatpush1.msra.mxu0 0.0
    %2110 = vmatprep.subr.mxu0 0.0
    %2111 = vmatpush1.msra.mxu0 0.0
    %2112 = vmatprep.subr.mxu0 0.0
    %2113 = vmatpush1.msra.mxu0 0.0
    %2114 = vmatprep.subr.mxu0 0.0
    %2115 = vmatpush1.msra.mxu0 0.0
    %2116 = vmatprep.subr.mxu0 0.0
    %2117 = vmatpush1.msra.mxu0 0.0
    %2118 = vmatprep.subr.mxu0 0.0
    %2119 = vmatpush1.msra.mxu0 0.0
    %2120 = vmatprep.subr.mxu0 0.0
    %2121 = vmatpush1.msra.mxu0 0.0
    %2122 = vmatprep.mubr.f32.mxu0 0.0
    %2123 = vmatmul.mubr.f32.gmra.mrb[0].mxu0 %v2056
    %v2124 = vpop.f32.mrb[0].mxu0
    %v2125 = vadd.f32 0.0, %v2124
    %v2126 = vpop.f32.mrb[0].mxu0
    %2127 = vdwg.mxu0
    %v2129 = vsel %vm546, %v2125, 0
    %2131 = vmatprep.subr.mxu0 0.0
    %2132 = vmatpush1.msra.mxu0 %v1966
    %2133 = vmatprep.subr.mxu0 0.0
    %2134 = vmatpush1.msra.mxu0 %v1967
    %2135 = vmatprep.subr.mxu0 0.0
    %2136 = vmatpush1.msra.mxu0 %v1968
    %2137 = vmatprep.subr.mxu0 0.0
    %2138 = vmatpush1.msra.mxu0 %v1969
    %2139 = vmatprep.subr.mxu0 0.0
    %2140 = vmatpush1.msra.mxu0 %v1970
    %2141 = vmatprep.subr.mxu0 0.0
    %2142 = vmatpush1.msra.mxu0 %v1971
    %2143 = vmatprep.subr.mxu0 0.0
    %2144 = vmatpush1.msra.mxu0 %v1972
    %2145 = vmatprep.subr.mxu0 0.0
    %2146 = vmatpush1.msra.mxu0 %v1973
    %2147 = vmatprep.subr.mxu0 0.0
    %2148 = vmatpush1.msra.mxu0 0.0
    %2149 = vmatprep.subr.mxu0 0.0
    %2150 = vmatpush1.msra.mxu0 0.0
    %2151 = vmatprep.subr.mxu0 0.0
    %2152 = vmatpush1.msra.mxu0 0.0
    %2153 = vmatprep.subr.mxu0 0.0
    %2154 = vmatpush1.msra.mxu0 0.0
    %2155 = vmatprep.subr.mxu0 0.0
    %2156 = vmatpush1.msra.mxu0 0.0
    %2157 = vmatprep.subr.mxu0 0.0
    %2158 = vmatpush1.msra.mxu0 0.0
    %2159 = vmatprep.subr.mxu0 0.0
    %2160 = vmatpush1.msra.mxu0 0.0
    %2161 = vmatprep.subr.mxu0 0.0
    %2162 = vmatpush1.msra.mxu0 0.0
    %2163 = vmatprep.subr.mxu0 0.0
    %2164 = vmatpush1.msra.mxu0 0.0
    %2165 = vmatprep.subr.mxu0 0.0
    %2166 = vmatpush1.msra.mxu0 0.0
    %2167 = vmatprep.subr.mxu0 0.0
    %2168 = vmatpush1.msra.mxu0 0.0
    %2169 = vmatprep.subr.mxu0 0.0
    %2170 = vmatpush1.msra.mxu0 0.0
    %2171 = vmatprep.subr.mxu0 0.0
    %2172 = vmatpush1.msra.mxu0 0.0
    %2173 = vmatprep.subr.mxu0 0.0
    %2174 = vmatpush1.msra.mxu0 0.0
    %2175 = vmatprep.subr.mxu0 0.0
    %2176 = vmatpush1.msra.mxu0 0.0
    %2177 = vmatprep.subr.mxu0 0.0
    %2178 = vmatpush1.msra.mxu0 0.0
    %2179 = vmatprep.subr.mxu0 0.0
    %2180 = vmatpush1.msra.mxu0 0.0
    %2181 = vmatprep.subr.mxu0 0.0
    %2182 = vmatpush1.msra.mxu0 0.0
    %2183 = vmatprep.subr.mxu0 0.0
    %2184 = vmatpush1.msra.mxu0 0.0
    %2185 = vmatprep.subr.mxu0 0.0
    %2186 = vmatpush1.msra.mxu0 0.0
    %2187 = vmatprep.subr.mxu0 0.0
    %2188 = vmatpush1.msra.mxu0 0.0
    %2189 = vmatprep.subr.mxu0 0.0
    %2190 = vmatpush1.msra.mxu0 0.0
    %2191 = vmatprep.subr.mxu0 0.0
    %2192 = vmatpush1.msra.mxu0 0.0
    %2193 = vmatprep.subr.mxu0 0.0
    %2194 = vmatpush1.msra.mxu0 0.0
    %2195 = vmatprep.mubr.f32.mxu0 0.0
    %2196 = vmatmul.mubr.f32.gmra.mrb[0].mxu0 %v2129
    %v2197 = vpop.f32.mrb[0].mxu0
    %v2198 = vadd.f32 0.0, %v2197
    %v2199 = vpop.f32.mrb[0].mxu0
    %2200 = vdwg.mxu0
    %v2202 = vsel %vm546, %v2052, 0
    %2204 = vmatprep.subr.mxu0 0.0
    %2205 = vmatpush1.msra.mxu0 %v1958
    %2206 = vmatprep.subr.mxu0 0.0
    %2207 = vmatpush1.msra.mxu0 %v1959
    %2208 = vmatprep.subr.mxu0 0.0
    %2209 = vmatpush1.msra.mxu0 %v1960
    %2210 = vmatprep.subr.mxu0 0.0
    %2211 = vmatpush1.msra.mxu0 %v1961
    %2212 = vmatprep.subr.mxu0 0.0
    %2213 = vmatpush1.msra.mxu0 %v1962
    %2214 = vmatprep.subr.mxu0 0.0
    %2215 = vmatpush1.msra.mxu0 %v1963
    %2216 = vmatprep.subr.mxu0 0.0
    %2217 = vmatpush1.msra.mxu0 %v1964
    %2218 = vmatprep.subr.mxu0 0.0
    %2219 = vmatpush1.msra.mxu0 %v1965
    %2220 = vmatprep.subr.mxu0 0.0
    %2221 = vmatpush1.msra.mxu0 0.0
    %2222 = vmatprep.subr.mxu0 0.0
    %2223 = vmatpush1.msra.mxu0 0.0
    %2224 = vmatprep.subr.mxu0 0.0
    %2225 = vmatpush1.msra.mxu0 0.0
    %2226 = vmatprep.subr.mxu0 0.0
    %2227 = vmatpush1.msra.mxu0 0.0
    %2228 = vmatprep.subr.mxu0 0.0
    %2229 = vmatpush1.msra.mxu0 0.0
    %2230 = vmatprep.subr.mxu0 0.0
    %2231 = vmatpush1.msra.mxu0 0.0
    %2232 = vmatprep.subr.mxu0 0.0
    %2233 = vmatpush1.msra.mxu0 0.0
    %2234 = vmatprep.subr.mxu0 0.0
    %2235 = vmatpush1.msra.mxu0 0.0
    %2236 = vmatprep.subr.mxu0 0.0
    %2237 = vmatpush1.msra.mxu0 0.0
    %2238 = vmatprep.subr.mxu0 0.0
    %2239 = vmatpush1.msra.mxu0 0.0
    %2240 = vmatprep.subr.mxu0 0.0
    %2241 = vmatpush1.msra.mxu0 0.0
    %2242 = vmatprep.subr.mxu0 0.0
    %2243 = vmatpush1.msra.mxu0 0.0
    %2244 = vmatprep.subr.mxu0 0.0
    %2245 = vmatpush1.msra.mxu0 0.0
    %2246 = vmatprep.subr.mxu0 0.0
    %2247 = vmatpush1.msra.mxu0 0.0
    %2248 = vmatprep.subr.mxu0 0.0
    %2249 = vmatpush1.msra.mxu0 0.0
    %2250 = vmatprep.subr.mxu0 0.0
    %2251 = vmatpush1.msra.mxu0 0.0
    %2252 = vmatprep.subr.mxu0 0.0
    %2253 = vmatpush1.msra.mxu0 0.0
    %2254 = vmatprep.subr.mxu0 0.0
    %2255 = vmatpush1.msra.mxu0 0.0
    %2256 = vmatprep.subr.mxu0 0.0
    %2257 = vmatpush1.msra.mxu0 0.0
    %2258 = vmatprep.subr.mxu0 0.0
    %2259 = vmatpush1.msra.mxu0 0.0
    %2260 = vmatprep.subr.mxu0 0.0
    %2261 = vmatpush1.msra.mxu0 0.0
    %2262 = vmatprep.subr.mxu0 0.0
    %2263 = vmatpush1.msra.mxu0 0.0
    %2264 = vmatprep.subr.mxu0 0.0
    %2265 = vmatpush1.msra.mxu0 0.0
    %2266 = vmatprep.subr.mxu0 0.0
    %2267 = vmatpush1.msra.mxu0 0.0
    %2268 = vmatprep.mubr.f32.mxu0 0.0
    %2269 = vmatmul.mubr.f32.gmra.mrb[0].mxu0 %v2202
    %v2270 = vpop.f32.mrb[0].mxu0
    %v2271 = vadd.f32 %v2198, %v2270
    %v2272 = vpop.f32.mrb[0].mxu0
    %2273 = vdwg.mxu0
    %v2275 = vsel %vm926, %v1957, 0
    %2277 = vmatprep.subr.mxu0 0.0
    %2278 = vmatpush1.msra.mxu0 %v1953
    %2279 = vmatprep.subr.mxu0 0.0
    %2280 = vmatpush1.msra.mxu0 %v1954
    %2281 = vmatprep.subr.mxu0 0.0
    %2282 = vmatpush1.msra.mxu0 0.0
    %2283 = vmatprep.subr.mxu0 0.0
    %2284 = vmatpush1.msra.mxu0 0.0
    %2285 = vmatprep.subr.mxu0 0.0
    %2286 = vmatpush1.msra.mxu0 0.0
    %2287 = vmatprep.subr.mxu0 0.0
    %2288 = vmatpush1.msra.mxu0 0.0
    %2289 = vmatprep.subr.mxu0 0.0
    %2290 = vmatpush1.msra.mxu0 0.0
    %2291 = vmatprep.subr.mxu0 0.0
    %2292 = vmatpush1.msra.mxu0 0.0
    %2293 = vmatprep.subr.mxu0 0.0
    %2294 = vmatpush1.msra.mxu0 0.0
    %2295 = vmatprep.subr.mxu0 0.0
    %2296 = vmatpush1.msra.mxu0 0.0
    %2297 = vmatprep.subr.mxu0 0.0
    %2298 = vmatpush1.msra.mxu0 0.0
    %2299 = vmatprep.subr.mxu0 0.0
    %2300 = vmatpush1.msra.mxu0 0.0
    %2301 = vmatprep.subr.mxu0 0.0
    %2302 = vmatpush1.msra.mxu0 0.0
    %2303 = vmatprep.subr.mxu0 0.0
    %2304 = vmatpush1.msra.mxu0 0.0
    %2305 = vmatprep.subr.mxu0 0.0
    %2306 = vmatpush1.msra.mxu0 0.0
    %2307 = vmatprep.subr.mxu0 0.0
    %2308 = vmatpush1.msra.mxu0 0.0
    %2309 = vmatprep.subr.mxu0 0.0
    %2310 = vmatpush1.msra.mxu0 0.0
    %2311 = vmatprep.subr.mxu0 0.0
    %2312 = vmatpush1.msra.mxu0 0.0
    %2313 = vmatprep.subr.mxu0 0.0
    %2314 = vmatpush1.msra.mxu0 0.0
    %2315 = vmatprep.subr.mxu0 0.0
    %2316 = vmatpush1.msra.mxu0 0.0
    %2317 = vmatprep.subr.mxu0 0.0
    %2318 = vmatpush1.msra.mxu0 0.0
    %2319 = vmatprep.subr.mxu0 0.0
    %2320 = vmatpush1.msra.mxu0 0.0
    %2321 = vmatprep.subr.mxu0 0.0
    %2322 = vmatpush1.msra.mxu0 0.0
    %2323 = vmatprep.subr.mxu0 0.0
    %2324 = vmatpush1.msra.mxu0 0.0
    %2325 = vmatprep.subr.mxu0 0.0
    %2326 = vmatpush1.msra.mxu0 0.0
    %2327 = vmatprep.subr.mxu0 0.0
    %2328 = vmatpush1.msra.mxu0 0.0
    %2329 = vmatprep.subr.mxu0 0.0
    %2330 = vmatpush1.msra.mxu0 0.0
    %2331 = vmatprep.subr.mxu0 0.0
    %2332 = vmatpush1.msra.mxu0 0.0
    %2333 = vmatprep.subr.mxu0 0.0
    %2334 = vmatpush1.msra.mxu0 0.0
    %2335 = vmatprep.subr.mxu0 0.0
    %2336 = vmatpush1.msra.mxu0 0.0
    %2337 = vmatprep.subr.mxu0 0.0
    %2338 = vmatpush1.msra.mxu0 0.0
    %2339 = vmatprep.subr.mxu0 0.0
    %2340 = vmatpush1.msra.mxu0 0.0
    %2341 = vmatprep.mubr.f32.mxu0 0.0
    %2342 = vmatmul.mubr.f32.gmra.mrb[0].mxu0 %v2275
    %v2343 = vpop.f32.mrb[0].mxu0
    %v2344 = vadd.f32 0.0, %v2343
    %v2345 = vpop.f32.mrb[0].mxu0
    %2346 = vdwg.mxu0
    %v2348 = vsel %vm546, %v2344, 0
    %2350 = vmatprep.subr.mxu0 0.0
    %2351 = vmatpush1.msra.mxu0 %v1974
    %2352 = vmatprep.subr.mxu0 0.0
    %2353 = vmatpush1.msra.mxu0 %v1975
    %2354 = vmatprep.subr.mxu0 0.0
    %2355 = vmatpush1.msra.mxu0 %v1976
    %2356 = vmatprep.subr.mxu0 0.0
    %2357 = vmatpush1.msra.mxu0 %v1977
    %2358 = vmatprep.subr.mxu0 0.0
    %2359 = vmatpush1.msra.mxu0 %v1978
    %2360 = vmatprep.subr.mxu0 0.0
    %2361 = vmatpush1.msra.mxu0 %v1979
    %2362 = vmatprep.subr.mxu0 0.0
    %2363 = vmatpush1.msra.mxu0 %v1980
    %2364 = vmatprep.subr.mxu0 0.0
    %2365 = vmatpush1.msra.mxu0 %v1981
    %2366 = vmatprep.subr.mxu0 0.0
    %2367 = vmatpush1.msra.mxu0 0.0
    %2368 = vmatprep.subr.mxu0 0.0
    %2369 = vmatpush1.msra.mxu0 0.0
    %2370 = vmatprep.subr.mxu0 0.0
    %2371 = vmatpush1.msra.mxu0 0.0
    %2372 = vmatprep.subr.mxu0 0.0
    %2373 = vmatpush1.msra.mxu0 0.0
    %2374 = vmatprep.subr.mxu0 0.0
    %2375 = vmatpush1.msra.mxu0 0.0
    %2376 = vmatprep.subr.mxu0 0.0
    %2377 = vmatpush1.msra.mxu0 0.0
    %2378 = vmatprep.subr.mxu0 0.0
    %2379 = vmatpush1.msra.mxu0 0.0
    %2380 = vmatprep.subr.mxu0 0.0
    %2381 = vmatpush1.msra.mxu0 0.0
    %2382 = vmatprep.subr.mxu0 0.0
    %2383 = vmatpush1.msra.mxu0 0.0
    %2384 = vmatprep.subr.mxu0 0.0
    %2385 = vmatpush1.msra.mxu0 0.0
    %2386 = vmatprep.subr.mxu0 0.0
    %2387 = vmatpush1.msra.mxu0 0.0
    %2388 = vmatprep.subr.mxu0 0.0
    %2389 = vmatpush1.msra.mxu0 0.0
    %2390 = vmatprep.subr.mxu0 0.0
    %2391 = vmatpush1.msra.mxu0 0.0
    %2392 = vmatprep.subr.mxu0 0.0
    %2393 = vmatpush1.msra.mxu0 0.0
    %2394 = vmatprep.subr.mxu0 0.0
    %2395 = vmatpush1.msra.mxu0 0.0
    %2396 = vmatprep.subr.mxu0 0.0
    %2397 = vmatpush1.msra.mxu0 0.0
    %2398 = vmatprep.subr.mxu0 0.0
    %2399 = vmatpush1.msra.mxu0 0.0
    %2400 = vmatprep.subr.mxu0 0.0
    %2401 = vmatpush1.msra.mxu0 0.0
    %2402 = vmatprep.subr.mxu0 0.0
    %2403 = vmatpush1.msra.mxu0 0.0
    %2404 = vmatprep.subr.mxu0 0.0
    %2405 = vmatpush1.msra.mxu0 0.0
    %2406 = vmatprep.subr.mxu0 0.0
    %2407 = vmatpush1.msra.mxu0 0.0
    %2408 = vmatprep.subr.mxu0 0.0
    %2409 = vmatpush1.msra.mxu0 0.0
    %2410 = vmatprep.subr.mxu0 0.0
    %2411 = vmatpush1.msra.mxu0 0.0
    %2412 = vmatprep.subr.mxu0 0.0
    %2413 = vmatpush1.msra.mxu0 0.0
    %2414 = vmatprep.mubr.f32.mxu0 0.0
    %2415 = vmatmul.mubr.f32.gmra.mrb[0].mxu0 %v2348
    %v2416 = vpop.f32.mrb[0].mxu0
    %v2417 = vadd.f32 0.0, %v2416
    %v2418 = vpop.f32.mrb[0].mxu0
    %2419 = vdwg.mxu0
    %v2420 = vadd.f32 %v2271, %v2417
    %v2421 = vld [vmem:[#allocation19] sm:$0x1]
    %v2423 = vlaneseq
    %v2424 = vshrl.u32 %v2423, 7
    %v2425 = vsub.s32 0, %v2424
    %v2426 = vrot.slane %v2421, %v2425
    %v2428 = vadd.f32 %v2420, %v2426
    %v2429 = vxor.u32 %v2428, 2147483648
    %v2430 = vmul.f32 %v2429, 1.442695
    %v2431 = vpow.pop %v2430
    %v2432 = vadd.f32 %v2431, 1.0
    %v2433 = vrcp.pop %v2432
    %v2434 = vmul.f32 1.0, %v2433
    %v2435 = vmul.f32 %v2428, %v2434
    %v2436 = vld [vmem:[#allocation9] sm:$0xff]
    %v2437 = vld [vmem:[#allocation9 + $0x8] sm:$0xff]
    %v2438 = vld [vmem:[#allocation9 + $0x10] sm:$0xff]
    %v2439 = vld [vmem:[#allocation9 + $0x18] sm:$0xff]
    %v2440 = vld [vmem:[#allocation9 + $0x20] sm:$0xff]
    %v2441 = vld [vmem:[#allocation9 + $0x28] sm:$0xff]
    %v2442 = vld [vmem:[#allocation9 + $0x30] sm:$0xff]
    %v2443 = vld [vmem:[#allocation9 + $0x38] sm:$0xff]
    %v2444 = vld [vmem:[#allocation9 + $0x40] sm:$0xff]
    %v2445 = vld [vmem:[#allocation9 + $0x48] sm:$0xff]
    %v2446 = vld [vmem:[#allocation9 + $0x50] sm:$0xff]
    %v2447 = vld [vmem:[#allocation9 + $0x58] sm:$0xff]
    %v2448 = vld [vmem:[#allocation9 + $0x60] sm:$0xff]
    %v2449 = vld [vmem:[#allocation9 + $0x68] sm:$0xff]
    %v2450 = vld [vmem:[#allocation9 + $0x70] sm:$0xff]
    %v2451 = vld [vmem:[#allocation9 + $0x78] sm:$0xff]
    %v2452 = vld [vmem:[#allocation9 + $0x80] sm:$0xff]
    %v2453 = vld [vmem:[#allocation9 + $0x88] sm:$0xff]
    %v2454 = vld [vmem:[#allocation9 + $0x90] sm:$0xff]
    %v2455 = vld [vmem:[#allocation9 + $0x98] sm:$0xff]
    %v2456 = vld [vmem:[#allocation9 + $0xa0] sm:$0xff]
    %v2457 = vld [vmem:[#allocation9 + $0xa8] sm:$0xff]
    %v2458 = vld [vmem:[#allocation9 + $0xb0] sm:$0xff]
    %v2459 = vld [vmem:[#allocation9 + $0xb8] sm:$0xff]
    %2460 = vmatprep.subr.mxu0 0.0
    %2461 = vmatpush1.msra.mxu0 %v894
    %2462 = vmatprep.subr.mxu0 0.0
    %2463 = vmatpush1.msra.mxu0 %v895
    %2464 = vmatprep.subr.mxu0 0.0
    %2465 = vmatpush1.msra.mxu0 0.0
    %2466 = vmatprep.subr.mxu0 0.0
    %2467 = vmatpush1.msra.mxu0 0.0
    %2468 = vmatprep.subr.mxu0 0.0
    %2469 = vmatpush1.msra.mxu0 0.0
    %2470 = vmatprep.subr.mxu0 0.0
    %2471 = vmatpush1.msra.mxu0 0.0
    %2472 = vmatprep.subr.mxu0 0.0
    %2473 = vmatpush1.msra.mxu0 0.0
    %2474 = vmatprep.subr.mxu0 0.0
    %2475 = vmatpush1.msra.mxu0 0.0
    %2476 = vmatprep.subr.mxu0 0.0
    %2477 = vmatpush1.msra.mxu0 0.0
    %2478 = vmatprep.subr.mxu0 0.0
    %2479 = vmatpush1.msra.mxu0 0.0
    %2480 = vmatprep.subr.mxu0 0.0
    %2481 = vmatpush1.msra.mxu0 0.0
    %2482 = vmatprep.subr.mxu0 0.0
    %2483 = vmatpush1.msra.mxu0 0.0
    %2484 = vmatprep.subr.mxu0 0.0
    %2485 = vmatpush1.msra.mxu0 0.0
    %2486 = vmatprep.subr.mxu0 0.0
    %2487 = vmatpush1.msra.mxu0 0.0
    %2488 = vmatprep.subr.mxu0 0.0
    %2489 = vmatpush1.msra.mxu0 0.0
    %2490 = vmatprep.subr.mxu0 0.0
    %2491 = vmatpush1.msra.mxu0 0.0
    %2492 = vmatprep.subr.mxu0 0.0
    %2493 = vmatpush1.msra.mxu0 0.0
    %2494 = vmatprep.subr.mxu0 0.0
    %2495 = vmatpush1.msra.mxu0 0.0
    %2496 = vmatprep.subr.mxu0 0.0
    %2497 = vmatpush1.msra.mxu0 0.0
    %2498 = vmatprep.subr.mxu0 0.0
    %2499 = vmatpush1.msra.mxu0 0.0
    %2500 = vmatprep.subr.mxu0 0.0
    %2501 = vmatpush1.msra.mxu0 0.0
    %2502 = vmatprep.subr.mxu0 0.0
    %2503 = vmatpush1.msra.mxu0 0.0
    %2504 = vmatprep.subr.mxu0 0.0
    %2505 = vmatpush1.msra.mxu0 0.0
    %2506 = vmatprep.subr.mxu0 0.0
    %2507 = vmatpush1.msra.mxu0 0.0
    %2508 = vmatprep.subr.mxu0 0.0
    %2509 = vmatpush1.msra.mxu0 0.0
    %2510 = vmatprep.subr.mxu0 0.0
    %2511 = vmatpush1.msra.mxu0 0.0
    %2512 = vmatprep.subr.mxu0 0.0
    %2513 = vmatpush1.msra.mxu0 0.0
    %2514 = vmatprep.subr.mxu0 0.0
    %2515 = vmatpush1.msra.mxu0 0.0
    %2516 = vmatprep.subr.mxu0 0.0
    %2517 = vmatpush1.msra.mxu0 0.0
    %2518 = vmatprep.subr.mxu0 0.0
    %2519 = vmatpush1.msra.mxu0 0.0
    %2520 = vmatprep.subr.mxu0 0.0
    %2521 = vmatpush1.msra.mxu0 0.0
    %2522 = vmatprep.subr.mxu0 0.0
    %2523 = vmatpush1.msra.mxu0 0.0
    %2524 = vmatprep.mubr.f32.mxu0 0.0
    %2525 = vmatmul.mubr.f32.gmra.mrb[0].mxu0 %v1983
    %v2526 = vpop.f32.mrb[0].mxu0
    %v2527 = vadd.f32 0.0, %v2526
    %v2528 = vpop.f32.mrb[0].mxu0
    %2529 = vdwg.mxu0
    %2530 = vmatprep.subr.mxu0 0.0
    %2531 = vmatpush1.msra.mxu0 %v894
    %2532 = vmatprep.subr.mxu0 0.0
    %2533 = vmatpush1.msra.mxu0 %v895
    %2534 = vmatprep.subr.mxu0 0.0
    %2535 = vmatpush1.msra.mxu0 0.0
    %2536 = vmatprep.subr.mxu0 0.0
    %2537 = vmatpush1.msra.mxu0 0.0
    %2538 = vmatprep.subr.mxu0 0.0
    %2539 = vmatpush1.msra.mxu0 0.0
    %2540 = vmatprep.subr.mxu0 0.0
    %2541 = vmatpush1.msra.mxu0 0.0
    %2542 = vmatprep.subr.mxu0 0.0
    %2543 = vmatpush1.msra.mxu0 0.0
    %2544 = vmatprep.subr.mxu0 0.0
    %2545 = vmatpush1.msra.mxu0 0.0
    %2546 = vmatprep.subr.mxu0 0.0
    %2547 = vmatpush1.msra.mxu0 0.0
    %2548 = vmatprep.subr.mxu0 0.0
    %2549 = vmatpush1.msra.mxu0 0.0
    %2550 = vmatprep.subr.mxu0 0.0
    %2551 = vmatpush1.msra.mxu0 0.0
    %2552 = vmatprep.subr.mxu0 0.0
    %2553 = vmatpush1.msra.mxu0 0.0
    %2554 = vmatprep.subr.mxu0 0.0
    %2555 = vmatpush1.msra.mxu0 0.0
    %2556 = vmatprep.subr.mxu0 0.0
    %2557 = vmatpush1.msra.mxu0 0.0
    %2558 = vmatprep.subr.mxu0 0.0
    %2559 = vmatpush1.msra.mxu0 0.0
    %2560 = vmatprep.subr.mxu0 0.0
    %2561 = vmatpush1.msra.mxu0 0.0
    %2562 = vmatprep.subr.mxu0 0.0
    %2563 = vmatpush1.msra.mxu0 0.0
    %2564 = vmatprep.subr.mxu0 0.0
    %2565 = vmatpush1.msra.mxu0 0.0
    %2566 = vmatprep.subr.mxu0 0.0
    %2567 = vmatpush1.msra.mxu0 0.0
    %2568 = vmatprep.subr.mxu0 0.0
    %2569 = vmatpush1.msra.mxu0 0.0
    %2570 = vmatprep.subr.mxu0 0.0
    %2571 = vmatpush1.msra.mxu0 0.0
    %2572 = vmatprep.subr.mxu0 0.0
    %2573 = vmatpush1.msra.mxu0 0.0
    %2574 = vmatprep.subr.mxu0 0.0
    %2575 = vmatpush1.msra.mxu0 0.0
    %2576 = vmatprep.subr.mxu0 0.0
    %2577 = vmatpush1.msra.mxu0 0.0
    %2578 = vmatprep.subr.mxu0 0.0
    %2579 = vmatpush1.msra.mxu0 0.0
    %2580 = vmatprep.subr.mxu0 0.0
    %2581 = vmatpush1.msra.mxu0 0.0
    %2582 = vmatprep.subr.mxu0 0.0
    %2583 = vmatpush1.msra.mxu0 0.0
    %2584 = vmatprep.subr.mxu0 0.0
    %2585 = vmatpush1.msra.mxu0 0.0
    %2586 = vmatprep.subr.mxu0 0.0
    %2587 = vmatpush1.msra.mxu0 0.0
    %2588 = vmatprep.subr.mxu0 0.0
    %2589 = vmatpush1.msra.mxu0 0.0
    %2590 = vmatprep.subr.mxu0 0.0
    %2591 = vmatpush1.msra.mxu0 0.0
    %2592 = vmatprep.subr.mxu0 0.0
    %2593 = vmatpush1.msra.mxu0 0.0
    %2594 = vmatprep.mubr.f32.mxu0 0.0
    %2595 = vmatmul.mubr.f32.gmra.mrb[0].mxu0 %v2056
    %v2596 = vpop.f32.mrb[0].mxu0
    %v2597 = vadd.f32 0.0, %v2596
    %v2598 = vpop.f32.mrb[0].mxu0
    %2599 = vdwg.mxu0
    %v2601 = vsel %vm546, %v2597, 0
    %2603 = vmatprep.subr.mxu0 0.0
    %2604 = vmatpush1.msra.mxu0 %v2444
    %2605 = vmatprep.subr.mxu0 0.0
    %2606 = vmatpush1.msra.mxu0 %v2445
    %2607 = vmatprep.subr.mxu0 0.0
    %2608 = vmatpush1.msra.mxu0 %v2446
    %2609 = vmatprep.subr.mxu0 0.0
    %2610 = vmatpush1.msra.mxu0 %v2447
    %2611 = vmatprep.subr.mxu0 0.0
    %2612 = vmatpush1.msra.mxu0 %v2448
    %2613 = vmatprep.subr.mxu0 0.0
    %2614 = vmatpush1.msra.mxu0 %v2449
    %2615 = vmatprep.subr.mxu0 0.0
    %2616 = vmatpush1.msra.mxu0 %v2450
    %2617 = vmatprep.subr.mxu0 0.0
    %2618 = vmatpush1.msra.mxu0 %v2451
    %2619 = vmatprep.subr.mxu0 0.0
    %2620 = vmatpush1.msra.mxu0 0.0
    %2621 = vmatprep.subr.mxu0 0.0
    %2622 = vmatpush1.msra.mxu0 0.0
    %2623 = vmatprep.subr.mxu0 0.0
    %2624 = vmatpush1.msra.mxu0 0.0
    %2625 = vmatprep.subr.mxu0 0.0
    %2626 = vmatpush1.msra.mxu0 0.0
    %2627 = vmatprep.subr.mxu0 0.0
    %2628 = vmatpush1.msra.mxu0 0.0
    %2629 = vmatprep.subr.mxu0 0.0
    %2630 = vmatpush1.msra.mxu0 0.0
    %2631 = vmatprep.subr.mxu0 0.0
    %2632 = vmatpush1.msra.mxu0 0.0
    %2633 = vmatprep.subr.mxu0 0.0
    %2634 = vmatpush1.msra.mxu0 0.0
    %2635 = vmatprep.subr.mxu0 0.0
    %2636 = vmatpush1.msra.mxu0 0.0
    %2637 = vmatprep.subr.mxu0 0.0
    %2638 = vmatpush1.msra.mxu0 0.0
    %2639 = vmatprep.subr.mxu0 0.0
    %2640 = vmatpush1.msra.mxu0 0.0
    %2641 = vmatprep.subr.mxu0 0.0
    %2642 = vmatpush1.msra.mxu0 0.0
    %2643 = vmatprep.subr.mxu0 0.0
    %2644 = vmatpush1.msra.mxu0 0.0
    %2645 = vmatprep.subr.mxu0 0.0
    %2646 = vmatpush1.msra.mxu0 0.0
    %2647 = vmatprep.subr.mxu0 0.0
    %2648 = vmatpush1.msra.mxu0 0.0
    %2649 = vmatprep.subr.mxu0 0.0
    %2650 = vmatpush1.msra.mxu0 0.0
    %2651 = vmatprep.subr.mxu0 0.0
    %2652 = vmatpush1.msra.mxu0 0.0
    %2653 = vmatprep.subr.mxu0 0.0
    %2654 = vmatpush1.msra.mxu0 0.0
    %2655 = vmatprep.subr.mxu0 0.0
    %2656 = vmatpush1.msra.mxu0 0.0
    %2657 = vmatprep.subr.mxu0 0.0
    %2658 = vmatpush1.msra.mxu0 0.0
    %2659 = vmatprep.subr.mxu0 0.0
    %2660 = vmatpush1.msra.mxu0 0.0
    %2661 = vmatprep.subr.mxu0 0.0
    %2662 = vmatpush1.msra.mxu0 0.0
    %2663 = vmatprep.subr.mxu0 0.0
    %2664 = vmatpush1.msra.mxu0 0.0
    %2665 = vmatprep.subr.mxu0 0.0
    %2666 = vmatpush1.msra.mxu0 0.0
    %2667 = vmatprep.mubr.f32.mxu0 0.0
    %2668 = vmatmul.mubr.f32.gmra.mrb[0].mxu0 %v2601
    %v2669 = vpop.f32.mrb[0].mxu0
    %v2670 = vadd.f32 0.0, %v2669
    %v2671 = vpop.f32.mrb[0].mxu0
    %2672 = vdwg.mxu0
    %v2674 = vsel %vm546, %v2527, 0
    %2676 = vmatprep.subr.mxu0 0.0
    %2677 = vmatpush1.msra.mxu0 %v2436
    %2678 = vmatprep.subr.mxu0 0.0
    %2679 = vmatpush1.msra.mxu0 %v2437
    %2680 = vmatprep.subr.mxu0 0.0
    %2681 = vmatpush1.msra.mxu0 %v2438
    %2682 = vmatprep.subr.mxu0 0.0
    %2683 = vmatpush1.msra.mxu0 %v2439
    %2684 = vmatprep.subr.mxu0 0.0
    %2685 = vmatpush1.msra.mxu0 %v2440
    %2686 = vmatprep.subr.mxu0 0.0
    %2687 = vmatpush1.msra.mxu0 %v2441
    %2688 = vmatprep.subr.mxu0 0.0
    %2689 = vmatpush1.msra.mxu0 %v2442
    %2690 = vmatprep.subr.mxu0 0.0
    %2691 = vmatpush1.msra.mxu0 %v2443
    %2692 = vmatprep.subr.mxu0 0.0
    %2693 = vmatpush1.msra.mxu0 0.0
    %2694 = vmatprep.subr.mxu0 0.0
    %2695 = vmatpush1.msra.mxu0 0.0
    %2696 = vmatprep.subr.mxu0 0.0
    %2697 = vmatpush1.msra.mxu0 0.0
    %2698 = vmatprep.subr.mxu0 0.0
    %2699 = vmatpush1.msra.mxu0 0.0
    %2700 = vmatprep.subr.mxu0 0.0
    %2701 = vmatpush1.msra.mxu0 0.0
    %2702 = vmatprep.subr.mxu0 0.0
    %2703 = vmatpush1.msra.mxu0 0.0
    %2704 = vmatprep.subr.mxu0 0.0
    %2705 = vmatpush1.msra.mxu0 0.0
    %2706 = vmatprep.subr.mxu0 0.0
    %2707 = vmatpush1.msra.mxu0 0.0
    %2708 = vmatprep.subr.mxu0 0.0
    %2709 = vmatpush1.msra.mxu0 0.0
    %2710 = vmatprep.subr.mxu0 0.0
    %2711 = vmatpush1.msra.mxu0 0.0
    %2712 = vmatprep.subr.mxu0 0.0
    %2713 = vmatpush1.msra.mxu0 0.0
    %2714 = vmatprep.subr.mxu0 0.0
    %2715 = vmatpush1.msra.mxu0 0.0
    %2716 = vmatprep.subr.mxu0 0.0
    %2717 = vmatpush1.msra.mxu0 0.0
    %2718 = vmatprep.subr.mxu0 0.0
    %2719 = vmatpush1.msra.mxu0 0.0
    %2720 = vmatprep.subr.mxu0 0.0
    %2721 = vmatpush1.msra.mxu0 0.0
    %2722 = vmatprep.subr.mxu0 0.0
    %2723 = vmatpush1.msra.mxu0 0.0
    %2724 = vmatprep.subr.mxu0 0.0
    %2725 = vmatpush1.msra.mxu0 0.0
    %2726 = vmatprep.subr.mxu0 0.0
    %2727 = vmatpush1.msra.mxu0 0.0
    %2728 = vmatprep.subr.mxu0 0.0
    %2729 = vmatpush1.msra.mxu0 0.0
    %2730 = vmatprep.subr.mxu0 0.0
    %2731 = vmatpush1.msra.mxu0 0.0
    %2732 = vmatprep.subr.mxu0 0.0
    %2733 = vmatpush1.msra.mxu0 0.0
    %2734 = vmatprep.subr.mxu0 0.0
    %2735 = vmatpush1.msra.mxu0 0.0
    %2736 = vmatprep.subr.mxu0 0.0
    %2737 = vmatpush1.msra.mxu0 0.0
    %2738 = vmatprep.subr.mxu0 0.0
    %2739 = vmatpush1.msra.mxu0 0.0
    %2740 = vmatprep.mubr.f32.mxu0 0.0
    %2741 = vmatmul.mubr.f32.gmra.mrb[0].mxu0 %v2674
    %v2742 = vpop.f32.mrb[0].mxu0
    %v2743 = vadd.f32 %v2670, %v2742
    %v2744 = vpop.f32.mrb[0].mxu0
    %2745 = vdwg.mxu0
    %2746 = vmatprep.subr.mxu0 0.0
    %2747 = vmatpush1.msra.mxu0 %v894
    %2748 = vmatprep.subr.mxu0 0.0
    %2749 = vmatpush1.msra.mxu0 %v895
    %2750 = vmatprep.subr.mxu0 0.0
    %2751 = vmatpush1.msra.mxu0 0.0
    %2752 = vmatprep.subr.mxu0 0.0
    %2753 = vmatpush1.msra.mxu0 0.0
    %2754 = vmatprep.subr.mxu0 0.0
    %2755 = vmatpush1.msra.mxu0 0.0
    %2756 = vmatprep.subr.mxu0 0.0
    %2757 = vmatpush1.msra.mxu0 0.0
    %2758 = vmatprep.subr.mxu0 0.0
    %2759 = vmatpush1.msra.mxu0 0.0
    %2760 = vmatprep.subr.mxu0 0.0
    %2761 = vmatpush1.msra.mxu0 0.0
    %2762 = vmatprep.subr.mxu0 0.0
    %2763 = vmatpush1.msra.mxu0 0.0
    %2764 = vmatprep.subr.mxu0 0.0
    %2765 = vmatpush1.msra.mxu0 0.0
    %2766 = vmatprep.subr.mxu0 0.0
    %2767 = vmatpush1.msra.mxu0 0.0
    %2768 = vmatprep.subr.mxu0 0.0
    %2769 = vmatpush1.msra.mxu0 0.0
    %2770 = vmatprep.subr.mxu0 0.0
    %2771 = vmatpush1.msra.mxu0 0.0
    %2772 = vmatprep.subr.mxu0 0.0
    %2773 = vmatpush1.msra.mxu0 0.0
    %2774 = vmatprep.subr.mxu0 0.0
    %2775 = vmatpush1.msra.mxu0 0.0
    %2776 = vmatprep.subr.mxu0 0.0
    %2777 = vmatpush1.msra.mxu0 0.0
    %2778 = vmatprep.subr.mxu0 0.0
    %2779 = vmatpush1.msra.mxu0 0.0
    %2780 = vmatprep.subr.mxu0 0.0
    %2781 = vmatpush1.msra.mxu0 0.0
    %2782 = vmatprep.subr.mxu0 0.0
    %2783 = vmatpush1.msra.mxu0 0.0
    %2784 = vmatprep.subr.mxu0 0.0
    %2785 = vmatpush1.msra.mxu0 0.0
    %2786 = vmatprep.subr.mxu0 0.0
    %2787 = vmatpush1.msra.mxu0 0.0
    %2788 = vmatprep.subr.mxu0 0.0
    %2789 = vmatpush1.msra.mxu0 0.0
    %2790 = vmatprep.subr.mxu0 0.0
    %2791 = vmatpush1.msra.mxu0 0.0
    %2792 = vmatprep.subr.mxu0 0.0
    %2793 = vmatpush1.msra.mxu0 0.0
    %2794 = vmatprep.subr.mxu0 0.0
    %2795 = vmatpush1.msra.mxu0 0.0
    %2796 = vmatprep.subr.mxu0 0.0
    %2797 = vmatpush1.msra.mxu0 0.0
    %2798 = vmatprep.subr.mxu0 0.0
    %2799 = vmatpush1.msra.mxu0 0.0
    %2800 = vmatprep.subr.mxu0 0.0
    %2801 = vmatpush1.msra.mxu0 0.0
    %2802 = vmatprep.subr.mxu0 0.0
    %2803 = vmatpush1.msra.mxu0 0.0
    %2804 = vmatprep.subr.mxu0 0.0
    %2805 = vmatpush1.msra.mxu0 0.0
    %2806 = vmatprep.subr.mxu0 0.0
    %2807 = vmatpush1.msra.mxu0 0.0
    %2808 = vmatprep.subr.mxu0 0.0
    %2809 = vmatpush1.msra.mxu0 0.0
    %2810 = vmatprep.mubr.f32.mxu0 0.0
    %2811 = vmatmul.mubr.f32.gmra.mrb[0].mxu0 %v2275
    %v2812 = vpop.f32.mrb[0].mxu0
    %v2813 = vadd.f32 0.0, %v2812
    %v2814 = vpop.f32.mrb[0].mxu0
    %2815 = vdwg.mxu0
    %v2817 = vsel %vm546, %v2813, 0
    %2819 = vmatprep.subr.mxu0 0.0
    %2820 = vmatpush1.msra.mxu0 %v2452
    %2821 = vmatprep.subr.mxu0 0.0
    %2822 = vmatpush1.msra.mxu0 %v2453
    %2823 = vmatprep.subr.mxu0 0.0
    %2824 = vmatpush1.msra.mxu0 %v2454
    %2825 = vmatprep.subr.mxu0 0.0
    %2826 = vmatpush1.msra.mxu0 %v2455
    %2827 = vmatprep.subr.mxu0 0.0
    %2828 = vmatpush1.msra.mxu0 %v2456
    %2829 = vmatprep.subr.mxu0 0.0
    %2830 = vmatpush1.msra.mxu0 %v2457
    %2831 = vmatprep.subr.mxu0 0.0
    %2832 = vmatpush1.msra.mxu0 %v2458
    %2833 = vmatprep.subr.mxu0 0.0
    %2834 = vmatpush1.msra.mxu0 %v2459
    %2835 = vmatprep.subr.mxu0 0.0
    %2836 = vmatpush1.msra.mxu0 0.0
    %2837 = vmatprep.subr.mxu0 0.0
    %2838 = vmatpush1.msra.mxu0 0.0
    %2839 = vmatprep.subr.mxu0 0.0
    %2840 = vmatpush1.msra.mxu0 0.0
    %2841 = vmatprep.subr.mxu0 0.0
    %2842 = vmatpush1.msra.mxu0 0.0
    %2843 = vmatprep.subr.mxu0 0.0
    %2844 = vmatpush1.msra.mxu0 0.0
    %2845 = vmatprep.subr.mxu0 0.0
    %2846 = vmatpush1.msra.mxu0 0.0
    %2847 = vmatprep.subr.mxu0 0.0
    %2848 = vmatpush1.msra.mxu0 0.0
    %2849 = vmatprep.subr.mxu0 0.0
    %2850 = vmatpush1.msra.mxu0 0.0
    %2851 = vmatprep.subr.mxu0 0.0
    %2852 = vmatpush1.msra.mxu0 0.0
    %2853 = vmatprep.subr.mxu0 0.0
    %2854 = vmatpush1.msra.mxu0 0.0
    %2855 = vmatprep.subr.mxu0 0.0
    %2856 = vmatpush1.msra.mxu0 0.0
    %2857 = vmatprep.subr.mxu0 0.0
    %2858 = vmatpush1.msra.mxu0 0.0
    %2859 = vmatprep.subr.mxu0 0.0
    %2860 = vmatpush1.msra.mxu0 0.0
    %2861 = vmatprep.subr.mxu0 0.0
    %2862 = vmatpush1.msra.mxu0 0.0
    %2863 = vmatprep.subr.mxu0 0.0
    %2864 = vmatpush1.msra.mxu0 0.0
    %2865 = vmatprep.subr.mxu0 0.0
    %2866 = vmatpush1.msra.mxu0 0.0
    %2867 = vmatprep.subr.mxu0 0.0
    %2868 = vmatpush1.msra.mxu0 0.0
    %2869 = vmatprep.subr.mxu0 0.0
    %2870 = vmatpush1.msra.mxu0 0.0
    %2871 = vmatprep.subr.mxu0 0.0
    %2872 = vmatpush1.msra.mxu0 0.0
    %2873 = vmatprep.subr.mxu0 0.0
    %2874 = vmatpush1.msra.mxu0 0.0
    %2875 = vmatprep.subr.mxu0 0.0
    %2876 = vmatpush1.msra.mxu0 0.0
    %2877 = vmatprep.subr.mxu0 0.0
    %2878 = vmatpush1.msra.mxu0 0.0
    %2879 = vmatprep.subr.mxu0 0.0
    %2880 = vmatpush1.msra.mxu0 0.0
    %2881 = vmatprep.subr.mxu0 0.0
    %2882 = vmatpush1.msra.mxu0 0.0
    %2883 = vmatprep.mubr.f32.mxu0 0.0
    %2884 = vmatmul.mubr.f32.gmra.mrb[0].mxu0 %v2817
    %v2885 = vpop.f32.mrb[0].mxu0
    %v2886 = vadd.f32 0.0, %v2885
    %v2887 = vpop.f32.mrb[0].mxu0
    %2888 = vdwg.mxu0
    %v2889 = vadd.f32 %v2743, %v2886
    %v2890 = vld [vmem:[#allocation21] sm:$0x1]
    %v2892 = vlaneseq
    %v2893 = vshrl.u32 %v2892, 7
    %v2894 = vsub.s32 0, %v2893
    %v2895 = vrot.slane %v2890, %v2894
    %v2897 = vadd.f32 %v2889, %v2895
    %v2898 = vxor.u32 %v2897, 2147483648
    %v2899 = vmul.f32 %v2898, 1.442695
    %v2900 = vpow.pop %v2899
    %v2901 = vadd.f32 %v2900, 1.0
    %v2902 = vrcp.pop %v2901
    %v2903 = vmul.f32 1.0, %v2902
    %v2904 = vmul.f32 %v2897, %v2903
    %v2905 = vld [vmem:[#allocation6] sm:$0xff]
    %v2906 = vld [vmem:[#allocation6 + $0x8] sm:$0xff]
    %v2907 = vld [vmem:[#allocation6 + $0x10] sm:$0xff]
    %v2908 = vld [vmem:[#allocation10] sm:$0xff]
    %v2909 = vld [vmem:[#allocation10 + $0x8] sm:$0xff]
    %v2910 = vld [vmem:[#allocation10 + $0x10] sm:$0xff]
    %v2911 = vld [vmem:[#allocation10 + $0x18] sm:$0xff]
    %v2912 = vld [vmem:[#allocation10 + $0x20] sm:$0xff]
    %v2913 = vld [vmem:[#allocation10 + $0x28] sm:$0xff]
    %v2914 = vld [vmem:[#allocation10 + $0x30] sm:$0xff]
    %v2915 = vld [vmem:[#allocation10 + $0x38] sm:$0xff]
    %v2916 = vld [vmem:[#allocation10 + $0x40] sm:$0xff]
    %v2917 = vld [vmem:[#allocation10 + $0x48] sm:$0xff]
    %v2918 = vld [vmem:[#allocation10 + $0x50] sm:$0xff]
    %v2919 = vld [vmem:[#allocation10 + $0x58] sm:$0xff]
    %v2920 = vld [vmem:[#allocation10 + $0x60] sm:$0xff]
    %v2921 = vld [vmem:[#allocation10 + $0x68] sm:$0xff]
    %v2922 = vld [vmem:[#allocation10 + $0x70] sm:$0xff]
    %v2923 = vld [vmem:[#allocation10 + $0x78] sm:$0xff]
    %v2924 = vld [vmem:[#allocation10 + $0x80] sm:$0xff]
    %v2925 = vld [vmem:[#allocation10 + $0x88] sm:$0xff]
    %v2926 = vld [vmem:[#allocation10 + $0x90] sm:$0xff]
    %v2927 = vld [vmem:[#allocation10 + $0x98] sm:$0xff]
    %v2928 = vld [vmem:[#allocation10 + $0xa0] sm:$0xff]
    %v2929 = vld [vmem:[#allocation10 + $0xa8] sm:$0xff]
    %v2930 = vld [vmem:[#allocation10 + $0xb0] sm:$0xff]
    %v2931 = vld [vmem:[#allocation10 + $0xb8] sm:$0xff]
    %vm2932 = vcmask 64512
    %v2934 = vsel %vm2932, %v2905, 0
    %2936 = vmatprep.subr.mxu0 0.0
    %2937 = vmatpush1.msra.mxu0 %v2904
    %2938 = vmatprep.subr.mxu0 0.0
    %2939 = vmatpush1.msra.mxu0 0.0
    %2940 = vmatprep.subr.mxu0 0.0
    %2941 = vmatpush1.msra.mxu0 0.0
    %2942 = vmatprep.subr.mxu0 0.0
    %2943 = vmatpush1.msra.mxu0 0.0
    %2944 = vmatprep.subr.mxu0 0.0
    %2945 = vmatpush1.msra.mxu0 0.0
    %2946 = vmatprep.subr.mxu0 0.0
    %2947 = vmatpush1.msra.mxu0 0.0
    %2948 = vmatprep.subr.mxu0 0.0
    %2949 = vmatpush1.msra.mxu0 0.0
    %2950 = vmatprep.subr.mxu0 0.0
    %2951 = vmatpush1.msra.mxu0 0.0
    %2952 = vmatprep.subr.mxu0 0.0
    %2953 = vmatpush1.msra.mxu0 0.0
    %2954 = vmatprep.subr.mxu0 0.0
    %2955 = vmatpush1.msra.mxu0 0.0
    %2956 = vmatprep.subr.mxu0 0.0
    %2957 = vmatpush1.msra.mxu0 0.0
    %2958 = vmatprep.subr.mxu0 0.0
    %2959 = vmatpush1.msra.mxu0 0.0
    %2960 = vmatprep.subr.mxu0 0.0
    %2961 = vmatpush1.msra.mxu0 0.0
    %2962 = vmatprep.subr.mxu0 0.0
    %2963 = vmatpush1.msra.mxu0 0.0
    %2964 = vmatprep.subr.mxu0 0.0
    %2965 = vmatpush1.msra.mxu0 0.0
    %2966 = vmatprep.subr.mxu0 0.0
    %2967 = vmatpush1.msra.mxu0 0.0
    %2968 = vmatprep.subr.mxu0 0.0
    %2969 = vmatpush1.msra.mxu0 0.0
    %2970 = vmatprep.subr.mxu0 0.0
    %2971 = vmatpush1.msra.mxu0 0.0
    %2972 = vmatprep.subr.mxu0 0.0
    %2973 = vmatpush1.msra.mxu0 0.0
    %2974 = vmatprep.subr.mxu0 0.0
    %2975 = vmatpush1.msra.mxu0 0.0
    %2976 = vmatprep.subr.mxu0 0.0
    %2977 = vmatpush1.msra.mxu0 0.0
    %2978 = vmatprep.subr.mxu0 0.0
    %2979 = vmatpush1.msra.mxu0 0.0
    %2980 = vmatprep.subr.mxu0 0.0
    %2981 = vmatpush1.msra.mxu0 0.0
    %2982 = vmatprep.subr.mxu0 0.0
    %2983 = vmatpush1.msra.mxu0 0.0
    %2984 = vmatprep.subr.mxu0 0.0
    %2985 = vmatpush1.msra.mxu0 0.0
    %2986 = vmatprep.subr.mxu0 0.0
    %2987 = vmatpush1.msra.mxu0 0.0
    %2988 = vmatprep.subr.mxu0 0.0
    %2989 = vmatpush1.msra.mxu0 0.0
    %2990 = vmatprep.subr.mxu0 0.0
    %2991 = vmatpush1.msra.mxu0 0.0
    %2992 = vmatprep.subr.mxu0 0.0
    %2993 = vmatpush1.msra.mxu0 0.0
    %2994 = vmatprep.subr.mxu0 0.0
    %2995 = vmatpush1.msra.mxu0 0.0
    %2996 = vmatprep.subr.mxu0 0.0
    %2997 = vmatpush1.msra.mxu0 0.0
    %2998 = vmatprep.subr.mxu0 0.0
    %2999 = vmatpush1.msra.mxu0 0.0
    %3000 = vmatprep.mubr.f32.mxu0 0.0
    %3001 = vmatmul.mubr.f32.gmra.mrb[0].mxu0 %v2934
    %v3002 = vpop.f32.mrb[0].mxu0
    %v3003 = vadd.f32 0.0, %v3002
    %v3004 = vpop.f32.mrb[0].mxu0
    %3005 = vdwg.mxu0
    %v3007 = vsel %vm2932, %v2906, 0
    %3009 = vmatprep.subr.mxu0 0.0
    %3010 = vmatpush1.msra.mxu0 %v2904
    %3011 = vmatprep.subr.mxu0 0.0
    %3012 = vmatpush1.msra.mxu0 0.0
    %3013 = vmatprep.subr.mxu0 0.0
    %3014 = vmatpush1.msra.mxu0 0.0
    %3015 = vmatprep.subr.mxu0 0.0
    %3016 = vmatpush1.msra.mxu0 0.0
    %3017 = vmatprep.subr.mxu0 0.0
    %3018 = vmatpush1.msra.mxu0 0.0
    %3019 = vmatprep.subr.mxu0 0.0
    %3020 = vmatpush1.msra.mxu0 0.0
    %3021 = vmatprep.subr.mxu0 0.0
    %3022 = vmatpush1.msra.mxu0 0.0
    %3023 = vmatprep.subr.mxu0 0.0
    %3024 = vmatpush1.msra.mxu0 0.0
    %3025 = vmatprep.subr.mxu0 0.0
    %3026 = vmatpush1.msra.mxu0 0.0
    %3027 = vmatprep.subr.mxu0 0.0
    %3028 = vmatpush1.msra.mxu0 0.0
    %3029 = vmatprep.subr.mxu0 0.0
    %3030 = vmatpush1.msra.mxu0 0.0
    %3031 = vmatprep.subr.mxu0 0.0
    %3032 = vmatpush1.msra.mxu0 0.0
    %3033 = vmatprep.subr.mxu0 0.0
    %3034 = vmatpush1.msra.mxu0 0.0
    %3035 = vmatprep.subr.mxu0 0.0
    %3036 = vmatpush1.msra.mxu0 0.0
    %3037 = vmatprep.subr.mxu0 0.0
    %3038 = vmatpush1.msra.mxu0 0.0
    %3039 = vmatprep.subr.mxu0 0.0
    %3040 = vmatpush1.msra.mxu0 0.0
    %3041 = vmatprep.subr.mxu0 0.0
    %3042 = vmatpush1.msra.mxu0 0.0
    %3043 = vmatprep.subr.mxu0 0.0
    %3044 = vmatpush1.msra.mxu0 0.0
    %3045 = vmatprep.subr.mxu0 0.0
    %3046 = vmatpush1.msra.mxu0 0.0
    %3047 = vmatprep.subr.mxu0 0.0
    %3048 = vmatpush1.msra.mxu0 0.0
    %3049 = vmatprep.subr.mxu0 0.0
    %3050 = vmatpush1.msra.mxu0 0.0
    %3051 = vmatprep.subr.mxu0 0.0
    %3052 = vmatpush1.msra.mxu0 0.0
    %3053 = vmatprep.subr.mxu0 0.0
    %3054 = vmatpush1.msra.mxu0 0.0
    %3055 = vmatprep.subr.mxu0 0.0
    %3056 = vmatpush1.msra.mxu0 0.0
    %3057 = vmatprep.subr.mxu0 0.0
    %3058 = vmatpush1.msra.mxu0 0.0
    %3059 = vmatprep.subr.mxu0 0.0
    %3060 = vmatpush1.msra.mxu0 0.0
    %3061 = vmatprep.subr.mxu0 0.0
    %3062 = vmatpush1.msra.mxu0 0.0
    %3063 = vmatprep.subr.mxu0 0.0
    %3064 = vmatpush1.msra.mxu0 0.0
    %3065 = vmatprep.subr.mxu0 0.0
    %3066 = vmatpush1.msra.mxu0 0.0
    %3067 = vmatprep.subr.mxu0 0.0
    %3068 = vmatpush1.msra.mxu0 0.0
    %3069 = vmatprep.subr.mxu0 0.0
    %3070 = vmatpush1.msra.mxu0 0.0
    %3071 = vmatprep.subr.mxu0 0.0
    %3072 = vmatpush1.msra.mxu0 0.0
    %3073 = vmatprep.mubr.f32.mxu0 0.0
    %3074 = vmatmul.mubr.f32.gmra.mrb[0].mxu0 %v3007
    %v3075 = vpop.f32.mrb[0].mxu0
    %v3076 = vadd.f32 0.0, %v3075
    %v3077 = vpop.f32.mrb[0].mxu0
    %3078 = vdwg.mxu0
    %v3080 = vsel %vm546, %v3076, 0
    %3082 = vmatprep.subr.mxu0 0.0
    %3083 = vmatpush1.msra.mxu0 %v2916
    %3084 = vmatprep.subr.mxu0 0.0
    %3085 = vmatpush1.msra.mxu0 %v2917
    %3086 = vmatprep.subr.mxu0 0.0
    %3087 = vmatpush1.msra.mxu0 %v2918
    %3088 = vmatprep.subr.mxu0 0.0
    %3089 = vmatpush1.msra.mxu0 %v2919
    %3090 = vmatprep.subr.mxu0 0.0
    %3091 = vmatpush1.msra.mxu0 %v2920
    %3092 = vmatprep.subr.mxu0 0.0
    %3093 = vmatpush1.msra.mxu0 %v2921
    %3094 = vmatprep.subr.mxu0 0.0
    %3095 = vmatpush1.msra.mxu0 %v2922
    %3096 = vmatprep.subr.mxu0 0.0
    %3097 = vmatpush1.msra.mxu0 %v2923
    %3098 = vmatprep.subr.mxu0 0.0
    %3099 = vmatpush1.msra.mxu0 0.0
    %3100 = vmatprep.subr.mxu0 0.0
    %3101 = vmatpush1.msra.mxu0 0.0
    %3102 = vmatprep.subr.mxu0 0.0
    %3103 = vmatpush1.msra.mxu0 0.0
    %3104 = vmatprep.subr.mxu0 0.0
    %3105 = vmatpush1.msra.mxu0 0.0
    %3106 = vmatprep.subr.mxu0 0.0
    %3107 = vmatpush1.msra.mxu0 0.0
    %3108 = vmatprep.subr.mxu0 0.0
    %3109 = vmatpush1.msra.mxu0 0.0
    %3110 = vmatprep.subr.mxu0 0.0
    %3111 = vmatpush1.msra.mxu0 0.0
    %3112 = vmatprep.subr.mxu0 0.0
    %3113 = vmatpush1.msra.mxu0 0.0
    %3114 = vmatprep.subr.mxu0 0.0
    %3115 = vmatpush1.msra.mxu0 0.0
    %3116 = vmatprep.subr.mxu0 0.0
    %3117 = vmatpush1.msra.mxu0 0.0
    %3118 = vmatprep.subr.mxu0 0.0
    %3119 = vmatpush1.msra.mxu0 0.0
    %3120 = vmatprep.subr.mxu0 0.0
    %3121 = vmatpush1.msra.mxu0 0.0
    %3122 = vmatprep.subr.mxu0 0.0
    %3123 = vmatpush1.msra.mxu0 0.0
    %3124 = vmatprep.subr.mxu0 0.0
    %3125 = vmatpush1.msra.mxu0 0.0
    %3126 = vmatprep.subr.mxu0 0.0
    %3127 = vmatpush1.msra.mxu0 0.0
    %3128 = vmatprep.subr.mxu0 0.0
    %3129 = vmatpush1.msra.mxu0 0.0
    %3130 = vmatprep.subr.mxu0 0.0
    %3131 = vmatpush1.msra.mxu0 0.0
    %3132 = vmatprep.subr.mxu0 0.0
    %3133 = vmatpush1.msra.mxu0 0.0
    %3134 = vmatprep.subr.mxu0 0.0
    %3135 = vmatpush1.msra.mxu0 0.0
    %3136 = vmatprep.subr.mxu0 0.0
    %3137 = vmatpush1.msra.mxu0 0.0
    %3138 = vmatprep.subr.mxu0 0.0
    %3139 = vmatpush1.msra.mxu0 0.0
    %3140 = vmatprep.subr.mxu0 0.0
    %3141 = vmatpush1.msra.mxu0 0.0
    %3142 = vmatprep.subr.mxu0 0.0
    %3143 = vmatpush1.msra.mxu0 0.0
    %3144 = vmatprep.subr.mxu0 0.0
    %3145 = vmatpush1.msra.mxu0 0.0
    %3146 = vmatprep.mubr.f32.mxu0 0.0
    %3147 = vmatmul.mubr.f32.gmra.mrb[0].mxu0 %v3080
    %v3148 = vpop.f32.mrb[0].mxu0
    %v3149 = vadd.f32 0.0, %v3148
    %v3150 = vpop.f32.mrb[0].mxu0
    %3151 = vdwg.mxu0
    %v3153 = vsel %vm546, %v3003, 0
    %3155 = vmatprep.subr.mxu0 0.0
    %3156 = vmatpush1.msra.mxu0 %v2908
    %3157 = vmatprep.subr.mxu0 0.0
    %3158 = vmatpush1.msra.mxu0 %v2909
    %3159 = vmatprep.subr.mxu0 0.0
    %3160 = vmatpush1.msra.mxu0 %v2910
    %3161 = vmatprep.subr.mxu0 0.0
    %3162 = vmatpush1.msra.mxu0 %v2911
    %3163 = vmatprep.subr.mxu0 0.0
    %3164 = vmatpush1.msra.mxu0 %v2912
    %3165 = vmatprep.subr.mxu0 0.0
    %3166 = vmatpush1.msra.mxu0 %v2913
    %3167 = vmatprep.subr.mxu0 0.0
    %3168 = vmatpush1.msra.mxu0 %v2914
    %3169 = vmatprep.subr.mxu0 0.0
    %3170 = vmatpush1.msra.mxu0 %v2915
    %3171 = vmatprep.subr.mxu0 0.0
    %3172 = vmatpush1.msra.mxu0 0.0
    %3173 = vmatprep.subr.mxu0 0.0
    %3174 = vmatpush1.msra.mxu0 0.0
    %3175 = vmatprep.subr.mxu0 0.0
    %3176 = vmatpush1.msra.mxu0 0.0
    %3177 = vmatprep.subr.mxu0 0.0
    %3178 = vmatpush1.msra.mxu0 0.0
    %3179 = vmatprep.subr.mxu0 0.0
    %3180 = vmatpush1.msra.mxu0 0.0
    %3181 = vmatprep.subr.mxu0 0.0
    %3182 = vmatpush1.msra.mxu0 0.0
    %3183 = vmatprep.subr.mxu0 0.0
    %3184 = vmatpush1.msra.mxu0 0.0
    %3185 = vmatprep.subr.mxu0 0.0
    %3186 = vmatpush1.msra.mxu0 0.0
    %3187 = vmatprep.subr.mxu0 0.0
    %3188 = vmatpush1.msra.mxu0 0.0
    %3189 = vmatprep.subr.mxu0 0.0
    %3190 = vmatpush1.msra.mxu0 0.0
    %3191 = vmatprep.subr.mxu0 0.0
    %3192 = vmatpush1.msra.mxu0 0.0
    %3193 = vmatprep.subr.mxu0 0.0
    %3194 = vmatpush1.msra.mxu0 0.0
    %3195 = vmatprep.subr.mxu0 0.0
    %3196 = vmatpush1.msra.mxu0 0.0
    %3197 = vmatprep.subr.mxu0 0.0
    %3198 = vmatpush1.msra.mxu0 0.0
    %3199 = vmatprep.subr.mxu0 0.0
    %3200 = vmatpush1.msra.mxu0 0.0
    %3201 = vmatprep.subr.mxu0 0.0
    %3202 = vmatpush1.msra.mxu0 0.0
    %3203 = vmatprep.subr.mxu0 0.0
    %3204 = vmatpush1.msra.mxu0 0.0
    %3205 = vmatprep.subr.mxu0 0.0
    %3206 = vmatpush1.msra.mxu0 0.0
    %3207 = vmatprep.subr.mxu0 0.0
    %3208 = vmatpush1.msra.mxu0 0.0
    %3209 = vmatprep.subr.mxu0 0.0
    %3210 = vmatpush1.msra.mxu0 0.0
    %3211 = vmatprep.subr.mxu0 0.0
    %3212 = vmatpush1.msra.mxu0 0.0
    %3213 = vmatprep.subr.mxu0 0.0
    %3214 = vmatpush1.msra.mxu0 0.0
    %3215 = vmatprep.subr.mxu0 0.0
    %3216 = vmatpush1.msra.mxu0 0.0
    %3217 = vmatprep.subr.mxu0 0.0
    %3218 = vmatpush1.msra.mxu0 0.0
    %3219 = vmatprep.mubr.f32.mxu0 0.0
    %3220 = vmatmul.mubr.f32.gmra.mrb[0].mxu0 %v3153
    %v3221 = vpop.f32.mrb[0].mxu0
    %v3222 = vadd.f32 %v3149, %v3221
    %v3223 = vpop.f32.mrb[0].mxu0
    %3224 = vdwg.mxu0
    %v3226 = vsel %vm2932, %v2907, 0
    %3228 = vmatprep.subr.mxu0 0.0
    %3229 = vmatpush1.msra.mxu0 %v2904
    %3230 = vmatprep.subr.mxu0 0.0
    %3231 = vmatpush1.msra.mxu0 0.0
    %3232 = vmatprep.subr.mxu0 0.0
    %3233 = vmatpush1.msra.mxu0 0.0
    %3234 = vmatprep.subr.mxu0 0.0
    %3235 = vmatpush1.msra.mxu0 0.0
    %3236 = vmatprep.subr.mxu0 0.0
    %3237 = vmatpush1.msra.mxu0 0.0
    %3238 = vmatprep.subr.mxu0 0.0
    %3239 = vmatpush1.msra.mxu0 0.0
    %3240 = vmatprep.subr.mxu0 0.0
    %3241 = vmatpush1.msra.mxu0 0.0
    %3242 = vmatprep.subr.mxu0 0.0
    %3243 = vmatpush1.msra.mxu0 0.0
    %3244 = vmatprep.subr.mxu0 0.0
    %3245 = vmatpush1.msra.mxu0 0.0
    %3246 = vmatprep.subr.mxu0 0.0
    %3247 = vmatpush1.msra.mxu0 0.0
    %3248 = vmatprep.subr.mxu0 0.0
    %3249 = vmatpush1.msra.mxu0 0.0
    %3250 = vmatprep.subr.mxu0 0.0
    %3251 = vmatpush1.msra.mxu0 0.0
    %3252 = vmatprep.subr.mxu0 0.0
    %3253 = vmatpush1.msra.mxu0 0.0
    %3254 = vmatprep.subr.mxu0 0.0
    %3255 = vmatpush1.msra.mxu0 0.0
    %3256 = vmatprep.subr.mxu0 0.0
    %3257 = vmatpush1.msra.mxu0 0.0
    %3258 = vmatprep.subr.mxu0 0.0
    %3259 = vmatpush1.msra.mxu0 0.0
    %3260 = vmatprep.subr.mxu0 0.0
    %3261 = vmatpush1.msra.mxu0 0.0
    %3262 = vmatprep.subr.mxu0 0.0
    %3263 = vmatpush1.msra.mxu0 0.0
    %3264 = vmatprep.subr.mxu0 0.0
    %3265 = vmatpush1.msra.mxu0 0.0
    %3266 = vmatprep.subr.mxu0 0.0
    %3267 = vmatpush1.msra.mxu0 0.0
    %3268 = vmatprep.subr.mxu0 0.0
    %3269 = vmatpush1.msra.mxu0 0.0
    %3270 = vmatprep.subr.mxu0 0.0
    %3271 = vmatpush1.msra.mxu0 0.0
    %3272 = vmatprep.subr.mxu0 0.0
    %3273 = vmatpush1.msra.mxu0 0.0
    %3274 = vmatprep.subr.mxu0 0.0
    %3275 = vmatpush1.msra.mxu0 0.0
    %3276 = vmatprep.subr.mxu0 0.0
    %3277 = vmatpush1.msra.mxu0 0.0
    %3278 = vmatprep.subr.mxu0 0.0
    %3279 = vmatpush1.msra.mxu0 0.0
    %3280 = vmatprep.subr.mxu0 0.0
    %3281 = vmatpush1.msra.mxu0 0.0
    %3282 = vmatprep.subr.mxu0 0.0
    %3283 = vmatpush1.msra.mxu0 0.0
    %3284 = vmatprep.subr.mxu0 0.0
    %3285 = vmatpush1.msra.mxu0 0.0
    %3286 = vmatprep.subr.mxu0 0.0
    %3287 = vmatpush1.msra.mxu0 0.0
    %3288 = vmatprep.subr.mxu0 0.0
    %3289 = vmatpush1.msra.mxu0 0.0
    %3290 = vmatprep.subr.mxu0 0.0
    %3291 = vmatpush1.msra.mxu0 0.0
    %3292 = vmatprep.mubr.f32.mxu0 0.0
    %3293 = vmatmul.mubr.f32.gmra.mrb[0].mxu0 %v3226
    %v3294 = vpop.f32.mrb[0].mxu0
    %v3295 = vadd.f32 0.0, %v3294
    %v3296 = vpop.f32.mrb[0].mxu0
    %3297 = vdwg.mxu0
    %v3299 = vsel %vm546, %v3295, 0
    %3301 = vmatprep.subr.mxu0 0.0
    %3302 = vmatpush1.msra.mxu0 %v2924
    %3303 = vmatprep.subr.mxu0 0.0
    %3304 = vmatpush1.msra.mxu0 %v2925
    %3305 = vmatprep.subr.mxu0 0.0
    %3306 = vmatpush1.msra.mxu0 %v2926
    %3307 = vmatprep.subr.mxu0 0.0
    %3308 = vmatpush1.msra.mxu0 %v2927
    %3309 = vmatprep.subr.mxu0 0.0
    %3310 = vmatpush1.msra.mxu0 %v2928
    %3311 = vmatprep.subr.mxu0 0.0
    %3312 = vmatpush1.msra.mxu0 %v2929
    %3313 = vmatprep.subr.mxu0 0.0
    %3314 = vmatpush1.msra.mxu0 %v2930
    %3315 = vmatprep.subr.mxu0 0.0
    %3316 = vmatpush1.msra.mxu0 %v2931
    %3317 = vmatprep.subr.mxu0 0.0
    %3318 = vmatpush1.msra.mxu0 0.0
    %3319 = vmatprep.subr.mxu0 0.0
    %3320 = vmatpush1.msra.mxu0 0.0
    %3321 = vmatprep.subr.mxu0 0.0
    %3322 = vmatpush1.msra.mxu0 0.0
    %3323 = vmatprep.subr.mxu0 0.0
    %3324 = vmatpush1.msra.mxu0 0.0
    %3325 = vmatprep.subr.mxu0 0.0
    %3326 = vmatpush1.msra.mxu0 0.0
    %3327 = vmatprep.subr.mxu0 0.0
    %3328 = vmatpush1.msra.mxu0 0.0
    %3329 = vmatprep.subr.mxu0 0.0
    %3330 = vmatpush1.msra.mxu0 0.0
    %3331 = vmatprep.subr.mxu0 0.0
    %3332 = vmatpush1.msra.mxu0 0.0
    %3333 = vmatprep.subr.mxu0 0.0
    %3334 = vmatpush1.msra.mxu0 0.0
    %3335 = vmatprep.subr.mxu0 0.0
    %3336 = vmatpush1.msra.mxu0 0.0
    %3337 = vmatprep.subr.mxu0 0.0
    %3338 = vmatpush1.msra.mxu0 0.0
    %3339 = vmatprep.subr.mxu0 0.0
    %3340 = vmatpush1.msra.mxu0 0.0
    %3341 = vmatprep.subr.mxu0 0.0
    %3342 = vmatpush1.msra.mxu0 0.0
    %3343 = vmatprep.subr.mxu0 0.0
    %3344 = vmatpush1.msra.mxu0 0.0
    %3345 = vmatprep.subr.mxu0 0.0
    %3346 = vmatpush1.msra.mxu0 0.0
    %3347 = vmatprep.subr.mxu0 0.0
    %3348 = vmatpush1.msra.mxu0 0.0
    %3349 = vmatprep.subr.mxu0 0.0
    %3350 = vmatpush1.msra.mxu0 0.0
    %3351 = vmatprep.subr.mxu0 0.0
    %3352 = vmatpush1.msra.mxu0 0.0
    %3353 = vmatprep.subr.mxu0 0.0
    %3354 = vmatpush1.msra.mxu0 0.0
    %3355 = vmatprep.subr.mxu0 0.0
    %3356 = vmatpush1.msra.mxu0 0.0
    %3357 = vmatprep.subr.mxu0 0.0
    %3358 = vmatpush1.msra.mxu0 0.0
    %3359 = vmatprep.subr.mxu0 0.0
    %3360 = vmatpush1.msra.mxu0 0.0
    %3361 = vmatprep.subr.mxu0 0.0
    %3362 = vmatpush1.msra.mxu0 0.0
    %3363 = vmatprep.subr.mxu0 0.0
    %3364 = vmatpush1.msra.mxu0 0.0
    %3365 = vmatprep.mubr.f32.mxu0 0.0
    %3366 = vmatmul.mubr.f32.gmra.mrb[0].mxu0 %v3299
    %v3367 = vpop.f32.mrb[0].mxu0
    %v3368 = vadd.f32 0.0, %v3367
    %v3369 = vpop.f32.mrb[0].mxu0
    %3370 = vdwg.mxu0
    %v3371 = vadd.f32 %v3222, %v3368
    %v3372 = vld [vmem:[#allocation22] sm:$0x1]
    %v3374 = vlaneseq
    %v3375 = vshrl.u32 %v3374, 7
    %v3376 = vsub.s32 0, %v3375
    %v3377 = vrot.slane %v3372, %v3376
    %v3379 = vadd.f32 %v3371, %v3377
    %v3380 = vxor.u32 %v3379, 2147483648
    %v3381 = vmul.f32 %v3380, 1.442695
    %v3382 = vpow.pop %v3381
    %v3383 = vadd.f32 %v3382, 1.0
    %v3384 = vrcp.pop %v3383
    %v3385 = vmul.f32 1.0, %v3384
    %v3386 = vmul.f32 %v3379, %v3385
    %v3387 = vld [vmem:[#allocation12] sm:$0xff]
    %v3388 = vld [vmem:[#allocation12 + $0x8] sm:$0xff]
    %v3389 = vld [vmem:[#allocation12 + $0x10] sm:$0xff]
    %v3390 = vld [vmem:[#allocation12 + $0x18] sm:$0xff]
    %v3391 = vld [vmem:[#allocation12 + $0x20] sm:$0xff]
    %v3392 = vld [vmem:[#allocation12 + $0x28] sm:$0xff]
    %v3393 = vld [vmem:[#allocation12 + $0x30] sm:$0xff]
    %v3394 = vld [vmem:[#allocation12 + $0x38] sm:$0xff]
    %v3395 = vld [vmem:[#allocation12 + $0x40] sm:$0xff]
    %v3396 = vld [vmem:[#allocation12 + $0x48] sm:$0xff]
    %v3397 = vld [vmem:[#allocation12 + $0x50] sm:$0xff]
    %v3398 = vld [vmem:[#allocation12 + $0x58] sm:$0xff]
    %v3399 = vld [vmem:[#allocation12 + $0x60] sm:$0xff]
    %v3400 = vld [vmem:[#allocation12 + $0x68] sm:$0xff]
    %v3401 = vld [vmem:[#allocation12 + $0x70] sm:$0xff]
    %v3402 = vld [vmem:[#allocation12 + $0x78] sm:$0xff]
    %v3403 = vld [vmem:[#allocation12 + $0x80] sm:$0xff]
    %v3404 = vld [vmem:[#allocation12 + $0x88] sm:$0xff]
    %v3405 = vld [vmem:[#allocation12 + $0x90] sm:$0xff]
    %v3406 = vld [vmem:[#allocation12 + $0x98] sm:$0xff]
    %v3407 = vld [vmem:[#allocation12 + $0xa0] sm:$0xff]
    %v3408 = vld [vmem:[#allocation12 + $0xa8] sm:$0xff]
    %v3409 = vld [vmem:[#allocation12 + $0xb0] sm:$0xff]
    %v3410 = vld [vmem:[#allocation12 + $0xb8] sm:$0xff]
    %3411 = vmatprep.subr.mxu0 0.0
    %3412 = vmatpush1.msra.mxu0 %v3386
    %3413 = vmatprep.subr.mxu0 0.0
    %3414 = vmatpush1.msra.mxu0 0.0
    %3415 = vmatprep.subr.mxu0 0.0
    %3416 = vmatpush1.msra.mxu0 0.0
    %3417 = vmatprep.subr.mxu0 0.0
    %3418 = vmatpush1.msra.mxu0 0.0
    %3419 = vmatprep.subr.mxu0 0.0
    %3420 = vmatpush1.msra.mxu0 0.0
    %3421 = vmatprep.subr.mxu0 0.0
    %3422 = vmatpush1.msra.mxu0 0.0
    %3423 = vmatprep.subr.mxu0 0.0
    %3424 = vmatpush1.msra.mxu0 0.0
    %3425 = vmatprep.subr.mxu0 0.0
    %3426 = vmatpush1.msra.mxu0 0.0
    %3427 = vmatprep.subr.mxu0 0.0
    %3428 = vmatpush1.msra.mxu0 0.0
    %3429 = vmatprep.subr.mxu0 0.0
    %3430 = vmatpush1.msra.mxu0 0.0
    %3431 = vmatprep.subr.mxu0 0.0
    %3432 = vmatpush1.msra.mxu0 0.0
    %3433 = vmatprep.subr.mxu0 0.0
    %3434 = vmatpush1.msra.mxu0 0.0
    %3435 = vmatprep.subr.mxu0 0.0
    %3436 = vmatpush1.msra.mxu0 0.0
    %3437 = vmatprep.subr.mxu0 0.0
    %3438 = vmatpush1.msra.mxu0 0.0
    %3439 = vmatprep.subr.mxu0 0.0
    %3440 = vmatpush1.msra.mxu0 0.0
    %3441 = vmatprep.subr.mxu0 0.0
    %3442 = vmatpush1.msra.mxu0 0.0
    %3443 = vmatprep.subr.mxu0 0.0
    %3444 = vmatpush1.msra.mxu0 0.0
    %3445 = vmatprep.subr.mxu0 0.0
    %3446 = vmatpush1.msra.mxu0 0.0
    %3447 = vmatprep.subr.mxu0 0.0
    %3448 = vmatpush1.msra.mxu0 0.0
    %3449 = vmatprep.subr.mxu0 0.0
    %3450 = vmatpush1.msra.mxu0 0.0
    %3451 = vmatprep.subr.mxu0 0.0
    %3452 = vmatpush1.msra.mxu0 0.0
    %3453 = vmatprep.subr.mxu0 0.0
    %3454 = vmatpush1.msra.mxu0 0.0
    %3455 = vmatprep.subr.mxu0 0.0
    %3456 = vmatpush1.msra.mxu0 0.0
    %3457 = vmatprep.subr.mxu0 0.0
    %3458 = vmatpush1.msra.mxu0 0.0
    %3459 = vmatprep.subr.mxu0 0.0
    %3460 = vmatpush1.msra.mxu0 0.0
    %3461 = vmatprep.subr.mxu0 0.0
    %3462 = vmatpush1.msra.mxu0 0.0
    %3463 = vmatprep.subr.mxu0 0.0
    %3464 = vmatpush1.msra.mxu0 0.0
    %3465 = vmatprep.subr.mxu0 0.0
    %3466 = vmatpush1.msra.mxu0 0.0
    %3467 = vmatprep.subr.mxu0 0.0
    %3468 = vmatpush1.msra.mxu0 0.0
    %3469 = vmatprep.subr.mxu0 0.0
    %3470 = vmatpush1.msra.mxu0 0.0
    %3471 = vmatprep.subr.mxu0 0.0
    %3472 = vmatpush1.msra.mxu0 0.0
    %3473 = vmatprep.subr.mxu0 0.0
    %3474 = vmatpush1.msra.mxu0 0.0
    %3475 = vmatprep.mubr.f32.mxu0 0.0
    %3476 = vmatmul.mubr.f32.gmra.mrb[0].mxu0 %v2934
    %v3477 = vpop.f32.mrb[0].mxu0
    %v3478 = vadd.f32 0.0, %v3477
    %v3479 = vpop.f32.mrb[0].mxu0
    %3480 = vdwg.mxu0
    %3481 = vmatprep.subr.mxu0 0.0
    %3482 = vmatpush1.msra.mxu0 %v3386
    %3483 = vmatprep.subr.mxu0 0.0
    %3484 = vmatpush1.msra.mxu0 0.0
    %3485 = vmatprep.subr.mxu0 0.0
    %3486 = vmatpush1.msra.mxu0 0.0
    %3487 = vmatprep.subr.mxu0 0.0
    %3488 = vmatpush1.msra.mxu0 0.0
    %3489 = vmatprep.subr.mxu0 0.0
    %3490 = vmatpush1.msra.mxu0 0.0
    %3491 = vmatprep.subr.mxu0 0.0
    %3492 = vmatpush1.msra.mxu0 0.0
    %3493 = vmatprep.subr.mxu0 0.0
    %3494 = vmatpush1.msra.mxu0 0.0
    %3495 = vmatprep.subr.mxu0 0.0
    %3496 = vmatpush1.msra.mxu0 0.0
    %3497 = vmatprep.subr.mxu0 0.0
    %3498 = vmatpush1.msra.mxu0 0.0
    %3499 = vmatprep.subr.mxu0 0.0
    %3500 = vmatpush1.msra.mxu0 0.0
    %3501 = vmatprep.subr.mxu0 0.0
    %3502 = vmatpush1.msra.mxu0 0.0
    %3503 = vmatprep.subr.mxu0 0.0
    %3504 = vmatpush1.msra.mxu0 0.0
    %3505 = vmatprep.subr.mxu0 0.0
    %3506 = vmatpush1.msra.mxu0 0.0
    %3507 = vmatprep.subr.mxu0 0.0
    %3508 = vmatpush1.msra.mxu0 0.0
    %3509 = vmatprep.subr.mxu0 0.0
    %3510 = vmatpush1.msra.mxu0 0.0
    %3511 = vmatprep.subr.mxu0 0.0
    %3512 = vmatpush1.msra.mxu0 0.0
    %3513 = vmatprep.subr.mxu0 0.0
    %3514 = vmatpush1.msra.mxu0 0.0
    %3515 = vmatprep.subr.mxu0 0.0
    %3516 = vmatpush1.msra.mxu0 0.0
    %3517 = vmatprep.subr.mxu0 0.0
    %3518 = vmatpush1.msra.mxu0 0.0
    %3519 = vmatprep.subr.mxu0 0.0
    %3520 = vmatpush1.msra.mxu0 0.0
    %3521 = vmatprep.subr.mxu0 0.0
    %3522 = vmatpush1.msra.mxu0 0.0
    %3523 = vmatprep.subr.mxu0 0.0
    %3524 = vmatpush1.msra.mxu0 0.0
    %3525 = vmatprep.subr.mxu0 0.0
    %3526 = vmatpush1.msra.mxu0 0.0
    %3527 = vmatprep.subr.mxu0 0.0
    %3528 = vmatpush1.msra.mxu0 0.0
    %3529 = vmatprep.subr.mxu0 0.0
    %3530 = vmatpush1.msra.mxu0 0.0
    %3531 = vmatprep.subr.mxu0 0.0
    %3532 = vmatpush1.msra.mxu0 0.0
    %3533 = vmatprep.subr.mxu0 0.0
    %3534 = vmatpush1.msra.mxu0 0.0
    %3535 = vmatprep.subr.mxu0 0.0
    %3536 = vmatpush1.msra.mxu0 0.0
    %3537 = vmatprep.subr.mxu0 0.0
    %3538 = vmatpush1.msra.mxu0 0.0
    %3539 = vmatprep.subr.mxu0 0.0
    %3540 = vmatpush1.msra.mxu0 0.0
    %3541 = vmatprep.subr.mxu0 0.0
    %3542 = vmatpush1.msra.mxu0 0.0
    %3543 = vmatprep.subr.mxu0 0.0
    %3544 = vmatpush1.msra.mxu0 0.0
    %3545 = vmatprep.mubr.f32.mxu0 0.0
    %3546 = vmatmul.mubr.f32.gmra.mrb[0].mxu0 %v3007
    %v3547 = vpop.f32.mrb[0].mxu0
    %v3548 = vadd.f32 0.0, %v3547
    %v3549 = vpop.f32.mrb[0].mxu0
    %3550 = vdwg.mxu0
    %v3552 = vsel %vm546, %v3548, 0
    %3554 = vmatprep.subr.mxu0 0.0
    %3555 = vmatpush1.msra.mxu0 %v3395
    %3556 = vmatprep.subr.mxu0 0.0
    %3557 = vmatpush1.msra.mxu0 %v3396
    %3558 = vmatprep.subr.mxu0 0.0
    %3559 = vmatpush1.msra.mxu0 %v3397
    %3560 = vmatprep.subr.mxu0 0.0
    %3561 = vmatpush1.msra.mxu0 %v3398
    %3562 = vmatprep.subr.mxu0 0.0
    %3563 = vmatpush1.msra.mxu0 %v3399
    %3564 = vmatprep.subr.mxu0 0.0
    %3565 = vmatpush1.msra.mxu0 %v3400
    %3566 = vmatprep.subr.mxu0 0.0
    %3567 = vmatpush1.msra.mxu0 %v3401
    %3568 = vmatprep.subr.mxu0 0.0
    %3569 = vmatpush1.msra.mxu0 %v3402
    %3570 = vmatprep.subr.mxu0 0.0
    %3571 = vmatpush1.msra.mxu0 0.0
    %3572 = vmatprep.subr.mxu0 0.0
    %3573 = vmatpush1.msra.mxu0 0.0
    %3574 = vmatprep.subr.mxu0 0.0
    %3575 = vmatpush1.msra.mxu0 0.0
    %3576 = vmatprep.subr.mxu0 0.0
    %3577 = vmatpush1.msra.mxu0 0.0
    %3578 = vmatprep.subr.mxu0 0.0
    %3579 = vmatpush1.msra.mxu0 0.0
    %3580 = vmatprep.subr.mxu0 0.0
    %3581 = vmatpush1.msra.mxu0 0.0
    %3582 = vmatprep.subr.mxu0 0.0
    %3583 = vmatpush1.msra.mxu0 0.0
    %3584 = vmatprep.subr.mxu0 0.0
    %3585 = vmatpush1.msra.mxu0 0.0
    %3586 = vmatprep.subr.mxu0 0.0
    %3587 = vmatpush1.msra.mxu0 0.0
    %3588 = vmatprep.subr.mxu0 0.0
    %3589 = vmatpush1.msra.mxu0 0.0
    %3590 = vmatprep.subr.mxu0 0.0
    %3591 = vmatpush1.msra.mxu0 0.0
    %3592 = vmatprep.subr.mxu0 0.0
    %3593 = vmatpush1.msra.mxu0 0.0
    %3594 = vmatprep.subr.mxu0 0.0
    %3595 = vmatpush1.msra.mxu0 0.0
    %3596 = vmatprep.subr.mxu0 0.0
    %3597 = vmatpush1.msra.mxu0 0.0
    %3598 = vmatprep.subr.mxu0 0.0
    %3599 = vmatpush1.msra.mxu0 0.0
    %3600 = vmatprep.subr.mxu0 0.0
    %3601 = vmatpush1.msra.mxu0 0.0
    %3602 = vmatprep.subr.mxu0 0.0
    %3603 = vmatpush1.msra.mxu0 0.0
    %3604 = vmatprep.subr.mxu0 0.0
    %3605 = vmatpush1.msra.mxu0 0.0
    %3606 = vmatprep.subr.mxu0 0.0
    %3607 = vmatpush1.msra.mxu0 0.0
    %3608 = vmatprep.subr.mxu0 0.0
    %3609 = vmatpush1.msra.mxu0 0.0
    %3610 = vmatprep.subr.mxu0 0.0
    %3611 = vmatpush1.msra.mxu0 0.0
    %3612 = vmatprep.subr.mxu0 0.0
    %3613 = vmatpush1.msra.mxu0 0.0
    %3614 = vmatprep.subr.mxu0 0.0
    %3615 = vmatpush1.msra.mxu0 0.0
    %3616 = vmatprep.subr.mxu0 0.0
    %3617 = vmatpush1.msra.mxu0 0.0
    %3618 = vmatprep.mubr.f32.mxu0 0.0
    %3619 = vmatmul.mubr.f32.gmra.mrb[0].mxu0 %v3552
    %v3620 = vpop.f32.mrb[0].mxu0
    %v3621 = vadd.f32 0.0, %v3620
    %v3622 = vpop.f32.mrb[0].mxu0
    %3623 = vdwg.mxu0
    %v3625 = vsel %vm546, %v3478, 0
    %3627 = vmatprep.subr.mxu0 0.0
    %3628 = vmatpush1.msra.mxu0 %v3387
    %3629 = vmatprep.subr.mxu0 0.0
    %3630 = vmatpush1.msra.mxu0 %v3388
    %3631 = vmatprep.subr.mxu0 0.0
    %3632 = vmatpush1.msra.mxu0 %v3389
    %3633 = vmatprep.subr.mxu0 0.0
    %3634 = vmatpush1.msra.mxu0 %v3390
    %3635 = vmatprep.subr.mxu0 0.0
    %3636 = vmatpush1.msra.mxu0 %v3391
    %3637 = vmatprep.subr.mxu0 0.0
    %3638 = vmatpush1.msra.mxu0 %v3392
    %3639 = vmatprep.subr.mxu0 0.0
    %3640 = vmatpush1.msra.mxu0 %v3393
    %3641 = vmatprep.subr.mxu0 0.0
    %3642 = vmatpush1.msra.mxu0 %v3394
    %3643 = vmatprep.subr.mxu0 0.0
    %3644 = vmatpush1.msra.mxu0 0.0
    %3645 = vmatprep.subr.mxu0 0.0
    %3646 = vmatpush1.msra.mxu0 0.0
    %3647 = vmatprep.subr.mxu0 0.0
    %3648 = vmatpush1.msra.mxu0 0.0
    %3649 = vmatprep.subr.mxu0 0.0
    %3650 = vmatpush1.msra.mxu0 0.0
    %3651 = vmatprep.subr.mxu0 0.0
    %3652 = vmatpush1.msra.mxu0 0.0
    %3653 = vmatprep.subr.mxu0 0.0
    %3654 = vmatpush1.msra.mxu0 0.0
    %3655 = vmatprep.subr.mxu0 0.0
    %3656 = vmatpush1.msra.mxu0 0.0
    %3657 = vmatprep.subr.mxu0 0.0
    %3658 = vmatpush1.msra.mxu0 0.0
    %3659 = vmatprep.subr.mxu0 0.0
    %3660 = vmatpush1.msra.mxu0 0.0
    %3661 = vmatprep.subr.mxu0 0.0
    %3662 = vmatpush1.msra.mxu0 0.0
    %3663 = vmatprep.subr.mxu0 0.0
    %3664 = vmatpush1.msra.mxu0 0.0
    %3665 = vmatprep.subr.mxu0 0.0
    %3666 = vmatpush1.msra.mxu0 0.0
    %3667 = vmatprep.subr.mxu0 0.0
    %3668 = vmatpush1.msra.mxu0 0.0
    %3669 = vmatprep.subr.mxu0 0.0
    %3670 = vmatpush1.msra.mxu0 0.0
    %3671 = vmatprep.subr.mxu0 0.0
    %3672 = vmatpush1.msra.mxu0 0.0
    %3673 = vmatprep.subr.mxu0 0.0
    %3674 = vmatpush1.msra.mxu0 0.0
    %3675 = vmatprep.subr.mxu0 0.0
    %3676 = vmatpush1.msra.mxu0 0.0
    %3677 = vmatprep.subr.mxu0 0.0
    %3678 = vmatpush1.msra.mxu0 0.0
    %3679 = vmatprep.subr.mxu0 0.0
    %3680 = vmatpush1.msra.mxu0 0.0
    %3681 = vmatprep.subr.mxu0 0.0
    %3682 = vmatpush1.msra.mxu0 0.0
    %3683 = vmatprep.subr.mxu0 0.0
    %3684 = vmatpush1.msra.mxu0 0.0
    %3685 = vmatprep.subr.mxu0 0.0
    %3686 = vmatpush1.msra.mxu0 0.0
    %3687 = vmatprep.subr.mxu0 0.0
    %3688 = vmatpush1.msra.mxu0 0.0
    %3689 = vmatprep.subr.mxu0 0.0
    %3690 = vmatpush1.msra.mxu0 0.0
    %3691 = vmatprep.mubr.f32.mxu0 0.0
    %3692 = vmatmul.mubr.f32.gmra.mrb[0].mxu0 %v3625
    %v3693 = vpop.f32.mrb[0].mxu0
    %v3694 = vadd.f32 %v3621, %v3693
    %v3695 = vpop.f32.mrb[0].mxu0
    %3696 = vdwg.mxu0
    %3697 = vmatprep.subr.mxu0 0.0
    %3698 = vmatpush1.msra.mxu0 %v3386
    %3699 = vmatprep.subr.mxu0 0.0
    %3700 = vmatpush1.msra.mxu0 0.0
    %3701 = vmatprep.subr.mxu0 0.0
    %3702 = vmatpush1.msra.mxu0 0.0
    %3703 = vmatprep.subr.mxu0 0.0
    %3704 = vmatpush1.msra.mxu0 0.0
    %3705 = vmatprep.subr.mxu0 0.0
    %3706 = vmatpush1.msra.mxu0 0.0
    %3707 = vmatprep.subr.mxu0 0.0
    %3708 = vmatpush1.msra.mxu0 0.0
    %3709 = vmatprep.subr.mxu0 0.0
    %3710 = vmatpush1.msra.mxu0 0.0
    %3711 = vmatprep.subr.mxu0 0.0
    %3712 = vmatpush1.msra.mxu0 0.0
    %3713 = vmatprep.subr.mxu0 0.0
    %3714 = vmatpush1.msra.mxu0 0.0
    %3715 = vmatprep.subr.mxu0 0.0
    %3716 = vmatpush1.msra.mxu0 0.0
    %3717 = vmatprep.subr.mxu0 0.0
    %3718 = vmatpush1.msra.mxu0 0.0
    %3719 = vmatprep.subr.mxu0 0.0
    %3720 = vmatpush1.msra.mxu0 0.0
    %3721 = vmatprep.subr.mxu0 0.0
    %3722 = vmatpush1.msra.mxu0 0.0
    %3723 = vmatprep.subr.mxu0 0.0
    %3724 = vmatpush1.msra.mxu0 0.0
    %3725 = vmatprep.subr.mxu0 0.0
    %3726 = vmatpush1.msra.mxu0 0.0
    %3727 = vmatprep.subr.mxu0 0.0
    %3728 = vmatpush1.msra.mxu0 0.0
    %3729 = vmatprep.subr.mxu0 0.0
    %3730 = vmatpush1.msra.mxu0 0.0
    %3731 = vmatprep.subr.mxu0 0.0
    %3732 = vmatpush1.msra.mxu0 0.0
    %3733 = vmatprep.subr.mxu0 0.0
    %3734 = vmatpush1.msra.mxu0 0.0
    %3735 = vmatprep.subr.mxu0 0.0
    %3736 = vmatpush1.msra.mxu0 0.0
    %3737 = vmatprep.subr.mxu0 0.0
    %3738 = vmatpush1.msra.mxu0 0.0
    %3739 = vmatprep.subr.mxu0 0.0
    %3740 = vmatpush1.msra.mxu0 0.0
    %3741 = vmatprep.subr.mxu0 0.0
    %3742 = vmatpush1.msra.mxu0 0.0
    %3743 = vmatprep.subr.mxu0 0.0
    %3744 = vmatpush1.msra.mxu0 0.0
    %3745 = vmatprep.subr.mxu0 0.0
    %3746 = vmatpush1.msra.mxu0 0.0
    %3747 = vmatprep.subr.mxu0 0.0
    %3748 = vmatpush1.msra.mxu0 0.0
    %3749 = vmatprep.subr.mxu0 0.0
    %3750 = vmatpush1.msra.mxu0 0.0
    %3751 = vmatprep.subr.mxu0 0.0
    %3752 = vmatpush1.msra.mxu0 0.0
    %3753 = vmatprep.subr.mxu0 0.0
    %3754 = vmatpush1.msra.mxu0 0.0
    %3755 = vmatprep.subr.mxu0 0.0
    %3756 = vmatpush1.msra.mxu0 0.0
    %3757 = vmatprep.subr.mxu0 0.0
    %3758 = vmatpush1.msra.mxu0 0.0
    %3759 = vmatprep.subr.mxu0 0.0
    %3760 = vmatpush1.msra.mxu0 0.0
    %3761 = vmatprep.mubr.f32.mxu0 0.0
    %3762 = vmatmul.mubr.f32.gmra.mrb[0].mxu0 %v3226
    %v3763 = vpop.f32.mrb[0].mxu0
    %v3764 = vadd.f32 0.0, %v3763
    %v3765 = vpop.f32.mrb[0].mxu0
    %3766 = vdwg.mxu0
    %v3768 = vsel %vm546, %v3764, 0
    %3770 = vmatprep.subr.mxu0 0.0
    %3771 = vmatpush1.msra.mxu0 %v3403
    %3772 = vmatprep.subr.mxu0 0.0
    %3773 = vmatpush1.msra.mxu0 %v3404
    %3774 = vmatprep.subr.mxu0 0.0
    %3775 = vmatpush1.msra.mxu0 %v3405
    %3776 = vmatprep.subr.mxu0 0.0
    %3777 = vmatpush1.msra.mxu0 %v3406
    %3778 = vmatprep.subr.mxu0 0.0
    %3779 = vmatpush1.msra.mxu0 %v3407
    %3780 = vmatprep.subr.mxu0 0.0
    %3781 = vmatpush1.msra.mxu0 %v3408
    %3782 = vmatprep.subr.mxu0 0.0
    %3783 = vmatpush1.msra.mxu0 %v3409
    %3784 = vmatprep.subr.mxu0 0.0
    %3785 = vmatpush1.msra.mxu0 %v3410
    %3786 = vmatprep.subr.mxu0 0.0
    %3787 = vmatpush1.msra.mxu0 0.0
    %3788 = vmatprep.subr.mxu0 0.0
    %3789 = vmatpush1.msra.mxu0 0.0
    %3790 = vmatprep.subr.mxu0 0.0
    %3791 = vmatpush1.msra.mxu0 0.0
    %3792 = vmatprep.subr.mxu0 0.0
    %3793 = vmatpush1.msra.mxu0 0.0
    %3794 = vmatprep.subr.mxu0 0.0
    %3795 = vmatpush1.msra.mxu0 0.0
    %3796 = vmatprep.subr.mxu0 0.0
    %3797 = vmatpush1.msra.mxu0 0.0
    %3798 = vmatprep.subr.mxu0 0.0
    %3799 = vmatpush1.msra.mxu0 0.0
    %3800 = vmatprep.subr.mxu0 0.0
    %3801 = vmatpush1.msra.mxu0 0.0
    %3802 = vmatprep.subr.mxu0 0.0
    %3803 = vmatpush1.msra.mxu0 0.0
    %3804 = vmatprep.subr.mxu0 0.0
    %3805 = vmatpush1.msra.mxu0 0.0
    %3806 = vmatprep.subr.mxu0 0.0
    %3807 = vmatpush1.msra.mxu0 0.0
    %3808 = vmatprep.subr.mxu0 0.0
    %3809 = vmatpush1.msra.mxu0 0.0
    %3810 = vmatprep.subr.mxu0 0.0
    %3811 = vmatpush1.msra.mxu0 0.0
    %3812 = vmatprep.subr.mxu0 0.0
    %3813 = vmatpush1.msra.mxu0 0.0
    %3814 = vmatprep.subr.mxu0 0.0
    %3815 = vmatpush1.msra.mxu0 0.0
    %3816 = vmatprep.subr.mxu0 0.0
    %3817 = vmatpush1.msra.mxu0 0.0
    %3818 = vmatprep.subr.mxu0 0.0
    %3819 = vmatpush1.msra.mxu0 0.0
    %3820 = vmatprep.subr.mxu0 0.0
    %3821 = vmatpush1.msra.mxu0 0.0
    %3822 = vmatprep.subr.mxu0 0.0
    %3823 = vmatpush1.msra.mxu0 0.0
    %3824 = vmatprep.subr.mxu0 0.0
    %3825 = vmatpush1.msra.mxu0 0.0
    %3826 = vmatprep.subr.mxu0 0.0
    %3827 = vmatpush1.msra.mxu0 0.0
    %3828 = vmatprep.subr.mxu0 0.0
    %3829 = vmatpush1.msra.mxu0 0.0
    %3830 = vmatprep.subr.mxu0 0.0
    %3831 = vmatpush1.msra.mxu0 0.0
    %3832 = vmatprep.subr.mxu0 0.0
    %3833 = vmatpush1.msra.mxu0 0.0
    %3834 = vmatprep.mubr.f32.mxu0 0.0
    %3835 = vmatmul.mubr.f32.gmra.mrb[0].mxu0 %v3768
    %v3836 = vpop.f32.mrb[0].mxu0
    %v3837 = vadd.f32 0.0, %v3836
    %v3838 = vpop.f32.mrb[0].mxu0
    %3839 = vdwg.mxu0
    %v3840 = vadd.f32 %v3694, %v3837
    %v3841 = vld [vmem:[#allocation24] sm:$0x1]
    %v3843 = vlaneseq
    %v3844 = vshrl.u32 %v3843, 7
    %v3845 = vsub.s32 0, %v3844
    %v3846 = vrot.slane %v3841, %v3845
    %v3848 = vadd.f32 %v3840, %v3846
    %v3849 = vxor.u32 %v3848, 2147483648
    %v3850 = vmul.f32 %v3849, 1.442695
    %v3851 = vpow.pop %v3850
    %v3852 = vadd.f32 %v3851, 1.0
    %v3853 = vrcp.pop %v3852
    %v3854 = vmul.f32 1.0, %v3853
    %v3855 = vmul.f32 %v3848, %v3854
    %v3856 = vld [vmem:[#allocation13] sm:$0xff]
    %v3857 = vld [vmem:[#allocation13 + $0x8] sm:$0xff]
    %v3858 = vld [vmem:[#allocation13 + $0x10] sm:$0xff]
    %v3859 = vld [vmem:[#allocation13 + $0x18] sm:$0xff]
    %v3860 = vld [vmem:[#allocation13 + $0x20] sm:$0xff]
    %v3861 = vld [vmem:[#allocation13 + $0x28] sm:$0xff]
    %v3862 = vld [vmem:[#allocation13 + $0x30] sm:$0xff]
    %v3863 = vld [vmem:[#allocation13 + $0x38] sm:$0xff]
    %v3864 = vld [vmem:[#allocation13 + $0x40] sm:$0xff]
    %v3865 = vld [vmem:[#allocation13 + $0x48] sm:$0xff]
    %v3866 = vld [vmem:[#allocation13 + $0x50] sm:$0xff]
    %v3867 = vld [vmem:[#allocation13 + $0x58] sm:$0xff]
    %v3868 = vld [vmem:[#allocation13 + $0x60] sm:$0xff]
    %v3869 = vld [vmem:[#allocation13 + $0x68] sm:$0xff]
    %v3870 = vld [vmem:[#allocation13 + $0x70] sm:$0xff]
    %v3871 = vld [vmem:[#allocation13 + $0x78] sm:$0xff]
    %v3872 = vld [vmem:[#allocation13 + $0x80] sm:$0xff]
    %v3873 = vld [vmem:[#allocation13 + $0x88] sm:$0xff]
    %v3874 = vld [vmem:[#allocation13 + $0x90] sm:$0xff]
    %v3875 = vld [vmem:[#allocation13 + $0x98] sm:$0xff]
    %v3876 = vld [vmem:[#allocation13 + $0xa0] sm:$0xff]
    %v3877 = vld [vmem:[#allocation13 + $0xa8] sm:$0xff]
    %v3878 = vld [vmem:[#allocation13 + $0xb0] sm:$0xff]
    %v3879 = vld [vmem:[#allocation13 + $0xb8] sm:$0xff]
    %3880 = vmatprep.subr.mxu0 0.0
    %3881 = vmatpush1.msra.mxu0 %v3855
    %3882 = vmatprep.subr.mxu0 0.0
    %3883 = vmatpush1.msra.mxu0 0.0
    %3884 = vmatprep.subr.mxu0 0.0
    %3885 = vmatpush1.msra.mxu0 0.0
    %3886 = vmatprep.subr.mxu0 0.0
    %3887 = vmatpush1.msra.mxu0 0.0
    %3888 = vmatprep.subr.mxu0 0.0
    %3889 = vmatpush1.msra.mxu0 0.0
    %3890 = vmatprep.subr.mxu0 0.0
    %3891 = vmatpush1.msra.mxu0 0.0
    %3892 = vmatprep.subr.mxu0 0.0
    %3893 = vmatpush1.msra.mxu0 0.0
    %3894 = vmatprep.subr.mxu0 0.0
    %3895 = vmatpush1.msra.mxu0 0.0
    %3896 = vmatprep.subr.mxu0 0.0
    %3897 = vmatpush1.msra.mxu0 0.0
    %3898 = vmatprep.subr.mxu0 0.0
    %3899 = vmatpush1.msra.mxu0 0.0
    %3900 = vmatprep.subr.mxu0 0.0
    %3901 = vmatpush1.msra.mxu0 0.0
    %3902 = vmatprep.subr.mxu0 0.0
    %3903 = vmatpush1.msra.mxu0 0.0
    %3904 = vmatprep.subr.mxu0 0.0
    %3905 = vmatpush1.msra.mxu0 0.0
    %3906 = vmatprep.subr.mxu0 0.0
    %3907 = vmatpush1.msra.mxu0 0.0
    %3908 = vmatprep.subr.mxu0 0.0
    %3909 = vmatpush1.msra.mxu0 0.0
    %3910 = vmatprep.subr.mxu0 0.0
    %3911 = vmatpush1.msra.mxu0 0.0
    %3912 = vmatprep.subr.mxu0 0.0
    %3913 = vmatpush1.msra.mxu0 0.0
    %3914 = vmatprep.subr.mxu0 0.0
    %3915 = vmatpush1.msra.mxu0 0.0
    %3916 = vmatprep.subr.mxu0 0.0
    %3917 = vmatpush1.msra.mxu0 0.0
    %3918 = vmatprep.subr.mxu0 0.0
    %3919 = vmatpush1.msra.mxu0 0.0
    %3920 = vmatprep.subr.mxu0 0.0
    %3921 = vmatpush1.msra.mxu0 0.0
    %3922 = vmatprep.subr.mxu0 0.0
    %3923 = vmatpush1.msra.mxu0 0.0
    %3924 = vmatprep.subr.mxu0 0.0
    %3925 = vmatpush1.msra.mxu0 0.0
    %3926 = vmatprep.subr.mxu0 0.0
    %3927 = vmatpush1.msra.mxu0 0.0
    %3928 = vmatprep.subr.mxu0 0.0
    %3929 = vmatpush1.msra.mxu0 0.0
    %3930 = vmatprep.subr.mxu0 0.0
    %3931 = vmatpush1.msra.mxu0 0.0
    %3932 = vmatprep.subr.mxu0 0.0
    %3933 = vmatpush1.msra.mxu0 0.0
    %3934 = vmatprep.subr.mxu0 0.0
    %3935 = vmatpush1.msra.mxu0 0.0
    %3936 = vmatprep.subr.mxu0 0.0
    %3937 = vmatpush1.msra.mxu0 0.0
    %3938 = vmatprep.subr.mxu0 0.0
    %3939 = vmatpush1.msra.mxu0 0.0
    %3940 = vmatprep.subr.mxu0 0.0
    %3941 = vmatpush1.msra.mxu0 0.0
    %3942 = vmatprep.subr.mxu0 0.0
    %3943 = vmatpush1.msra.mxu0 0.0
    %3944 = vmatprep.mubr.f32.mxu0 0.0
    %3945 = vmatmul.mubr.f32.gmra.mrb[0].mxu0 %v2934
    %v3946 = vpop.f32.mrb[0].mxu0
    %v3947 = vadd.f32 0.0, %v3946
    %v3948 = vpop.f32.mrb[0].mxu0
    %3949 = vdwg.mxu0
    %3950 = vmatprep.subr.mxu0 0.0
    %3951 = vmatpush1.msra.mxu0 %v3855
    %3952 = vmatprep.subr.mxu0 0.0
    %3953 = vmatpush1.msra.mxu0 0.0
    %3954 = vmatprep.subr.mxu0 0.0
    %3955 = vmatpush1.msra.mxu0 0.0
    %3956 = vmatprep.subr.mxu0 0.0
    %3957 = vmatpush1.msra.mxu0 0.0
    %3958 = vmatprep.subr.mxu0 0.0
    %3959 = vmatpush1.msra.mxu0 0.0
    %3960 = vmatprep.subr.mxu0 0.0
    %3961 = vmatpush1.msra.mxu0 0.0
    %3962 = vmatprep.subr.mxu0 0.0
    %3963 = vmatpush1.msra.mxu0 0.0
    %3964 = vmatprep.subr.mxu0 0.0
    %3965 = vmatpush1.msra.mxu0 0.0
    %3966 = vmatprep.subr.mxu0 0.0
    %3967 = vmatpush1.msra.mxu0 0.0
    %3968 = vmatprep.subr.mxu0 0.0
    %3969 = vmatpush1.msra.mxu0 0.0
    %3970 = vmatprep.subr.mxu0 0.0
    %3971 = vmatpush1.msra.mxu0 0.0
    %3972 = vmatprep.subr.mxu0 0.0
    %3973 = vmatpush1.msra.mxu0 0.0
    %3974 = vmatprep.subr.mxu0 0.0
    %3975 = vmatpush1.msra.mxu0 0.0
    %3976 = vmatprep.subr.mxu0 0.0
    %3977 = vmatpush1.msra.mxu0 0.0
    %3978 = vmatprep.subr.mxu0 0.0
    %3979 = vmatpush1.msra.mxu0 0.0
    %3980 = vmatprep.subr.mxu0 0.0
    %3981 = vmatpush1.msra.mxu0 0.0
    %3982 = vmatprep.subr.mxu0 0.0
    %3983 = vmatpush1.msra.mxu0 0.0
    %3984 = vmatprep.subr.mxu0 0.0
    %3985 = vmatpush1.msra.mxu0 0.0
    %3986 = vmatprep.subr.mxu0 0.0
    %3987 = vmatpush1.msra.mxu0 0.0
    %3988 = vmatprep.subr.mxu0 0.0
    %3989 = vmatpush1.msra.mxu0 0.0
    %3990 = vmatprep.subr.mxu0 0.0
    %3991 = vmatpush1.msra.mxu0 0.0
    %3992 = vmatprep.subr.mxu0 0.0
    %3993 = vmatpush1.msra.mxu0 0.0
    %3994 = vmatprep.subr.mxu0 0.0
    %3995 = vmatpush1.msra.mxu0 0.0
    %3996 = vmatprep.subr.mxu0 0.0
    %3997 = vmatpush1.msra.mxu0 0.0
    %3998 = vmatprep.subr.mxu0 0.0
    %3999 = vmatpush1.msra.mxu0 0.0
    %4000 = vmatprep.subr.mxu0 0.0
    %4001 = vmatpush1.msra.mxu0 0.0
    %4002 = vmatprep.subr.mxu0 0.0
    %4003 = vmatpush1.msra.mxu0 0.0
    %4004 = vmatprep.subr.mxu0 0.0
    %4005 = vmatpush1.msra.mxu0 0.0
    %4006 = vmatprep.subr.mxu0 0.0
    %4007 = vmatpush1.msra.mxu0 0.0
    %4008 = vmatprep.subr.mxu0 0.0
    %4009 = vmatpush1.msra.mxu0 0.0
    %4010 = vmatprep.subr.mxu0 0.0
    %4011 = vmatpush1.msra.mxu0 0.0
    %4012 = vmatprep.subr.mxu0 0.0
    %4013 = vmatpush1.msra.mxu0 0.0
    %4014 = vmatprep.mubr.f32.mxu0 0.0
    %4015 = vmatmul.mubr.f32.gmra.mrb[0].mxu0 %v3007
    %v4016 = vpop.f32.mrb[0].mxu0
    %v4017 = vadd.f32 0.0, %v4016
    %v4018 = vpop.f32.mrb[0].mxu0
    %4019 = vdwg.mxu0
    %v4021 = vsel %vm546, %v4017, 0
    %4023 = vmatprep.subr.mxu0 0.0
    %4024 = vmatpush1.msra.mxu0 %v3864
    %4025 = vmatprep.subr.mxu0 0.0
    %4026 = vmatpush1.msra.mxu0 %v3865
    %4027 = vmatprep.subr.mxu0 0.0
    %4028 = vmatpush1.msra.mxu0 %v3866
    %4029 = vmatprep.subr.mxu0 0.0
    %4030 = vmatpush1.msra.mxu0 %v3867
    %4031 = vmatprep.subr.mxu0 0.0
    %4032 = vmatpush1.msra.mxu0 %v3868
    %4033 = vmatprep.subr.mxu0 0.0
    %4034 = vmatpush1.msra.mxu0 %v3869
    %4035 = vmatprep.subr.mxu0 0.0
    %4036 = vmatpush1.msra.mxu0 %v3870
    %4037 = vmatprep.subr.mxu0 0.0
    %4038 = vmatpush1.msra.mxu0 %v3871
    %4039 = vmatprep.subr.mxu0 0.0
    %4040 = vmatpush1.msra.mxu0 0.0
    %4041 = vmatprep.subr.mxu0 0.0
    %4042 = vmatpush1.msra.mxu0 0.0
    %4043 = vmatprep.subr.mxu0 0.0
    %4044 = vmatpush1.msra.mxu0 0.0
    %4045 = vmatprep.subr.mxu0 0.0
    %4046 = vmatpush1.msra.mxu0 0.0
    %4047 = vmatprep.subr.mxu0 0.0
    %4048 = vmatpush1.msra.mxu0 0.0
    %4049 = vmatprep.subr.mxu0 0.0
    %4050 = vmatpush1.msra.mxu0 0.0
    %4051 = vmatprep.subr.mxu0 0.0
    %4052 = vmatpush1.msra.mxu0 0.0
    %4053 = vmatprep.subr.mxu0 0.0
    %4054 = vmatpush1.msra.mxu0 0.0
    %4055 = vmatprep.subr.mxu0 0.0
    %4056 = vmatpush1.msra.mxu0 0.0
    %4057 = vmatprep.subr.mxu0 0.0
    %4058 = vmatpush1.msra.mxu0 0.0
    %4059 = vmatprep.subr.mxu0 0.0
    %4060 = vmatpush1.msra.mxu0 0.0
    %4061 = vmatprep.subr.mxu0 0.0
    %4062 = vmatpush1.msra.mxu0 0.0
    %4063 = vmatprep.subr.mxu0 0.0
    %4064 = vmatpush1.msra.mxu0 0.0
    %4065 = vmatprep.subr.mxu0 0.0
    %4066 = vmatpush1.msra.mxu0 0.0
    %4067 = vmatprep.subr.mxu0 0.0
    %4068 = vmatpush1.msra.mxu0 0.0
    %4069 = vmatprep.subr.mxu0 0.0
    %4070 = vmatpush1.msra.mxu0 0.0
    %4071 = vmatprep.subr.mxu0 0.0
    %4072 = vmatpush1.msra.mxu0 0.0
    %4073 = vmatprep.subr.mxu0 0.0
    %4074 = vmatpush1.msra.mxu0 0.0
    %4075 = vmatprep.subr.mxu0 0.0
    %4076 = vmatpush1.msra.mxu0 0.0
    %4077 = vmatprep.subr.mxu0 0.0
    %4078 = vmatpush1.msra.mxu0 0.0
    %4079 = vmatprep.subr.mxu0 0.0
    %4080 = vmatpush1.msra.mxu0 0.0
    %4081 = vmatprep.subr.mxu0 0.0
    %4082 = vmatpush1.msra.mxu0 0.0
    %4083 = vmatprep.subr.mxu0 0.0
    %4084 = vmatpush1.msra.mxu0 0.0
    %4085 = vmatprep.subr.mxu0 0.0
    %4086 = vmatpush1.msra.mxu0 0.0
    %4087 = vmatprep.mubr.f32.mxu0 0.0
    %4088 = vmatmul.mubr.f32.gmra.mrb[0].mxu0 %v4021
    %v4089 = vpop.f32.mrb[0].mxu0
    %v4090 = vadd.f32 0.0, %v4089
    %v4091 = vpop.f32.mrb[0].mxu0
    %4092 = vdwg.mxu0
    %v4094 = vsel %vm546, %v3947, 0
    %4096 = vmatprep.subr.mxu0 0.0
    %4097 = vmatpush1.msra.mxu0 %v3856
    %4098 = vmatprep.subr.mxu0 0.0
    %4099 = vmatpush1.msra.mxu0 %v3857
    %4100 = vmatprep.subr.mxu0 0.0
    %4101 = vmatpush1.msra.mxu0 %v3858
    %4102 = vmatprep.subr.mxu0 0.0
    %4103 = vmatpush1.msra.mxu0 %v3859
    %4104 = vmatprep.subr.mxu0 0.0
    %4105 = vmatpush1.msra.mxu0 %v3860
    %4106 = vmatprep.subr.mxu0 0.0
    %4107 = vmatpush1.msra.mxu0 %v3861
    %4108 = vmatprep.subr.mxu0 0.0
    %4109 = vmatpush1.msra.mxu0 %v3862
    %4110 = vmatprep.subr.mxu0 0.0
    %4111 = vmatpush1.msra.mxu0 %v3863
    %4112 = vmatprep.subr.mxu0 0.0
    %4113 = vmatpush1.msra.mxu0 0.0
    %4114 = vmatprep.subr.mxu0 0.0
    %4115 = vmatpush1.msra.mxu0 0.0
    %4116 = vmatprep.subr.mxu0 0.0
    %4117 = vmatpush1.msra.mxu0 0.0
    %4118 = vmatprep.subr.mxu0 0.0
    %4119 = vmatpush1.msra.mxu0 0.0
    %4120 = vmatprep.subr.mxu0 0.0
    %4121 = vmatpush1.msra.mxu0 0.0
    %4122 = vmatprep.subr.mxu0 0.0
    %4123 = vmatpush1.msra.mxu0 0.0
    %4124 = vmatprep.subr.mxu0 0.0
    %4125 = vmatpush1.msra.mxu0 0.0
    %4126 = vmatprep.subr.mxu0 0.0
    %4127 = vmatpush1.msra.mxu0 0.0
    %4128 = vmatprep.subr.mxu0 0.0
    %4129 = vmatpush1.msra.mxu0 0.0
    %4130 = vmatprep.subr.mxu0 0.0
    %4131 = vmatpush1.msra.mxu0 0.0
    %4132 = vmatprep.subr.mxu0 0.0
    %4133 = vmatpush1.msra.mxu0 0.0
    %4134 = vmatprep.subr.mxu0 0.0
    %4135 = vmatpush1.msra.mxu0 0.0
    %4136 = vmatprep.subr.mxu0 0.0
    %4137 = vmatpush1.msra.mxu0 0.0
    %4138 = vmatprep.subr.mxu0 0.0
    %4139 = vmatpush1.msra.mxu0 0.0
    %4140 = vmatprep.subr.mxu0 0.0
    %4141 = vmatpush1.msra.mxu0 0.0
    %4142 = vmatprep.subr.mxu0 0.0
    %4143 = vmatpush1.msra.mxu0 0.0
    %4144 = vmatprep.subr.mxu0 0.0
    %4145 = vmatpush1.msra.mxu0 0.0
    %4146 = vmatprep.subr.mxu0 0.0
    %4147 = vmatpush1.msra.mxu0 0.0
    %4148 = vmatprep.subr.mxu0 0.0
    %4149 = vmatpush1.msra.mxu0 0.0
    %4150 = vmatprep.subr.mxu0 0.0
    %4151 = vmatpush1.msra.mxu0 0.0
    %4152 = vmatprep.subr.mxu0 0.0
    %4153 = vmatpush1.msra.mxu0 0.0
    %4154 = vmatprep.subr.mxu0 0.0
    %4155 = vmatpush1.msra.mxu0 0.0
    %4156 = vmatprep.subr.mxu0 0.0
    %4157 = vmatpush1.msra.mxu0 0.0
    %4158 = vmatprep.subr.mxu0 0.0
    %4159 = vmatpush1.msra.mxu0 0.0
    %4160 = vmatprep.mubr.f32.mxu0 0.0
    %4161 = vmatmul.mubr.f32.gmra.mrb[0].mxu0 %v4094
    %v4162 = vpop.f32.mrb[0].mxu0
    %v4163 = vadd.f32 %v4090, %v4162
    %v4164 = vpop.f32.mrb[0].mxu0
    %4165 = vdwg.mxu0
    %4166 = vmatprep.subr.mxu0 0.0
    %4167 = vmatpush1.msra.mxu0 %v3855
    %4168 = vmatprep.subr.mxu0 0.0
    %4169 = vmatpush1.msra.mxu0 0.0
    %4170 = vmatprep.subr.mxu0 0.0
    %4171 = vmatpush1.msra.mxu0 0.0
    %4172 = vmatprep.subr.mxu0 0.0
    %4173 = vmatpush1.msra.mxu0 0.0
    %4174 = vmatprep.subr.mxu0 0.0
    %4175 = vmatpush1.msra.mxu0 0.0
    %4176 = vmatprep.subr.mxu0 0.0
    %4177 = vmatpush1.msra.mxu0 0.0
    %4178 = vmatprep.subr.mxu0 0.0
    %4179 = vmatpush1.msra.mxu0 0.0
    %4180 = vmatprep.subr.mxu0 0.0
    %4181 = vmatpush1.msra.mxu0 0.0
    %4182 = vmatprep.subr.mxu0 0.0
    %4183 = vmatpush1.msra.mxu0 0.0
    %4184 = vmatprep.subr.mxu0 0.0
    %4185 = vmatpush1.msra.mxu0 0.0
    %4186 = vmatprep.subr.mxu0 0.0
    %4187 = vmatpush1.msra.mxu0 0.0
    %4188 = vmatprep.subr.mxu0 0.0
    %4189 = vmatpush1.msra.mxu0 0.0
    %4190 = vmatprep.subr.mxu0 0.0
    %4191 = vmatpush1.msra.mxu0 0.0
    %4192 = vmatprep.subr.mxu0 0.0
    %4193 = vmatpush1.msra.mxu0 0.0
    %4194 = vmatprep.subr.mxu0 0.0
    %4195 = vmatpush1.msra.mxu0 0.0
    %4196 = vmatprep.subr.mxu0 0.0
    %4197 = vmatpush1.msra.mxu0 0.0
    %4198 = vmatprep.subr.mxu0 0.0
    %4199 = vmatpush1.msra.mxu0 0.0
    %4200 = vmatprep.subr.mxu0 0.0
    %4201 = vmatpush1.msra.mxu0 0.0
    %4202 = vmatprep.subr.mxu0 0.0
    %4203 = vmatpush1.msra.mxu0 0.0
    %4204 = vmatprep.subr.mxu0 0.0
    %4205 = vmatpush1.msra.mxu0 0.0
    %4206 = vmatprep.subr.mxu0 0.0
    %4207 = vmatpush1.msra.mxu0 0.0
    %4208 = vmatprep.subr.mxu0 0.0
    %4209 = vmatpush1.msra.mxu0 0.0
    %4210 = vmatprep.subr.mxu0 0.0
    %4211 = vmatpush1.msra.mxu0 0.0
    %4212 = vmatprep.subr.mxu0 0.0
    %4213 = vmatpush1.msra.mxu0 0.0
    %4214 = vmatprep.subr.mxu0 0.0
    %4215 = vmatpush1.msra.mxu0 0.0
    %4216 = vmatprep.subr.mxu0 0.0
    %4217 = vmatpush1.msra.mxu0 0.0
    %4218 = vmatprep.subr.mxu0 0.0
    %4219 = vmatpush1.msra.mxu0 0.0
    %4220 = vmatprep.subr.mxu0 0.0
    %4221 = vmatpush1.msra.mxu0 0.0
    %4222 = vmatprep.subr.mxu0 0.0
    %4223 = vmatpush1.msra.mxu0 0.0
    %4224 = vmatprep.subr.mxu0 0.0
    %4225 = vmatpush1.msra.mxu0 0.0
    %4226 = vmatprep.subr.mxu0 0.0
    %4227 = vmatpush1.msra.mxu0 0.0
    %4228 = vmatprep.subr.mxu0 0.0
    %4229 = vmatpush1.msra.mxu0 0.0
    %4230 = vmatprep.mubr.f32.mxu0 0.0
    %4231 = vmatmul.mubr.f32.gmra.mrb[0].mxu0 %v3226
    %v4232 = vpop.f32.mrb[0].mxu0
    %v4233 = vadd.f32 0.0, %v4232
    %v4234 = vpop.f32.mrb[0].mxu0
    %4235 = vdwg.mxu0
    %v4237 = vsel %vm546, %v4233, 0
    %4239 = vmatprep.subr.mxu0 0.0
    %4240 = vmatpush1.msra.mxu0 %v3872
    %4241 = vmatprep.subr.mxu0 0.0
    %4242 = vmatpush1.msra.mxu0 %v3873
    %4243 = vmatprep.subr.mxu0 0.0
    %4244 = vmatpush1.msra.mxu0 %v3874
    %4245 = vmatprep.subr.mxu0 0.0
    %4246 = vmatpush1.msra.mxu0 %v3875
    %4247 = vmatprep.subr.mxu0 0.0
    %4248 = vmatpush1.msra.mxu0 %v3876
    %4249 = vmatprep.subr.mxu0 0.0
    %4250 = vmatpush1.msra.mxu0 %v3877
    %4251 = vmatprep.subr.mxu0 0.0
    %4252 = vmatpush1.msra.mxu0 %v3878
    %4253 = vmatprep.subr.mxu0 0.0
    %4254 = vmatpush1.msra.mxu0 %v3879
    %4255 = vmatprep.subr.mxu0 0.0
    %4256 = vmatpush1.msra.mxu0 0.0
    %4257 = vmatprep.subr.mxu0 0.0
    %4258 = vmatpush1.msra.mxu0 0.0
    %4259 = vmatprep.subr.mxu0 0.0
    %4260 = vmatpush1.msra.mxu0 0.0
    %4261 = vmatprep.subr.mxu0 0.0
    %4262 = vmatpush1.msra.mxu0 0.0
    %4263 = vmatprep.subr.mxu0 0.0
    %4264 = vmatpush1.msra.mxu0 0.0
    %4265 = vmatprep.subr.mxu0 0.0
    %4266 = vmatpush1.msra.mxu0 0.0
    %4267 = vmatprep.subr.mxu0 0.0
    %4268 = vmatpush1.msra.mxu0 0.0
    %4269 = vmatprep.subr.mxu0 0.0
    %4270 = vmatpush1.msra.mxu0 0.0
    %4271 = vmatprep.subr.mxu0 0.0
    %4272 = vmatpush1.msra.mxu0 0.0
    %4273 = vmatprep.subr.mxu0 0.0
    %4274 = vmatpush1.msra.mxu0 0.0
    %4275 = vmatprep.subr.mxu0 0.0
    %4276 = vmatpush1.msra.mxu0 0.0
    %4277 = vmatprep.subr.mxu0 0.0
    %4278 = vmatpush1.msra.mxu0 0.0
    %4279 = vmatprep.subr.mxu0 0.0
    %4280 = vmatpush1.msra.mxu0 0.0
    %4281 = vmatprep.subr.mxu0 0.0
    %4282 = vmatpush1.msra.mxu0 0.0
    %4283 = vmatprep.subr.mxu0 0.0
    %4284 = vmatpush1.msra.mxu0 0.0
    %4285 = vmatprep.subr.mxu0 0.0
    %4286 = vmatpush1.msra.mxu0 0.0
    %4287 = vmatprep.subr.mxu0 0.0
    %4288 = vmatpush1.msra.mxu0 0.0
    %4289 = vmatprep.subr.mxu0 0.0
    %4290 = vmatpush1.msra.mxu0 0.0
    %4291 = vmatprep.subr.mxu0 0.0
    %4292 = vmatpush1.msra.mxu0 0.0
    %4293 = vmatprep.subr.mxu0 0.0
    %4294 = vmatpush1.msra.mxu0 0.0
    %4295 = vmatprep.subr.mxu0 0.0
    %4296 = vmatpush1.msra.mxu0 0.0
    %4297 = vmatprep.subr.mxu0 0.0
    %4298 = vmatpush1.msra.mxu0 0.0
    %4299 = vmatprep.subr.mxu0 0.0
    %4300 = vmatpush1.msra.mxu0 0.0
    %4301 = vmatprep.subr.mxu0 0.0
    %4302 = vmatpush1.msra.mxu0 0.0
    %4303 = vmatprep.mubr.f32.mxu0 0.0
    %4304 = vmatmul.mubr.f32.gmra.mrb[0].mxu0 %v4237
    %v4305 = vpop.f32.mrb[0].mxu0
    %v4306 = vadd.f32 0.0, %v4305
    %v4307 = vpop.f32.mrb[0].mxu0
    %4308 = vdwg.mxu0
    %v4309 = vadd.f32 %v4163, %v4306
    %v4310 = vld [vmem:[#allocation25] sm:$0x1]
    %v4312 = vlaneseq
    %v4313 = vshrl.u32 %v4312, 7
    %v4314 = vsub.s32 0, %v4313
    %v4315 = vrot.slane %v4310, %v4314
    %v4317 = vadd.f32 %v4309, %v4315
    %v4318 = vxor.u32 %v4317, 2147483648
    %v4319 = vmul.f32 %v4318, 1.442695
    %v4320 = vpow.pop %v4319
    %v4321 = vadd.f32 %v4320, 1.0
    %v4322 = vrcp.pop %v4321
    %v4323 = vmul.f32 1.0, %v4322
    %v4324 = vmul.f32 %v4317, %v4323
    %v4325 = vld [vmem:[#allocation15] sm:$0xff]
    %v4326 = vld [vmem:[#allocation15 + $0x8] sm:$0xff]
    %v4327 = vld [vmem:[#allocation15 + $0x10] sm:$0xff]
    %v4328 = vld [vmem:[#allocation15 + $0x18] sm:$0xff]
    %v4329 = vld [vmem:[#allocation15 + $0x20] sm:$0xff]
    %v4330 = vld [vmem:[#allocation15 + $0x28] sm:$0xff]
    %v4331 = vld [vmem:[#allocation15 + $0x30] sm:$0xff]
    %v4332 = vld [vmem:[#allocation15 + $0x38] sm:$0xff]
    %v4333 = vld [vmem:[#allocation16] sm:$0xff]
    %v4334 = vld [vmem:[#allocation16 + $0x8] sm:$0xff]
    %v4335 = vld [vmem:[#allocation16 + $0x10] sm:$0xff]
    %v4336 = vld [vmem:[#allocation16 + $0x18] sm:$0xff]
    %v4337 = vld [vmem:[#allocation16 + $0x20] sm:$0xff]
    %v4338 = vld [vmem:[#allocation16 + $0x28] sm:$0xff]
    %v4339 = vld [vmem:[#allocation16 + $0x30] sm:$0xff]
    %v4340 = vld [vmem:[#allocation16 + $0x38] sm:$0xff]
    %v4342 = vsel %vm546, %v4324, 0
    %4344 = vmatprep.subr.mxu0 0.0
    %4345 = vmatpush1.msra.mxu0 %v4333
    %4346 = vmatprep.subr.mxu0 0.0
    %4347 = vmatpush1.msra.mxu0 %v4334
    %4348 = vmatprep.subr.mxu0 0.0
    %4349 = vmatpush1.msra.mxu0 %v4335
    %4350 = vmatprep.subr.mxu0 0.0
    %4351 = vmatpush1.msra.mxu0 %v4336
    %4352 = vmatprep.subr.mxu0 0.0
    %4353 = vmatpush1.msra.mxu0 %v4337
    %4354 = vmatprep.subr.mxu0 0.0
    %4355 = vmatpush1.msra.mxu0 %v4338
    %4356 = vmatprep.subr.mxu0 0.0
    %4357 = vmatpush1.msra.mxu0 %v4339
    %4358 = vmatprep.subr.mxu0 0.0
    %4359 = vmatpush1.msra.mxu0 %v4340
    %4360 = vmatprep.subr.mxu0 0.0
    %4361 = vmatpush1.msra.mxu0 0.0
    %4362 = vmatprep.subr.mxu0 0.0
    %4363 = vmatpush1.msra.mxu0 0.0
    %4364 = vmatprep.subr.mxu0 0.0
    %4365 = vmatpush1.msra.mxu0 0.0
    %4366 = vmatprep.subr.mxu0 0.0
    %4367 = vmatpush1.msra.mxu0 0.0
    %4368 = vmatprep.subr.mxu0 0.0
    %4369 = vmatpush1.msra.mxu0 0.0
    %4370 = vmatprep.subr.mxu0 0.0
    %4371 = vmatpush1.msra.mxu0 0.0
    %4372 = vmatprep.subr.mxu0 0.0
    %4373 = vmatpush1.msra.mxu0 0.0
    %4374 = vmatprep.subr.mxu0 0.0
    %4375 = vmatpush1.msra.mxu0 0.0
    %4376 = vmatprep.subr.mxu0 0.0
    %4377 = vmatpush1.msra.mxu0 0.0
    %4378 = vmatprep.subr.mxu0 0.0
    %4379 = vmatpush1.msra.mxu0 0.0
    %4380 = vmatprep.subr.mxu0 0.0
    %4381 = vmatpush1.msra.mxu0 0.0
    %4382 = vmatprep.subr.mxu0 0.0
    %4383 = vmatpush1.msra.mxu0 0.0
    %4384 = vmatprep.subr.mxu0 0.0
    %4385 = vmatpush1.msra.mxu0 0.0
    %4386 = vmatprep.subr.mxu0 0.0
    %4387 = vmatpush1.msra.mxu0 0.0
    %4388 = vmatprep.subr.mxu0 0.0
    %4389 = vmatpush1.msra.mxu0 0.0
    %4390 = vmatprep.subr.mxu0 0.0
    %4391 = vmatpush1.msra.mxu0 0.0
    %4392 = vmatprep.subr.mxu0 0.0
    %4393 = vmatpush1.msra.mxu0 0.0
    %4394 = vmatprep.subr.mxu0 0.0
    %4395 = vmatpush1.msra.mxu0 0.0
    %4396 = vmatprep.subr.mxu0 0.0
    %4397 = vmatpush1.msra.mxu0 0.0
    %4398 = vmatprep.subr.mxu0 0.0
    %4399 = vmatpush1.msra.mxu0 0.0
    %4400 = vmatprep.subr.mxu0 0.0
    %4401 = vmatpush1.msra.mxu0 0.0
    %4402 = vmatprep.subr.mxu0 0.0
    %4403 = vmatpush1.msra.mxu0 0.0
    %4404 = vmatprep.subr.mxu0 0.0
    %4405 = vmatpush1.msra.mxu0 0.0
    %4406 = vmatprep.subr.mxu0 0.0
    %4407 = vmatpush1.msra.mxu0 0.0
    %4408 = vmatprep.mubr.f32.mxu0 0.0
    %4409 = vmatmul.mubr.f32.gmra.mrb[0].mxu0 %v4342
    %v4410 = vpop.f32.mrb[0].mxu0
    %v4411 = vadd.f32 0.0, %v4410
    %v4412 = vpop.f32.mrb[0].mxu0
    %4413 = vdwg.mxu0
    %v4415 = vsel %vm546, %v2435, 0
    %4417 = vmatprep.subr.mxu0 0.0
    %4418 = vmatpush1.msra.mxu0 %v4325
    %4419 = vmatprep.subr.mxu0 0.0
    %4420 = vmatpush1.msra.mxu0 %v4326
    %4421 = vmatprep.subr.mxu0 0.0
    %4422 = vmatpush1.msra.mxu0 %v4327
    %4423 = vmatprep.subr.mxu0 0.0
    %4424 = vmatpush1.msra.mxu0 %v4328
    %4425 = vmatprep.subr.mxu0 0.0
    %4426 = vmatpush1.msra.mxu0 %v4329
    %4427 = vmatprep.subr.mxu0 0.0
    %4428 = vmatpush1.msra.mxu0 %v4330
    %4429 = vmatprep.subr.mxu0 0.0
    %4430 = vmatpush1.msra.mxu0 %v4331
    %4431 = vmatprep.subr.mxu0 0.0
    %4432 = vmatpush1.msra.mxu0 %v4332
    %4433 = vmatprep.subr.mxu0 0.0
    %4434 = vmatpush1.msra.mxu0 0.0
    %4435 = vmatprep.subr.mxu0 0.0
    %4436 = vmatpush1.msra.mxu0 0.0
    %4437 = vmatprep.subr.mxu0 0.0
    %4438 = vmatpush1.msra.mxu0 0.0
    %4439 = vmatprep.subr.mxu0 0.0
    %4440 = vmatpush1.msra.mxu0 0.0
    %4441 = vmatprep.subr.mxu0 0.0
    %4442 = vmatpush1.msra.mxu0 0.0
    %4443 = vmatprep.subr.mxu0 0.0
    %4444 = vmatpush1.msra.mxu0 0.0
    %4445 = vmatprep.subr.mxu0 0.0
    %4446 = vmatpush1.msra.mxu0 0.0
    %4447 = vmatprep.subr.mxu0 0.0
    %4448 = vmatpush1.msra.mxu0 0.0
    %4449 = vmatprep.subr.mxu0 0.0
    %4450 = vmatpush1.msra.mxu0 0.0
    %4451 = vmatprep.subr.mxu0 0.0
    %4452 = vmatpush1.msra.mxu0 0.0
    %4453 = vmatprep.subr.mxu0 0.0
    %4454 = vmatpush1.msra.mxu0 0.0
    %4455 = vmatprep.subr.mxu0 0.0
    %4456 = vmatpush1.msra.mxu0 0.0
    %4457 = vmatprep.subr.mxu0 0.0
    %4458 = vmatpush1.msra.mxu0 0.0
    %4459 = vmatprep.subr.mxu0 0.0
    %4460 = vmatpush1.msra.mxu0 0.0
    %4461 = vmatprep.subr.mxu0 0.0
    %4462 = vmatpush1.msra.mxu0 0.0
    %4463 = vmatprep.subr.mxu0 0.0
    %4464 = vmatpush1.msra.mxu0 0.0
    %4465 = vmatprep.subr.mxu0 0.0
    %4466 = vmatpush1.msra.mxu0 0.0
    %4467 = vmatprep.subr.mxu0 0.0
    %4468 = vmatpush1.msra.mxu0 0.0
    %4469 = vmatprep.subr.mxu0 0.0
    %4470 = vmatpush1.msra.mxu0 0.0
    %4471 = vmatprep.subr.mxu0 0.0
    %4472 = vmatpush1.msra.mxu0 0.0
    %4473 = vmatprep.subr.mxu0 0.0
    %4474 = vmatpush1.msra.mxu0 0.0
    %4475 = vmatprep.subr.mxu0 0.0
    %4476 = vmatpush1.msra.mxu0 0.0
    %4477 = vmatprep.subr.mxu0 0.0
    %4478 = vmatpush1.msra.mxu0 0.0
    %4479 = vmatprep.subr.mxu0 0.0
    %4480 = vmatpush1.msra.mxu0 0.0
    %4481 = vmatprep.mubr.f32.mxu0 0.0
    %4482 = vmatmul.mubr.f32.gmra.mrb[0].mxu0 %v4415
    %v4483 = vpop.f32.mrb[0].mxu0
    %v4484 = vadd.f32 %v4411, %v4483
    %v4485 = vpop.f32.mrb[0].mxu0
    %4486 = vdwg.mxu0
    %v4487 = vld [vmem:[#allocation27] sm:$0x1]
    %v4489 = vlaneseq
    %v4490 = vshrl.u32 %v4489, 7
    %v4491 = vsub.s32 0, %v4490
    %v4492 = vrot.slane %v4487, %v4491
    %v4494 = vadd.f32 %v4484, %v4492
    %v4495 = vxor.u32 %v4494, 2147483648
    %v4496 = vmul.f32 %v4495, 1.442695
    %v4497 = vpow.pop %v4496
    %v4498 = vadd.f32 %v4497, 1.0
    %v4499 = vrcp.pop %v4498
    %v4500 = vmul.f32 1.0, %v4499
    %v4501 = vmul.f32 %v4494, %v4500
    %v4502 = vld [vmem:[#allocation18] sm:$0xff]
    %v4503 = vld [vmem:[#allocation18 + $0x8] sm:$0xff]
    %v4504 = vld [vmem:[#allocation18 + $0x10] sm:$0xff]
    %v4505 = vld [vmem:[#allocation18 + $0x18] sm:$0xff]
    %v4506 = vld [vmem:[#allocation18 + $0x20] sm:$0xff]
    %v4507 = vld [vmem:[#allocation18 + $0x28] sm:$0xff]
    %v4508 = vld [vmem:[#allocation18 + $0x30] sm:$0xff]
    %v4509 = vld [vmem:[#allocation18 + $0x38] sm:$0xff]
    %v4510 = vld [vmem:[#allocation28] sm:$0x1]
    %v4512 = vlaneseq
    %v4513 = vshrl.u32 %v4512, 7
    %v4514 = vsub.s32 0, %v4513
    %v4515 = vrot.slane %v4510, %v4514
    %v4518 = vsel %vm546, %v4501, 0
    %4520 = vmatprep.subr.mxu0 0.0
    %4521 = vmatpush1.msra.mxu0 %v4502
    %4522 = vmatprep.subr.mxu0 0.0
    %4523 = vmatpush1.msra.mxu0 %v4503
    %4524 = vmatprep.subr.mxu0 0.0
    %4525 = vmatpush1.msra.mxu0 %v4504
    %4526 = vmatprep.subr.mxu0 0.0
    %4527 = vmatpush1.msra.mxu0 %v4505
    %4528 = vmatprep.subr.mxu0 0.0
    %4529 = vmatpush1.msra.mxu0 %v4506
    %4530 = vmatprep.subr.mxu0 0.0
    %4531 = vmatpush1.msra.mxu0 %v4507
    %4532 = vmatprep.subr.mxu0 0.0
    %4533 = vmatpush1.msra.mxu0 %v4508
    %4534 = vmatprep.subr.mxu0 0.0
    %4535 = vmatpush1.msra.mxu0 %v4509
    %4536 = vmatprep.subr.mxu0 0.0
    %4537 = vmatpush1.msra.mxu0 0.0
    %4538 = vmatprep.subr.mxu0 0.0
    %4539 = vmatpush1.msra.mxu0 0.0
    %4540 = vmatprep.subr.mxu0 0.0
    %4541 = vmatpush1.msra.mxu0 0.0
    %4542 = vmatprep.subr.mxu0 0.0
    %4543 = vmatpush1.msra.mxu0 0.0
    %4544 = vmatprep.subr.mxu0 0.0
    %4545 = vmatpush1.msra.mxu0 0.0
    %4546 = vmatprep.subr.mxu0 0.0
    %4547 = vmatpush1.msra.mxu0 0.0
    %4548 = vmatprep.subr.mxu0 0.0
    %4549 = vmatpush1.msra.mxu0 0.0
    %4550 = vmatprep.subr.mxu0 0.0
    %4551 = vmatpush1.msra.mxu0 0.0
    %4552 = vmatprep.subr.mxu0 0.0
    %4553 = vmatpush1.msra.mxu0 0.0
    %4554 = vmatprep.subr.mxu0 0.0
    %4555 = vmatpush1.msra.mxu0 0.0
    %4556 = vmatprep.subr.mxu0 0.0
    %4557 = vmatpush1.msra.mxu0 0.0
    %4558 = vmatprep.subr.mxu0 0.0
    %4559 = vmatpush1.msra.mxu0 0.0
    %4560 = vmatprep.subr.mxu0 0.0
    %4561 = vmatpush1.msra.mxu0 0.0
    %4562 = vmatprep.subr.mxu0 0.0
    %4563 = vmatpush1.msra.mxu0 0.0
    %4564 = vmatprep.subr.mxu0 0.0
    %4565 = vmatpush1.msra.mxu0 0.0
    %4566 = vmatprep.subr.mxu0 0.0
    %4567 = vmatpush1.msra.mxu0 0.0
    %4568 = vmatprep.subr.mxu0 0.0
    %4569 = vmatpush1.msra.mxu0 0.0
    %4570 = vmatprep.subr.mxu0 0.0
    %4571 = vmatpush1.msra.mxu0 0.0
    %4572 = vmatprep.subr.mxu0 0.0
    %4573 = vmatpush1.msra.mxu0 0.0
    %4574 = vmatprep.subr.mxu0 0.0
    %4575 = vmatpush1.msra.mxu0 0.0
    %4576 = vmatprep.subr.mxu0 0.0
    %4577 = vmatpush1.msra.mxu0 0.0
    %4578 = vmatprep.subr.mxu0 0.0
    %4579 = vmatpush1.msra.mxu0 0.0
    %4580 = vmatprep.subr.mxu0 0.0
    %4581 = vmatpush1.msra.mxu0 0.0
    %4582 = vmatprep.subr.mxu0 0.0
    %4583 = vmatpush1.msra.mxu0 0.0
    %4584 = vmatprep.mubr.f32.mxu0 0.0
    %4585 = vmatmul.mubr.f32.gmra.mrb[0].mxu0 %v4518
    %v4586 = vpop.f32.mrb[0].mxu0
    %v4587 = vadd.f32 %v4515, %v4586
    %v4588 = vpop.f32.mrb[0].mxu0
    %4589 = vdwg.mxu0
    %4590 = vst.msk [vmem:[%s53] sm:$0xff] %vm546, %v4587
    %4591 = vst.msk [vmem:[%s55] sm:$0xff] %vm546, %v2904
    %4592 = vst.msk [vmem:[%s57] sm:$0xff] %vm546, %v1953
    %4593 = vst.msk [vmem:[%s57 + $0x8] sm:$0xff] %vm546, %v1954
    %4594 = vst.msk [vmem:[%s59] sm:$0xff] %vm546, %v3386
    %4595 = vst.msk [vmem:[%s61] sm:$0xff] %vm546, %v3855
    // Predicated region
    $region178: #{yolo_block1_forward.1} parent=1 // pred_check
      _
    $region179: #{yolo_block1_forward.1} parent=1 // pred_check_branch
      %4597 = sbr.rel (0) target = $region181
    $region180: #{yolo_block1_forward.1} parent=1 // pred_region
      _
    $region181: #{yolo_block1_forward.1} parent=1 // pred_fallthru
      _
    // Predicated region
    $region182: #{yolo_block1_forward.1} parent=1 // pred_check
      _
    $region183: #{yolo_block1_forward.1} parent=1 // pred_check_branch
      %4599 = sbr.rel (0) target = $region185
    $region184: #{yolo_block1_forward.1} parent=1 // pred_region
      _
    $region185: #{yolo_block1_forward.1} parent=1 // pred_fallthru
      _
    // Predicated region
    $region186: #{yolo_block1_forward.1} parent=1 // pred_check
      _
    $region187: #{yolo_block1_forward.1} parent=1 // pred_check_branch
      %4601 = sbr.rel (0) target = $region189
    $region188: #{yolo_block1_forward.1} parent=1 // pred_region
      _
    $region189: #{yolo_block1_forward.1} parent=1 // pred_fallthru
      _
    // Predicated region
    $region190: #{yolo_block1_forward.1} parent=1 // pred_check
      _
    $region191: #{yolo_block1_forward.1} parent=1 // pred_check_branch
      %4603 = sbr.rel (0) target = $region193
    $region192: #{yolo_block1_forward.1} parent=1 // pred_region
      _
    $region193: #{yolo_block1_forward.1} parent=1 // pred_fallthru
      _
    // Predicated region
    $region194: #{yolo_block1_forward.1} parent=1 // pred_check
      _
    $region195: #{yolo_block1_forward.1} parent=1 // pred_check_branch
      %4605 = sbr.rel (0) target = $region197
    $region196: #{yolo_block1_forward.1} parent=1 // pred_region
      _
    $region197: #{yolo_block1_forward.1} parent=1 // pred_fallthru
      _
    // Predicated region
    $region198: #{yolo_block1_forward.1} parent=1 // pred_check
      _
    $region199: #{yolo_block1_forward.1} parent=1 // pred_check_branch
      %4607 = sbr.rel (0) target = $region201
    $region200: #{yolo_block1_forward.1} parent=1 // pred_region
      _
    $region201: #{yolo_block1_forward.1} parent=1 // pred_fallthru
      _
    // Predicated region
    $region202: #{yolo_block1_forward.1} parent=1 // pred_check
      _
    $region203: #{yolo_block1_forward.1} parent=1 // pred_check_branch
      %4609 = sbr.rel (0) target = $region205
    $region204: #{yolo_block1_forward.1} parent=1 // pred_region
      _
    $region205: #{yolo_block1_forward.1} parent=1 // pred_fallthru
      _
    // Predicated region
    $region206: #{yolo_block1_forward.1} parent=1 // pred_check
      _
    $region207: #{yolo_block1_forward.1} parent=1 // pred_check_branch
      %4611 = sbr.rel (0) target = $region209
    $region208: #{yolo_block1_forward.1} parent=1 // pred_region
      _
    $region209: #{yolo_block1_forward.1} parent=1 // pred_fallthru
      _
    // Predicated region
    $region210: #{yolo_block1_forward.1} parent=1 // pred_check
      _
    $region211: #{yolo_block1_forward.1} parent=1 // pred_check_branch
      %4613 = sbr.rel (0) target = $region213
    $region212: #{yolo_block1_forward.1} parent=1 // pred_region
      _
    $region213: #{yolo_block1_forward.1} parent=1 // pred_fallthru
      _
    // Predicated region
    $region214: #{yolo_block1_forward.1} parent=1 // pred_check
      _
    $region215: #{yolo_block1_forward.1} parent=1 // pred_check_branch
      %4615 = sbr.rel (0) target = $region217
    $region216: #{yolo_block1_forward.1} parent=1 // pred_region
      _
    $region217: #{yolo_block1_forward.1} parent=1 // pred_fallthru
      _
    %4616 = vsyncpa [#allocation3], 1
    %4617 = vsyncpa [#allocation5], 1
    %4618 = vsyncpa [#allocation8], 1
    %4619 = vsyncpa [#allocation11], 1
    %4620 = vsyncpa [#allocation14], 1
    %4621 = vsyncpa [#allocation17], 1
    %4622 = vsyncpa [#allocation20], 1
    %4623 = vsyncpa [#allocation23], 1
    %4624 = vsyncpa [#allocation26], 1
    %4625 = vsyncpa [#allocation29], 1

</llo_original>
